<compile_context>
chip_gen: v6e
topology: v6e:2x2x1
jax: 0.10.0
libtpu: 0.0.40
codegen_flags: <defaults>
</compile_context>

<pallas_src>
import functools

import jax
import jax.numpy as jnp
from jax import lax
from jax.experimental import pallas as pl
from jax.experimental.pallas import tpu as pltpu


# ------------------------------ Pallas kernel ------------------------------ #

def _rdb_kernel(x_ref, wB_ref, bB_ref, wL_ref, bL_ref, o_ref, feat_ref,
                *, H, W, G0, G, C):
    """Fused RDB for one batch element.

    x_ref   : (H+2, Ctot*W)      zero-extended, row-padded input slab
                                 (lane = c*W + x; channels >= G0 and halo rows 0)
    wB_ref  : (C, 3, Ctot*W, G*W) banded 3x3 conv weights, one (K, N) matrix per
                                  (layer, dy); dx taps + SAME padding folded in.
    bB_ref  : (C, 1, G*W)        per-layer bias, tiled over W (lane = g*W + x)
    wL_ref  : (Ctot*W, G0*W)     banded 1x1 LFF weights with residual folded in
    bL_ref  : (1, G0*W)          LFF bias, tiled over W
    o_ref   : (H, G0*W)          output slab (lane = g*W + x)
    feat_ref: (H+2, Ctot*W)      VMEM scratch: growing padded feature map
    """
    # Load the block input (already zero-extended to Ctot channels + halo rows)
    # into the persistent feature scratch.
    feat_ref[...] = x_ref[...]

    # Dense-growth layers: conv3x3 + bias + ReLU.  Each layer writes its G output
    # channels straight into the next 128-lane slot of the feature scratch.
    for c in range(C):
        acc = jnp.dot(feat_ref[0:H, :], wB_ref[c, 0],
                      preferred_element_type=jnp.float32)
        acc += jnp.dot(feat_ref[1:H + 1, :], wB_ref[c, 1],
                       preferred_element_type=jnp.float32)
        acc += jnp.dot(feat_ref[2:H + 2, :], wB_ref[c, 2],
                       preferred_element_type=jnp.float32)
        act = jnp.maximum(acc + bB_ref[c], 0.0)            # bias + ReLU (f32)
        off = (G0 + c * G) * W                              # 128-aligned lanes
        feat_ref[1:H + 1, off:off + G * W] = act

    # 1x1 LFF conv + bias + residual (residual is an identity block inside wL).
    out = jnp.dot(feat_ref[1:H + 1, :], wL_ref[...],
                  preferred_element_type=jnp.float32)
    o_ref[...] = out + bL_ref[...]


# ---------------------- Weight packing (done once) ------------------------- #

def pack_rdb_params(params, W):
    """Pack HWIO conv params into kernel-ready banded matrices."""
    convs = params["convs"]
    w_lff, b_lff = params["lff"]
    C = len(convs)
    G = convs[0][0].shape[-1]
    G0 = w_lff.shape[-1]
    Ctot = G0 + C * G
    assert w_lff.shape[0] == Ctot

    # Shifted identities implementing the dx in {-1, 0, +1} column taps; columns
    # that fall outside the image simply get no band entry (zero SAME padding).
    shift = [jnp.eye(W, k=1 - dx, dtype=jnp.float32) for dx in range(3)]

    wB, bB = [], []
    for (w, b) in convs:                       # w: (3, 3, Cin, G), b: (G,)
        cin = w.shape[2]
        per_dy = []
        for dy in range(3):
            band = sum(jnp.kron(w[dy, dx], shift[dx]) for dx in range(3))
            band = jnp.pad(band, ((0, (Ctot - cin) * W), (0, 0)))
            per_dy.append(band)                # (Ctot*W, G*W)
        wB.append(jnp.stack(per_dy))
        bB.append(jnp.repeat(b, W)[None, :])   # (1, G*W), lane = g*W + x
    wB = jnp.stack(wB)                         # (C, 3, Ctot*W, G*W)
    bB = jnp.stack(bB)                         # (C, 1, G*W)

    # 1x1 LFF with the +x residual folded in as identity on the first G0 channels.
    w_eff = w_lff + jnp.eye(Ctot, G0, dtype=w_lff.dtype)
    wL = jnp.kron(w_eff, jnp.eye(W, dtype=jnp.float32))    # (Ctot*W, G0*W)
    bL = jnp.repeat(b_lff, W)[None, :]                     # (1, G0*W)
    return {"wB": wB, "bB": bB, "wL": wL, "bL": bL}


# ------------------------------ JAX wrapper -------------------------------- #

def rdb_forward(x_nchw, packed):
    """RDB forward. x_nchw: (N, G0, H, W) f32 -> (N, G0, H, W) f32."""
    N, G0, H, W = x_nchw.shape
    wB, bB, wL, bL = packed["wB"], packed["bB"], packed["wL"], packed["bL"]
    C = wB.shape[0]
    CW = wB.shape[2]            # Ctot * W
    GW = wB.shape[3]            # G * W
    G = GW // W
    Ctot = CW // W
    assert Ctot == G0 + C * G and wL.shape == (CW, G0 * W)

    # Tiny layout glue: NCHW -> channel-major lane slab (N, H+2, Ctot*W) with
    # zero halo rows and zero channels >= G0.
    slab = jnp.transpose(x_nchw, (0, 2, 1, 3)).reshape(N, H, G0 * W)
    slab = jnp.pad(slab, ((0, 0), (1, 1), (0, (Ctot - G0) * W)))

    kern = functools.partial(_rdb_kernel, H=H, W=W, G0=G0, G=G, C=C)
    out = pl.pallas_call(
        kern,
        out_shape=jax.ShapeDtypeStruct((N, H, G0 * W), jnp.float32),
        grid=(N,),
        in_specs=[
            pl.BlockSpec((pl.Squeezed(), H + 2, CW), lambda n: (n, 0, 0)),
            pl.BlockSpec((C, 3, CW, GW), lambda n: (0, 0, 0, 0)),
            pl.BlockSpec((C, 1, GW), lambda n: (0, 0, 0)),
            pl.BlockSpec((CW, G0 * W), lambda n: (0, 0)),
            pl.BlockSpec((1, G0 * W), lambda n: (0, 0)),
        ],
        out_specs=pl.BlockSpec((pl.Squeezed(), H, G0 * W), lambda n: (n, 0, 0)),
        scratch_shapes=[pltpu.VMEM((H + 2, CW), jnp.float32)],
        compiler_params=pltpu.CompilerParams(
            dimension_semantics=("parallel",)),
    )(slab, wB, bB, wL, bL)

    # (N, H, G0*W) lane-dense slab -> NCHW.
    return jnp.transpose(out.reshape(N, H, G0, W), (0, 2, 1, 3))


# ------------------------------ Params / ref -------------------------------- #

def init_rdb_params(key, G0, G, C):
    """Deterministic synthetic params mirroring RDB.__init__ shapes (HWIO)."""
    params = {"convs": [], "lff": None}
    for c in range(C):
        cin = G0 + c * G
        key, kw, kb = jax.random.split(key, 3)
        w = jax.random.normal(kw, (3, 3, cin, G), jnp.float32) * 0.05
        b = jax.random.normal(kb, (G,), jnp.float32) * 0.05
        params["convs"].append((w, b))
    ctot = G0 + C * G
    key, kw, kb = jax.random.split(key, 3)
    w_lff = jax.random.normal(kw, (ctot, G0), jnp.float32) * 0.05
    b_lff = jax.random.normal(kb, (G0,), jnp.float32) * 0.05
    params["lff"] = (w_lff, b_lff)
    return params


def rdb_reference(x_nchw, params):
    """Pure-JAX (XLA conv) reference of the same forward, for verification."""
    x = jnp.transpose(x_nchw, (0, 2, 3, 1))
    feat = x
    dn = ("NHWC", "HWIO", "NHWC")
    for (w, b) in params["convs"]:
        out = lax.conv_general_dilated(feat, w, (1, 1), "SAME",
                                       dimension_numbers=dn)
        out = jnp.maximum(out + b, 0.0)
        feat = jnp.concatenate([feat, out], axis=-1)
    w_lff, b_lff = params["lff"]
    w_lff4 = w_lff.reshape(1, 1, *w_lff.shape)
    y = lax.conv_general_dilated(feat, w_lff4, (1, 1), "SAME",
                                 dimension_numbers=dn) + b_lff + x
    return jnp.transpose(y, (0, 3, 1, 2))


# --------------------------------- Main ------------------------------------ #

if __name__ == "__main__":
    # RDB(growRate0=8, growRate=8, nConvLayers=3); input (N, G0, H, W).
    N, G0, G, C, H, W = 2, 8, 8, 3, 16, 16

    key = jax.random.PRNGKey(0)
    key, kx = jax.random.split(key)
    x = jax.random.normal(kx, (N, G0, H, W), jnp.float32)

    params = init_rdb_params(key, G0, G, C)
    packed = pack_rdb_params(params, W)        # one-time weight packing

    fwd = jax.jit(rdb_forward)
    out = jax.block_until_ready(fwd(x, packed))

    ref = jax.block_until_ready(rdb_reference(x, params))
    assert out.shape == (N, G0, H, W), out.shape
    assert jnp.allclose(out, ref, atol=1e-4, rtol=1e-4), (
        "Pallas RDB output mismatch vs reference")

    print("KERNEL_OK")
</pallas_src>

<mosaic_0001>
module attributes {stable_mosaic.version = 11 : i64} {
  func.func @_rdb_kernel(%arg0: i32, %arg1: memref<1x18x512xf32, #tpu.memory_space<vmem>>, %arg2: memref<3x3x512x128xf32, #tpu.memory_space<vmem>>, %arg3: memref<3x1x128xf32, #tpu.memory_space<vmem>>, %arg4: memref<512x128xf32, #tpu.memory_space<vmem>>, %arg5: memref<1x128xf32, #tpu.memory_space<vmem>>, %arg6: memref<1x16x128xf32, #tpu.memory_space<vmem>>, %arg7: memref<18x512xf32, #tpu.memory_space<vmem>>) attributes {dimension_semantics = [#tpu.dimension_semantics<parallel>], iteration_bounds = array<i64: 2>, scalar_prefetch = 0 : i64, scratch_operands = 1 : i64, tpu.core_type = #tpu.core_type<tc>, window_params = [{transform_indices = @transform_0, window_bounds = array<i64: 1, 18, 512>}, {pipeline_mode = #tpu.pipeline_mode<synchronous>, transform_indices = @transform_1, window_bounds = array<i64: 3, 3, 512, 128>}, {pipeline_mode = #tpu.pipeline_mode<synchronous>, transform_indices = @transform_2, window_bounds = array<i64: 3, 1, 128>}, {pipeline_mode = #tpu.pipeline_mode<synchronous>, transform_indices = @transform_3, window_bounds = array<i64: 512, 128>}, {pipeline_mode = #tpu.pipeline_mode<synchronous>, transform_indices = @transform_4, window_bounds = array<i64: 1, 128>}, {transform_indices = @transform_5, window_bounds = array<i64: 1, 16, 128>}]} {
    %c0 = arith.constant 0 : index
    %c0_0 = arith.constant 0 : index
    %c0_1 = arith.constant 0 : index
    %0 = vector.load %arg1[%c0, %c0_0, %c0_1] : memref<1x18x512xf32, #tpu.memory_space<vmem>>, vector<1x18x512xf32>
    %1 = vector.shape_cast %0 : vector<1x18x512xf32> to vector<18x512xf32>
    %c0_2 = arith.constant 0 : index
    %c0_3 = arith.constant 0 : index
    %2 = vector.load %arg7[%c0_2, %c0_3] : memref<18x512xf32, #tpu.memory_space<vmem>>, vector<18x512xf32>
    tpu.vector_store %arg7[%c0_2, %c0_3], %1 {strides = array<i32>} : memref<18x512xf32, #tpu.memory_space<vmem>>, vector<18x512xf32>,
    %c0_4 = arith.constant 0 : index
    %c0_5 = arith.constant 0 : index
    %3 = vector.load %arg7[%c0_4, %c0_5] : memref<18x512xf32, #tpu.memory_space<vmem>>, vector<16x512xf32>
    %c0_6 = arith.constant 0 : index
    %c0_7 = arith.constant 0 : index
    %c0_8 = arith.constant 0 : index
    %c0_9 = arith.constant 0 : index
    %4 = vector.load %arg2[%c0_6, %c0_7, %c0_8, %c0_9] : memref<3x3x512x128xf32, #tpu.memory_space<vmem>>, vector<1x1x512x128xf32>
    %5 = vector.shape_cast %4 : vector<1x1x512x128xf32> to vector<512x128xf32>
    %cst = arith.constant dense<0.000000e+00> : vector<16x128xf32>
    %6 = tpu.matmul %3, %5, %cst {dimension_numbers = #tpu.dot_dimension_numbers<[1], [0], [0], [1], [0, 0, 1, 1], [], []>} : vector<16x512xf32>, vector<512x128xf32>, vector<16x128xf32> -> vector<16x128xf32>
    %c1 = arith.constant 1 : index
    %c0_10 = arith.constant 0 : index
    %7 = vector.load %arg7[%c1, %c0_10] : memref<18x512xf32, #tpu.memory_space<vmem>>, vector<16x512xf32>
    %c0_11 = arith.constant 0 : index
    %c1_12 = arith.constant 1 : index
    %c0_13 = arith.constant 0 : index
    %c0_14 = arith.constant 0 : index
    %8 = vector.load %arg2[%c0_11, %c1_12, %c0_13, %c0_14] : memref<3x3x512x128xf32, #tpu.memory_space<vmem>>, vector<1x1x512x128xf32>
    %9 = vector.shape_cast %8 : vector<1x1x512x128xf32> to vector<512x128xf32>
    %cst_15 = arith.constant dense<0.000000e+00> : vector<16x128xf32>
    %10 = tpu.matmul %7, %9, %cst_15 {dimension_numbers = #tpu.dot_dimension_numbers<[1], [0], [0], [1], [0, 0, 1, 1], [], []>} : vector<16x512xf32>, vector<512x128xf32>, vector<16x128xf32> -> vector<16x128xf32>
    %11 = arith.addf %6, %10 : vector<16x128xf32>
    %c2 = arith.constant 2 : index
    %c0_16 = arith.constant 0 : index
    %12 = vector.load %arg7[%c2, %c0_16] : memref<18x512xf32, #tpu.memory_space<vmem>>, vector<16x512xf32>
    %c0_17 = arith.constant 0 : index
    %c2_18 = arith.constant 2 : index
    %c0_19 = arith.constant 0 : index
    %c0_20 = arith.constant 0 : index
    %13 = vector.load %arg2[%c0_17, %c2_18, %c0_19, %c0_20] : memref<3x3x512x128xf32, #tpu.memory_space<vmem>>, vector<1x1x512x128xf32>
    %14 = vector.shape_cast %13 : vector<1x1x512x128xf32> to vector<512x128xf32>
    %cst_21 = arith.constant dense<0.000000e+00> : vector<16x128xf32>
    %15 = tpu.matmul %12, %14, %cst_21 {dimension_numbers = #tpu.dot_dimension_numbers<[1], [0], [0], [1], [0, 0, 1, 1], [], []>} : vector<16x512xf32>, vector<512x128xf32>, vector<16x128xf32> -> vector<16x128xf32>
    %16 = arith.addf %11, %15 : vector<16x128xf32>
    %c0_22 = arith.constant 0 : index
    %c0_23 = arith.constant 0 : index
    %c0_24 = arith.constant 0 : index
    %17 = vector.load %arg3[%c0_22, %c0_23, %c0_24] : memref<3x1x128xf32, #tpu.memory_space<vmem>>, vector<1x1x128xf32>
    %18 = vector.shape_cast %17 : vector<1x1x128xf32> to vector<1x128xf32>
    %19 = vector.broadcast %18 : vector<1x128xf32> to vector<16x128xf32>
    %20 = arith.addf %16, %19 : vector<16x128xf32>
    %cst_25 = arith.constant 0.000000e+00 : f32
    %21 = vector.broadcast %cst_25 : f32 to vector<16x128xf32>
    %22 = arith.maximumf %20, %21 : vector<16x128xf32>
    %c1_26 = arith.constant 1 : index
    %c128 = arith.constant 128 : index
    %23 = vector.load %arg7[%c1_26, %c128] : memref<18x512xf32, #tpu.memory_space<vmem>>, vector<16x128xf32>
    tpu.vector_store %arg7[%c1_26, %c128], %22 {strides = array<i32>} : memref<18x512xf32, #tpu.memory_space<vmem>>, vector<16x128xf32>,
    %c0_27 = arith.constant 0 : index
    %c0_28 = arith.constant 0 : index
    %24 = vector.load %arg7[%c0_27, %c0_28] : memref<18x512xf32, #tpu.memory_space<vmem>>, vector<16x512xf32>
    %c1_29 = arith.constant 1 : index
    %c0_30 = arith.constant 0 : index
    %c0_31 = arith.constant 0 : index
    %c0_32 = arith.constant 0 : index
    %25 = vector.load %arg2[%c1_29, %c0_30, %c0_31, %c0_32] : memref<3x3x512x128xf32, #tpu.memory_space<vmem>>, vector<1x1x512x128xf32>
    %26 = vector.shape_cast %25 : vector<1x1x512x128xf32> to vector<512x128xf32>
    %cst_33 = arith.constant dense<0.000000e+00> : vector<16x128xf32>
    %27 = tpu.matmul %24, %26, %cst_33 {dimension_numbers = #tpu.dot_dimension_numbers<[1], [0], [0], [1], [0, 0, 1, 1], [], []>} : vector<16x512xf32>, vector<512x128xf32>, vector<16x128xf32> -> vector<16x128xf32>
    %c1_34 = arith.constant 1 : index
    %c0_35 = arith.constant 0 : index
    %28 = vector.load %arg7[%c1_34, %c0_35] : memref<18x512xf32, #tpu.memory_space<vmem>>, vector<16x512xf32>
    %c1_36 = arith.constant 1 : index
    %c1_37 = arith.constant 1 : index
    %c0_38 = arith.constant 0 : index
    %c0_39 = arith.constant 0 : index
    %29 = vector.load %arg2[%c1_36, %c1_37, %c0_38, %c0_39] : memref<3x3x512x128xf32, #tpu.memory_space<vmem>>, vector<1x1x512x128xf32>
    %30 = vector.shape_cast %29 : vector<1x1x512x128xf32> to vector<512x128xf32>
    %cst_40 = arith.constant dense<0.000000e+00> : vector<16x128xf32>
    %31 = tpu.matmul %28, %30, %cst_40 {dimension_numbers = #tpu.dot_dimension_numbers<[1], [0], [0], [1], [0, 0, 1, 1], [], []>} : vector<16x512xf32>, vector<512x128xf32>, vector<16x128xf32> -> vector<16x128xf32>
    %32 = arith.addf %27, %31 : vector<16x128xf32>
    %c2_41 = arith.constant 2 : index
    %c0_42 = arith.constant 0 : index
    %33 = vector.load %arg7[%c2_41, %c0_42] : memref<18x512xf32, #tpu.memory_space<vmem>>, vector<16x512xf32>
    %c1_43 = arith.constant 1 : index
    %c2_44 = arith.constant 2 : index
    %c0_45 = arith.constant 0 : index
    %c0_46 = arith.constant 0 : index
    %34 = vector.load %arg2[%c1_43, %c2_44, %c0_45, %c0_46] : memref<3x3x512x128xf32, #tpu.memory_space<vmem>>, vector<1x1x512x128xf32>
    %35 = vector.shape_cast %34 : vector<1x1x512x128xf32> to vector<512x128xf32>
    %cst_47 = arith.constant dense<0.000000e+00> : vector<16x128xf32>
    %36 = tpu.matmul %33, %35, %cst_47 {dimension_numbers = #tpu.dot_dimension_numbers<[1], [0], [0], [1], [0, 0, 1, 1], [], []>} : vector<16x512xf32>, vector<512x128xf32>, vector<16x128xf32> -> vector<16x128xf32>
    %37 = arith.addf %32, %36 : vector<16x128xf32>
    %c1_48 = arith.constant 1 : index
    %c0_49 = arith.constant 0 : index
    %c0_50 = arith.constant 0 : index
    %38 = vector.load %arg3[%c1_48, %c0_49, %c0_50] : memref<3x1x128xf32, #tpu.memory_space<vmem>>, vector<1x1x128xf32>
    %39 = vector.shape_cast %38 : vector<1x1x128xf32> to vector<1x128xf32>
    %40 = vector.broadcast %39 : vector<1x128xf32> to vector<16x128xf32>
    %41 = arith.addf %37, %40 : vector<16x128xf32>
    %cst_51 = arith.constant 0.000000e+00 : f32
    %42 = vector.broadcast %cst_51 : f32 to vector<16x128xf32>
    %43 = arith.maximumf %41, %42 : vector<16x128xf32>
    %c1_52 = arith.constant 1 : index
    %c256 = arith.constant 256 : index
    %44 = vector.load %arg7[%c1_52, %c256] : memref<18x512xf32, #tpu.memory_space<vmem>>, vector<16x128xf32>
    tpu.vector_store %arg7[%c1_52, %c256], %43 {strides = array<i32>} : memref<18x512xf32, #tpu.memory_space<vmem>>, vector<16x128xf32>,
    %c0_53 = arith.constant 0 : index
    %c0_54 = arith.constant 0 : index
    %45 = vector.load %arg7[%c0_53, %c0_54] : memref<18x512xf32, #tpu.memory_space<vmem>>, vector<16x512xf32>
    %c2_55 = arith.constant 2 : index
    %c0_56 = arith.constant 0 : index
    %c0_57 = arith.constant 0 : index
    %c0_58 = arith.constant 0 : index
    %46 = vector.load %arg2[%c2_55, %c0_56, %c0_57, %c0_58] : memref<3x3x512x128xf32, #tpu.memory_space<vmem>>, vector<1x1x512x128xf32>
    %47 = vector.shape_cast %46 : vector<1x1x512x128xf32> to vector<512x128xf32>
    %cst_59 = arith.constant dense<0.000000e+00> : vector<16x128xf32>
    %48 = tpu.matmul %45, %47, %cst_59 {dimension_numbers = #tpu.dot_dimension_numbers<[1], [0], [0], [1], [0, 0, 1, 1], [], []>} : vector<16x512xf32>, vector<512x128xf32>, vector<16x128xf32> -> vector<16x128xf32>
    %c1_60 = arith.constant 1 : index
    %c0_61 = arith.constant 0 : index
    %49 = vector.load %arg7[%c1_60, %c0_61] : memref<18x512xf32, #tpu.memory_space<vmem>>, vector<16x512xf32>
    %c2_62 = arith.constant 2 : index
    %c1_63 = arith.constant 1 : index
    %c0_64 = arith.constant 0 : index
    %c0_65 = arith.constant 0 : index
    %50 = vector.load %arg2[%c2_62, %c1_63, %c0_64, %c0_65] : memref<3x3x512x128xf32, #tpu.memory_space<vmem>>, vector<1x1x512x128xf32>
    %51 = vector.shape_cast %50 : vector<1x1x512x128xf32> to vector<512x128xf32>
    %cst_66 = arith.constant dense<0.000000e+00> : vector<16x128xf32>
    %52 = tpu.matmul %49, %51, %cst_66 {dimension_numbers = #tpu.dot_dimension_numbers<[1], [0], [0], [1], [0, 0, 1, 1], [], []>} : vector<16x512xf32>, vector<512x128xf32>, vector<16x128xf32> -> vector<16x128xf32>
    %53 = arith.addf %48, %52 : vector<16x128xf32>
    %c2_67 = arith.constant 2 : index
    %c0_68 = arith.constant 0 : index
    %54 = vector.load %arg7[%c2_67, %c0_68] : memref<18x512xf32, #tpu.memory_space<vmem>>, vector<16x512xf32>
    %c2_69 = arith.constant 2 : index
    %c2_70 = arith.constant 2 : index
    %c0_71 = arith.constant 0 : index
    %c0_72 = arith.constant 0 : index
    %55 = vector.load %arg2[%c2_69, %c2_70, %c0_71, %c0_72] : memref<3x3x512x128xf32, #tpu.memory_space<vmem>>, vector<1x1x512x128xf32>
    %56 = vector.shape_cast %55 : vector<1x1x512x128xf32> to vector<512x128xf32>
    %cst_73 = arith.constant dense<0.000000e+00> : vector<16x128xf32>
    %57 = tpu.matmul %54, %56, %cst_73 {dimension_numbers = #tpu.dot_dimension_numbers<[1], [0], [0], [1], [0, 0, 1, 1], [], []>} : vector<16x512xf32>, vector<512x128xf32>, vector<16x128xf32> -> vector<16x128xf32>
    %58 = arith.addf %53, %57 : vector<16x128xf32>
    %c2_74 = arith.constant 2 : index
    %c0_75 = arith.constant 0 : index
    %c0_76 = arith.constant 0 : index
    %59 = vector.load %arg3[%c2_74, %c0_75, %c0_76] : memref<3x1x128xf32, #tpu.memory_space<vmem>>, vector<1x1x128xf32>
    %60 = vector.shape_cast %59 : vector<1x1x128xf32> to vector<1x128xf32>
    %61 = vector.broadcast %60 : vector<1x128xf32> to vector<16x128xf32>
    %62 = arith.addf %58, %61 : vector<16x128xf32>
    %cst_77 = arith.constant 0.000000e+00 : f32
    %63 = vector.broadcast %cst_77 : f32 to vector<16x128xf32>
    %64 = arith.maximumf %62, %63 : vector<16x128xf32>
    %c1_78 = arith.constant 1 : index
    %c384 = arith.constant 384 : index
    %65 = vector.load %arg7[%c1_78, %c384] : memref<18x512xf32, #tpu.memory_space<vmem>>, vector<16x128xf32>
    tpu.vector_store %arg7[%c1_78, %c384], %64 {strides = array<i32>} : memref<18x512xf32, #tpu.memory_space<vmem>>, vector<16x128xf32>,
    %c1_79 = arith.constant 1 : index
    %c0_80 = arith.constant 0 : index
    %66 = vector.load %arg7[%c1_79, %c0_80] : memref<18x512xf32, #tpu.memory_space<vmem>>, vector<16x512xf32>
    %c0_81 = arith.constant 0 : index
    %c0_82 = arith.constant 0 : index
    %67 = vector.load %arg4[%c0_81, %c0_82] : memref<512x128xf32, #tpu.memory_space<vmem>>, vector<512x128xf32>
    %cst_83 = arith.constant dense<0.000000e+00> : vector<16x128xf32>
    %68 = tpu.matmul %66, %67, %cst_83 {dimension_numbers = #tpu.dot_dimension_numbers<[1], [0], [0], [1], [0, 0, 1, 1], [], []>} : vector<16x512xf32>, vector<512x128xf32>, vector<16x128xf32> -> vector<16x128xf32>
    %c0_84 = arith.constant 0 : index
    %c0_85 = arith.constant 0 : index
    %69 = vector.load %arg5[%c0_84, %c0_85] : memref<1x128xf32, #tpu.memory_space<vmem>>, vector<1x128xf32>
    %70 = vector.broadcast %69 : vector<1x128xf32> to vector<16x128xf32>
    %71 = arith.addf %68, %70 : vector<16x128xf32>
    %c0_86 = arith.constant 0 : index
    %c0_87 = arith.constant 0 : index
    %c0_88 = arith.constant 0 : index
    %72 = vector.load %arg6[%c0_86, %c0_87, %c0_88] : memref<1x16x128xf32, #tpu.memory_space<vmem>>, vector<1x16x128xf32>
    %73 = vector.shape_cast %72 : vector<1x16x128xf32> to vector<16x128xf32>
    %74 = vector.shape_cast %71 : vector<16x128xf32> to vector<1x16x128xf32>
    tpu.vector_store %arg6[%c0_86, %c0_87, %c0_88], %74 {strides = array<i32>} : memref<1x16x128xf32, #tpu.memory_space<vmem>>, vector<1x16x128xf32>,
    return
  }
  func.func @transform_0(%arg0: i32) -> (i32, i32, i32) {
    %c0_i32 = arith.constant 0 : i32
    %c0_i32_0 = arith.constant 0 : i32
    %c0_i32_1 = arith.constant 0 : i32
    return %arg0, %c0_i32, %c0_i32_0 : i32, i32, i32
  }
  func.func @transform_1(%arg0: i32) -> (i32, i32, i32, i32) {
    %c0_i32 = arith.constant 0 : i32
    %c0_i32_0 = arith.constant 0 : i32
    %c0_i32_1 = arith.constant 0 : i32
    %c0_i32_2 = arith.constant 0 : i32
    %c0_i32_3 = arith.constant 0 : i32
    return %c0_i32, %c0_i32_0, %c0_i32_1, %c0_i32_2 : i32, i32, i32, i32
  }
  func.func @transform_2(%arg0: i32) -> (i32, i32, i32) {
    %c0_i32 = arith.constant 0 : i32
    %c0_i32_0 = arith.constant 0 : i32
    %c0_i32_1 = arith.constant 0 : i32
    %c0_i32_2 = arith.constant 0 : i32
    return %c0_i32, %c0_i32_0, %c0_i32_1 : i32, i32, i32
  }
  func.func @transform_3(%arg0: i32) -> (i32, i32) {
    %c0_i32 = arith.constant 0 : i32
    %c0_i32_0 = arith.constant 0 : i32
    %c0_i32_1 = arith.constant 0 : i32
    return %c0_i32, %c0_i32_0 : i32, i32
  }
  func.func @transform_4(%arg0: i32) -> (i32, i32) {
    %c0_i32 = arith.constant 0 : i32
    %c0_i32_0 = arith.constant 0 : i32
    %c0_i32_1 = arith.constant 0 : i32
    return %c0_i32, %c0_i32_0 : i32, i32
  }
  func.func @transform_5(%arg0: i32) -> (i32, i32, i32) {
    %c0_i32 = arith.constant 0 : i32
    %c0_i32_0 = arith.constant 0 : i32
    %c0_i32_1 = arith.constant 0 : i32
    return %arg0, %c0_i32, %c0_i32_0 : i32, i32, i32
  }
}

</mosaic_0001>

<llo_original>
// kernel: rdb_forward.1
$region0: #{rdb_forward.1}
  #allocation0 [shape = 'u32[]', space=smem, size = 0x4, offset = 0x4, fixed_abs, tag = 'smem constant byte address 0x4 - core index']
  #allocation1 [shape = 'u32[144,128]{1,0:T(1,128)}', space=vmem, size = 0x12000, scoped, tag = 'internal scratch']
  #allocation2 [shape = 'f32[18,512]{1,0:T(8,128)}', space=vmem, size = 0xc000, scoped, tag = 'scratch operand']
  %s0 = inlined_call_operand.vmem [shape: f32[2,18,512], index: 0, kind: input, shape index: {}]
  %s1 = inlined_call_operand.hbm [shape: f32[3,3,512,128], index: 1, kind: input, shape index: {}]
  %s2 = inlined_call_operand.hbm [shape: f32[3,1,128], index: 2, kind: input, shape index: {}]
  %s3 = inlined_call_operand.hbm [shape: f32[512,128], index: 3, kind: input, shape index: {}]
  %s4 = inlined_call_operand.hbm [shape: f32[1,128], index: 4, kind: input, shape index: {}]
  %s5 = inlined_call_operand.vmem [shape: f32[2,16,128], index: 5, kind: output, shape index: {}]
  %s6 = sld [smem:[#allocation0]]
  $region69: #{rdb_forward.1} parent=0
    _
  %s8 = ssub.s32 1, %s6
  %s9 = scalar_select 0, %s8, %s6
  $region1: #{rdb_forward.1} parent=0
    #allocation3 [shape = 'u8[2359296]{0}', space=vmem, size = 0x240000, scoped, tag = 'input window, operand 1, single buffered']
    #allocation4 [shape = 's32[2]{0}', space=sflag, size = 0x8, scoped, tag = 'scoped memory for rdb_forward.1']
    #allocation5 [shape = 'u8[1536]{0}', space=vmem, size = 0x800, scoped, tag = 'input window, operand 2, single buffered']
    #allocation6 [shape = 's32[1]{0}', space=sflag, size = 0x4, scoped, tag = 'scoped memory for rdb_forward.1']
    #allocation7 [shape = 'u8[262144]{0}', space=vmem, size = 0x40000, scoped, tag = 'input window, operand 3, single buffered']
    #allocation8 [shape = 'u8[512]{0}', space=vmem, size = 0x400, scoped, tag = 'input window, operand 4, single buffered']
    #allocation9 [shape = 's32[1]{0}', space=sflag, size = 0x4, scoped, tag = 'scoped memory for rdb_forward.1']
    %10 = vsyncpa [#allocation4], 0
    %11 = vsyncpa [#allocation6], 0
    %12 = vsyncpa [#allocation9], 0
    loop: start=0, step=1, limit=4
    $region2: #{rdb_forward.1} parent=1 // loop_pre_header
      _
    $region3: #{rdb_forward.1} parent=1 // loop_header
      %s14 = sphi 0, %s18
      %p15 = scmp.ge.s32.totalorder %s14, 4
      %s24 = sphi 0, %s26
      %s27 = sphi 0, %s24
      %s28 = sphi 0, %s27
      %s44 = sphi 0, %s28
      %s48 = sphi 0, %s48
      %s50 = sphi 0, %s48
      %s51 = sphi 0, %s50
      %s65 = sphi 0, %s51
      %s69 = sphi 0, %s69
      %s71 = sphi 0, %s69
      %s72 = sphi 0, %s71
      %s86 = sphi 0, %s72
      %s90 = sphi 0, %s90
      %s92 = sphi 0, %s90
      %s93 = sphi 0, %s92
      %s107 = sphi 0, %s93
      %s111 = sphi 0, %s111
      %s113 = sphi 0, %s111
      %s114 = sphi 0, %s113
      %s128 = sphi 0, %s114
      %s134 = sphi 0, %s136
      %s137 = sphi 0, %s134
      %s138 = sphi 0, %s137
      %s154 = sphi 0, %s138
    $region4: #{rdb_forward.1} parent=1 // loop_header_branch
      %17 = sbr.rel (%p15) target = $region8
    $region5: #{rdb_forward.1} parent=1 // loop_body
      %s19 = ssub.s32 %s14, 1
      %s20 = ssub.s32 %s14, 2
      %s21 = sadd.s32 %s14, 1
      %s22 = ssub.s32 %s14, %s21
      %p23 = scmp.eq.s32.totalorder %s22, 0
      %s25 = sadd.s32 %s24, 1
      %s26 = scalar_select %p23, %s24, %s25
      %p29 = pneg %p23
      %p30 = scmp.eq.s32.totalorder %s14, 1
      %p31 = por %p29, %p30
      %p32 = scmp.ne.s32.totalorder %s24, %s27
      %p33 = scmp.eq.s32.totalorder %s14, 0
      %p34 = por %p32, %p33
      %p35 = scmp.ne.s32.totalorder %s24, %s27
      %p36 = scmp.eq.s32.totalorder %s19, 1
      %p37 = por %p35, %p36
      %p38 = scmp.ne.s32.totalorder %s27, %s28
      %p39 = scmp.eq.s32.totalorder %s19, 0
      %p40 = por %p38, %p39
      %p41 = scmp.ne.s32.totalorder %s27, %s28
      %p42 = scmp.eq.s32.totalorder %s20, 1
      %p43 = por %p41, %p42
      %p45 = scmp.ne.s32.totalorder %s28, %s44
      %p46 = scmp.eq.s32.totalorder %s20, 0
      %p47 = por %p45, %p46
      %s49 = sadd.s32 %s48, 1
      %p52 = scmp.eq.s32.totalorder %s14, 1
      %p53 = scmp.ne.s32.totalorder %s48, %s50
      %p54 = scmp.eq.s32.totalorder %s14, 0
      %p55 = por %p53, %p54
      %p56 = scmp.ne.s32.totalorder %s48, %s50
      %p57 = scmp.eq.s32.totalorder %s19, 1
      %p58 = por %p56, %p57
      %p59 = scmp.ne.s32.totalorder %s50, %s51
      %p60 = scmp.eq.s32.totalorder %s19, 0
      %p61 = por %p59, %p60
      %p62 = scmp.ne.s32.totalorder %s50, %s51
      %p63 = scmp.eq.s32.totalorder %s20, 1
      %p64 = por %p62, %p63
      %p66 = scmp.ne.s32.totalorder %s51, %s65
      %p67 = scmp.eq.s32.totalorder %s20, 0
      %p68 = por %p66, %p67
      %s70 = sadd.s32 %s69, 1
      %p73 = scmp.eq.s32.totalorder %s14, 1
      %p74 = scmp.ne.s32.totalorder %s69, %s71
      %p75 = scmp.eq.s32.totalorder %s14, 0
      %p76 = por %p74, %p75
      %p77 = scmp.ne.s32.totalorder %s69, %s71
      %p78 = scmp.eq.s32.totalorder %s19, 1
      %p79 = por %p77, %p78
      %p80 = scmp.ne.s32.totalorder %s71, %s72
      %p81 = scmp.eq.s32.totalorder %s19, 0
      %p82 = por %p80, %p81
      %p83 = scmp.ne.s32.totalorder %s71, %s72
      %p84 = scmp.eq.s32.totalorder %s20, 1
      %p85 = por %p83, %p84
      %p87 = scmp.ne.s32.totalorder %s72, %s86
      %p88 = scmp.eq.s32.totalorder %s20, 0
      %p89 = por %p87, %p88
      %s91 = sadd.s32 %s90, 1
      %p94 = scmp.eq.s32.totalorder %s14, 1
      %p95 = scmp.ne.s32.totalorder %s90, %s92
      %p96 = scmp.eq.s32.totalorder %s14, 0
      %p97 = por %p95, %p96
      %p98 = scmp.ne.s32.totalorder %s90, %s92
      %p99 = scmp.eq.s32.totalorder %s19, 1
      %p100 = por %p98, %p99
      %p101 = scmp.ne.s32.totalorder %s92, %s93
      %p102 = scmp.eq.s32.totalorder %s19, 0
      %p103 = por %p101, %p102
      %p104 = scmp.ne.s32.totalorder %s92, %s93
      %p105 = scmp.eq.s32.totalorder %s20, 1
      %p106 = por %p104, %p105
      %p108 = scmp.ne.s32.totalorder %s93, %s107
      %p109 = scmp.eq.s32.totalorder %s20, 0
      %p110 = por %p108, %p109
      %s112 = sadd.s32 %s111, 1
      %p115 = scmp.eq.s32.totalorder %s14, 1
      %p116 = scmp.ne.s32.totalorder %s111, %s113
      %p117 = scmp.eq.s32.totalorder %s14, 0
      %p118 = por %p116, %p117
      %p119 = scmp.ne.s32.totalorder %s111, %s113
      %p120 = scmp.eq.s32.totalorder %s19, 1
      %p121 = por %p119, %p120
      %p122 = scmp.ne.s32.totalorder %s113, %s114
      %p123 = scmp.eq.s32.totalorder %s19, 0
      %p124 = por %p122, %p123
      %p125 = scmp.ne.s32.totalorder %s113, %s114
      %p126 = scmp.eq.s32.totalorder %s20, 1
      %p127 = por %p125, %p126
      %p129 = scmp.ne.s32.totalorder %s114, %s128
      %p130 = scmp.eq.s32.totalorder %s20, 0
      %p131 = por %p129, %p130
      %s132 = ssub.s32 %s14, %s21
      %p133 = scmp.eq.s32.totalorder %s132, 0
      %s135 = sadd.s32 %s134, 1
      %s136 = scalar_select %p133, %s134, %s135
      %p139 = pneg %p133
      %p140 = scmp.eq.s32.totalorder %s14, 1
      %p141 = por %p139, %p140
      %p142 = scmp.ne.s32.totalorder %s134, %s137
      %p143 = scmp.eq.s32.totalorder %s14, 0
      %p144 = por %p142, %p143
      %p145 = scmp.ne.s32.totalorder %s134, %s137
      %p146 = scmp.eq.s32.totalorder %s19, 1
      %p147 = por %p145, %p146
      %p148 = scmp.ne.s32.totalorder %s137, %s138
      %p149 = scmp.eq.s32.totalorder %s19, 0
      %p150 = por %p148, %p149
      %p151 = scmp.ne.s32.totalorder %s137, %s138
      %p152 = scmp.eq.s32.totalorder %s20, 1
      %p153 = por %p151, %p152
      %p155 = scmp.ne.s32.totalorder %s138, %s154
      %p156 = scmp.eq.s32.totalorder %s20, 0
      %p157 = por %p155, %p156
      %p158 = scmp.le.s32.totalorder 1, %s14
      %p159 = scmp.lt.s32.totalorder %s14, 3
      %p160 = pnand %p158, %p159
      %p161 = pneg %p160
      // Predicated region
      $region9: #{rdb_forward.1} parent=5 // pred_check
        _
      $region10: #{rdb_forward.1} parent=5 // pred_check_branch
        %163 = sbr.rel (%p160) target = $region12
      $region11: #{rdb_forward.1} parent=5 // pred_region
        %s164 = ssub.s32 %s14, 1
        // Predicated region
        $region13: #{rdb_forward.1} parent=11 // pred_check
          %p165 = pneg %p61
        $region14: #{rdb_forward.1} parent=11 // pred_check_branch
          %167 = sbr.rel (%p165) target = $region16
        $region15: #{rdb_forward.1} parent=11 // pred_region
          %s169 = ssub.s32 73728, 73728
          %170 = vsyncadd [#allocation4], %s169
          %s171 = sshll.u32 [#allocation3], 4
          %s172 = int_to_ptr.vmem [resolvable:$true] %s171
          %177 = dma.hbm_to_vmem [thread:$0]  %s1, 73728, %s172, [#allocation4], 128, 128, 8
        $region16: #{rdb_forward.1} parent=11 // pred_fallthru
          _
        // Predicated region
        $region17: #{rdb_forward.1} parent=11 // pred_check
          %p178 = pneg %p82
        $region18: #{rdb_forward.1} parent=11 // pred_check_branch
          %180 = sbr.rel (%p178) target = $region20
        $region19: #{rdb_forward.1} parent=11 // pred_region
          %s182 = ssub.s32 48, 48
          %183 = vsyncadd [#allocation6], %s182
          %s184 = sshll.u32 [#allocation5], 4
          %s185 = int_to_ptr.vmem [resolvable:$true] %s184
          %190 = dma.hbm_to_vmem [thread:$0]  %s2, 48, %s185, [#allocation6], 16, 16, 1
        $region20: #{rdb_forward.1} parent=11 // pred_fallthru
          _
        // Predicated region
        $region21: #{rdb_forward.1} parent=11 // pred_check
          %p191 = pneg %p103
        $region22: #{rdb_forward.1} parent=11 // pred_check_branch
          %193 = sbr.rel (%p191) target = $region24
        $region23: #{rdb_forward.1} parent=11 // pred_region
          %s195 = ssub.s32 8192, 8192
          %196 = vsyncadd [#allocation6], %s195
          %s197 = sshll.u32 [#allocation7], 4
          %s198 = int_to_ptr.vmem [resolvable:$true] %s197
          %203 = dma.hbm_to_vmem [thread:$0]  %s3, 8192, %s198, [#allocation6], 128, 128, 8
        $region24: #{rdb_forward.1} parent=11 // pred_fallthru
          _
        // Predicated region
        $region25: #{rdb_forward.1} parent=11 // pred_check
          %p204 = pneg %p124
        $region26: #{rdb_forward.1} parent=11 // pred_check_branch
          %206 = sbr.rel (%p204) target = $region28
        $region27: #{rdb_forward.1} parent=11 // pred_region
          %s208 = ssub.s32 16, 16
          %209 = vsyncadd [#allocation9], %s208
          %s211 = sshll.u32 [#allocation8], 4
          %s212 = int_to_ptr.vmem [resolvable:$true] %s211
          %214 = dma.hbm_to_vmem [thread:$0]  %s4, 16, %s212, [#allocation9]
        $region28: #{rdb_forward.1} parent=11 // pred_fallthru
          _
      $region12: #{rdb_forward.1} parent=5 // pred_fallthru
        _
      %p215 = scmp.lt.s32.totalorder %s14, 2
      // Predicated region
      $region29: #{rdb_forward.1} parent=5 // pred_check
        %p216 = pneg %p215
      $region30: #{rdb_forward.1} parent=5 // pred_check_branch
        %218 = sbr.rel (%p216) target = $region32
      $region31: #{rdb_forward.1} parent=5 // pred_region
        // Predicated region
        $region33: #{rdb_forward.1} parent=31 // pred_check
          %p219 = pneg %p34
        $region34: #{rdb_forward.1} parent=31 // pred_check_branch
          %221 = sbr.rel (%p219) target = $region36
        $region35: #{rdb_forward.1} parent=31 // pred_region
          %p222 = scmp.lt.s32.totalorder %s14, 1
          %s223 = scalar_select %p222, %s14, 1
          %s224 = smul.addr %s223, 12
          %s225 = smul.addr %s224, 8
          %s226 = scalar_lea.vmem %s0, %s225
        $region36: #{rdb_forward.1} parent=31 // pred_fallthru
          _
      $region32: #{rdb_forward.1} parent=5 // pred_fallthru
        _
      %p227 = scmp.le.s32.totalorder 1, %s14
      %p228 = scmp.lt.s32.totalorder %s14, 3
      %p229 = pnand %p227, %p228
      %p230 = pneg %p229
      // Predicated region
      $region37: #{rdb_forward.1} parent=5 // pred_check
        _
      $region38: #{rdb_forward.1} parent=5 // pred_check_branch
        %232 = sbr.rel (%p229) target = $region40
      $region39: #{rdb_forward.1} parent=5 // pred_region
        %s233 = ssub.s32 %s14, 1
        // Predicated region
        $region41: #{rdb_forward.1} parent=39 // pred_check
          %p234 = pneg %p61
        $region42: #{rdb_forward.1} parent=39 // pred_check_branch
          %236 = sbr.rel (%p234) target = $region44
        $region43: #{rdb_forward.1} parent=39 // pred_region
          %237 = dma.done [#allocation4], 73728
        $region44: #{rdb_forward.1} parent=39 // pred_fallthru
          _
        // Predicated region
        $region45: #{rdb_forward.1} parent=39 // pred_check
          %p238 = pneg %p82
        $region46: #{rdb_forward.1} parent=39 // pred_check_branch
          %240 = sbr.rel (%p238) target = $region48
        $region47: #{rdb_forward.1} parent=39 // pred_region
          %241 = dma.done [#allocation6], 48
        $region48: #{rdb_forward.1} parent=39 // pred_fallthru
          _
        // Predicated region
        $region49: #{rdb_forward.1} parent=39 // pred_check
          %p242 = pneg %p103
        $region50: #{rdb_forward.1} parent=39 // pred_check_branch
          %244 = sbr.rel (%p242) target = $region52
        $region51: #{rdb_forward.1} parent=39 // pred_region
          %245 = dma.done [#allocation6], 8192
        $region52: #{rdb_forward.1} parent=39 // pred_fallthru
          _
        // Predicated region
        $region53: #{rdb_forward.1} parent=39 // pred_check
          %p246 = pneg %p124
        $region54: #{rdb_forward.1} parent=39 // pred_check_branch
          %248 = sbr.rel (%p246) target = $region56
        $region55: #{rdb_forward.1} parent=39 // pred_region
          %249 = dma.done [#allocation9], 16
        $region56: #{rdb_forward.1} parent=39 // pred_fallthru
          _
        %p250 = scmp.lt.s32.totalorder %s19, 1
        %s251 = scalar_select %p250, %s19, 1
        %s252 = smul.addr %s251, 12
        %s253 = smul.addr %s252, 8
        %s254 = scalar_lea.vmem %s0, %s253
        %p255 = pneg %p40
        %p256 = pneg %p37
        %p257 = pneg %p61
        %p258 = pneg %p58
        %p259 = pneg %p82
        %p260 = pneg %p79
        %p261 = pneg %p103
        %p262 = pneg %p100
        %p263 = pneg %p124
        %p264 = pneg %p121
        %p265 = pneg %p150
        %p266 = pneg %p147
        %p267 = scmp.lt.s32.totalorder %s19, 1
        %s268 = scalar_select %p267, %s19, 1
        %s269 = smul.addr %s268, 2
        %s270 = smul.addr %s269, 8
        %s271 = scalar_lea.vmem %s5, %s270
        %p272 = scmp.lt.s32.totalorder %s19, 1
        %s273 = scalar_select %p272, %s19, 1
        %s274 = smul.addr %s273, 12
        %s275 = smul.addr %s274, 8
        %s276 = scalar_lea.vmem %s0, %s275
        %p277 = scmp.lt.s32.totalorder %s19, 1
        %s278 = scalar_select %p277, %s19, 1
        %s279 = smul.addr %s278, 2
        %s280 = smul.addr %s279, 8
        %s281 = scalar_lea.vmem %s5, %s280
        %v282 = vld [vmem:[%s276] sm:$0xff]
        %v283 = vld [vmem:[%s276 + $0x8] sm:$0xff]
        %v284 = vld [vmem:[%s276 + $0x10] sm:$0xff]
        %v285 = vld [vmem:[%s276 + $0x18] sm:$0xff]
        %v286 = vld [vmem:[%s276 + $0x20] sm:$0xff]
        %v287 = vld [vmem:[%s276 + $0x28] sm:$0xff]
        %v288 = vld [vmem:[%s276 + $0x30] sm:$0xff]
        %v289 = vld [vmem:[%s276 + $0x38] sm:$0xff]
        %v290 = vld [vmem:[%s276 + $0x40] sm:$0x3]
        %v291 = vld [vmem:[%s276 + $0x48] sm:$0x3]
        %v292 = vld [vmem:[%s276 + $0x50] sm:$0x3]
        %v293 = vld [vmem:[%s276 + $0x58] sm:$0x3]
        %294 = vst [vmem:[#allocation2] sm:$0xff] %v282
        %295 = vst [vmem:[#allocation2 + $0x8] sm:$0xff] %v283
        %296 = vst [vmem:[#allocation2 + $0x10] sm:$0xff] %v284
        %297 = vst [vmem:[#allocation2 + $0x18] sm:$0xff] %v285
        %298 = vst [vmem:[#allocation2 + $0x20] sm:$0xff] %v286
        %299 = vst [vmem:[#allocation2 + $0x28] sm:$0xff] %v287
        %300 = vst [vmem:[#allocation2 + $0x30] sm:$0xff] %v288
        %301 = vst [vmem:[#allocation2 + $0x38] sm:$0xff] %v289
        %302 = vst [vmem:[#allocation2 + $0x40] sm:$0x3] %v290
        %303 = vst [vmem:[#allocation2 + $0x48] sm:$0x3] %v291
        %304 = vst [vmem:[#allocation2 + $0x50] sm:$0x3] %v292
        %305 = vst [vmem:[#allocation2 + $0x58] sm:$0x3] %v293
        %v306 = vld [vmem:[#allocation2] sm:$0xff]
        %v307 = vld [vmem:[#allocation2 + $0x8] sm:$0xff]
        %v308 = vld [vmem:[#allocation2 + $0x10] sm:$0xff]
        %v309 = vld [vmem:[#allocation2 + $0x18] sm:$0xff]
        %v310 = vld [vmem:[#allocation2 + $0x20] sm:$0xff]
        %v311 = vld [vmem:[#allocation2 + $0x28] sm:$0xff]
        %v312 = vld [vmem:[#allocation2 + $0x30] sm:$0xff]
        %v313 = vld [vmem:[#allocation2 + $0x38] sm:$0xff]
        %v314 = vld [vmem:[#allocation3] sm:$0xff]
        %v315 = vld [vmem:[#allocation3 + $0x8] sm:$0xff]
        %v316 = vld [vmem:[#allocation3 + $0x10] sm:$0xff]
        %v317 = vld [vmem:[#allocation3 + $0x18] sm:$0xff]
        %v318 = vld [vmem:[#allocation3 + $0x20] sm:$0xff]
        %v319 = vld [vmem:[#allocation3 + $0x28] sm:$0xff]
        %v320 = vld [vmem:[#allocation3 + $0x30] sm:$0xff]
        %v321 = vld [vmem:[#allocation3 + $0x38] sm:$0xff]
        %v322 = vld [vmem:[#allocation3 + $0x40] sm:$0xff]
        %v323 = vld [vmem:[#allocation3 + $0x48] sm:$0xff]
        %v324 = vld [vmem:[#allocation3 + $0x50] sm:$0xff]
        %v325 = vld [vmem:[#allocation3 + $0x58] sm:$0xff]
        %v326 = vld [vmem:[#allocation3 + $0x60] sm:$0xff]
        %v327 = vld [vmem:[#allocation3 + $0x68] sm:$0xff]
        %v328 = vld [vmem:[#allocation3 + $0x70] sm:$0xff]
        %v329 = vld [vmem:[#allocation3 + $0x78] sm:$0xff]
        %v330 = vld [vmem:[#allocation3 + $0x80] sm:$0xff]
        %v331 = vld [vmem:[#allocation3 + $0x88] sm:$0xff]
        %v332 = vld [vmem:[#allocation3 + $0x90] sm:$0xff]
        %v333 = vld [vmem:[#allocation3 + $0x98] sm:$0xff]
        %v334 = vld [vmem:[#allocation3 + $0xa0] sm:$0xff]
        %v335 = vld [vmem:[#allocation3 + $0xa8] sm:$0xff]
        %v336 = vld [vmem:[#allocation3 + $0xb0] sm:$0xff]
        %v337 = vld [vmem:[#allocation3 + $0xb8] sm:$0xff]
        %v338 = vld [vmem:[#allocation3 + $0xc0] sm:$0xff]
        %v339 = vld [vmem:[#allocation3 + $0xc8] sm:$0xff]
        %v340 = vld [vmem:[#allocation3 + $0xd0] sm:$0xff]
        %v341 = vld [vmem:[#allocation3 + $0xd8] sm:$0xff]
        %v342 = vld [vmem:[#allocation3 + $0xe0] sm:$0xff]
        %v343 = vld [vmem:[#allocation3 + $0xe8] sm:$0xff]
        %v344 = vld [vmem:[#allocation3 + $0xf0] sm:$0xff]
        %v345 = vld [vmem:[#allocation3 + $0xf8] sm:$0xff]
        %v346 = vld [vmem:[#allocation3 + $0x100] sm:$0xff]
        %v347 = vld [vmem:[#allocation3 + $0x108] sm:$0xff]
        %v348 = vld [vmem:[#allocation3 + $0x110] sm:$0xff]
        %v349 = vld [vmem:[#allocation3 + $0x118] sm:$0xff]
        %v350 = vld [vmem:[#allocation3 + $0x120] sm:$0xff]
        %v351 = vld [vmem:[#allocation3 + $0x128] sm:$0xff]
        %v352 = vld [vmem:[#allocation3 + $0x130] sm:$0xff]
        %v353 = vld [vmem:[#allocation3 + $0x138] sm:$0xff]
        %v354 = vld [vmem:[#allocation3 + $0x140] sm:$0xff]
        %v355 = vld [vmem:[#allocation3 + $0x148] sm:$0xff]
        %v356 = vld [vmem:[#allocation3 + $0x150] sm:$0xff]
        %v357 = vld [vmem:[#allocation3 + $0x158] sm:$0xff]
        %v358 = vld [vmem:[#allocation3 + $0x160] sm:$0xff]
        %v359 = vld [vmem:[#allocation3 + $0x168] sm:$0xff]
        %v360 = vld [vmem:[#allocation3 + $0x170] sm:$0xff]
        %v361 = vld [vmem:[#allocation3 + $0x178] sm:$0xff]
        %v362 = vld [vmem:[#allocation3 + $0x180] sm:$0xff]
        %v363 = vld [vmem:[#allocation3 + $0x188] sm:$0xff]
        %v364 = vld [vmem:[#allocation3 + $0x190] sm:$0xff]
        %v365 = vld [vmem:[#allocation3 + $0x198] sm:$0xff]
        %v366 = vld [vmem:[#allocation3 + $0x1a0] sm:$0xff]
        %v367 = vld [vmem:[#allocation3 + $0x1a8] sm:$0xff]
        %v368 = vld [vmem:[#allocation3 + $0x1b0] sm:$0xff]
        %v369 = vld [vmem:[#allocation3 + $0x1b8] sm:$0xff]
        %v370 = vld [vmem:[#allocation3 + $0x1c0] sm:$0xff]
        %v371 = vld [vmem:[#allocation3 + $0x1c8] sm:$0xff]
        %v372 = vld [vmem:[#allocation3 + $0x1d0] sm:$0xff]
        %v373 = vld [vmem:[#allocation3 + $0x1d8] sm:$0xff]
        %v374 = vld [vmem:[#allocation3 + $0x1e0] sm:$0xff]
        %v375 = vld [vmem:[#allocation3 + $0x1e8] sm:$0xff]
        %v376 = vld [vmem:[#allocation3 + $0x1f0] sm:$0xff]
        %v377 = vld [vmem:[#allocation3 + $0x1f8] sm:$0xff]
        %v378 = vld [vmem:[#allocation2] sm:$0xfe]
        %v379 = vld [vmem:[#allocation2 + $0x8] sm:$0xfe]
        %v380 = vld [vmem:[#allocation2 + $0x10] sm:$0xfe]
        %v381 = vld [vmem:[#allocation2 + $0x18] sm:$0xfe]
        %v382 = vld [vmem:[#allocation2 + $0x40] sm:$0x1]
        %v383 = vld [vmem:[#allocation2 + $0x48] sm:$0x1]
        %v384 = vld [vmem:[#allocation2 + $0x50] sm:$0x1]
        %v385 = vld [vmem:[#allocation2 + $0x58] sm:$0x1]
        %s386 = scalar_lea.vmem [#allocation3], 512
        %v387 = vld [vmem:[%s386] sm:$0xff]
        %v388 = vld [vmem:[%s386 + $0x8] sm:$0xff]
        %v389 = vld [vmem:[%s386 + $0x10] sm:$0xff]
        %v390 = vld [vmem:[%s386 + $0x18] sm:$0xff]
        %v391 = vld [vmem:[%s386 + $0x20] sm:$0xff]
        %v392 = vld [vmem:[%s386 + $0x28] sm:$0xff]
        %v393 = vld [vmem:[%s386 + $0x30] sm:$0xff]
        %v394 = vld [vmem:[%s386 + $0x38] sm:$0xff]
        %v395 = vld [vmem:[%s386 + $0x40] sm:$0xff]
        %v396 = vld [vmem:[%s386 + $0x48] sm:$0xff]
        %v397 = vld [vmem:[%s386 + $0x50] sm:$0xff]
        %v398 = vld [vmem:[%s386 + $0x58] sm:$0xff]
        %v399 = vld [vmem:[%s386 + $0x60] sm:$0xff]
        %v400 = vld [vmem:[%s386 + $0x68] sm:$0xff]
        %v401 = vld [vmem:[%s386 + $0x70] sm:$0xff]
        %v402 = vld [vmem:[%s386 + $0x78] sm:$0xff]
        %v403 = vld [vmem:[%s386 + $0x80] sm:$0xff]
        %v404 = vld [vmem:[%s386 + $0x88] sm:$0xff]
        %v405 = vld [vmem:[%s386 + $0x90] sm:$0xff]
        %v406 = vld [vmem:[%s386 + $0x98] sm:$0xff]
        %v407 = vld [vmem:[%s386 + $0xa0] sm:$0xff]
        %v408 = vld [vmem:[%s386 + $0xa8] sm:$0xff]
        %v409 = vld [vmem:[%s386 + $0xb0] sm:$0xff]
        %v410 = vld [vmem:[%s386 + $0xb8] sm:$0xff]
        %v411 = vld [vmem:[%s386 + $0xc0] sm:$0xff]
        %v412 = vld [vmem:[%s386 + $0xc8] sm:$0xff]
        %v413 = vld [vmem:[%s386 + $0xd0] sm:$0xff]
        %v414 = vld [vmem:[%s386 + $0xd8] sm:$0xff]
        %v415 = vld [vmem:[%s386 + $0xe0] sm:$0xff]
        %v416 = vld [vmem:[%s386 + $0xe8] sm:$0xff]
        %v417 = vld [vmem:[%s386 + $0xf0] sm:$0xff]
        %v418 = vld [vmem:[%s386 + $0xf8] sm:$0xff]
        %v419 = vld [vmem:[%s386 + $0x100] sm:$0xff]
        %v420 = vld [vmem:[%s386 + $0x108] sm:$0xff]
        %v421 = vld [vmem:[%s386 + $0x110] sm:$0xff]
        %v422 = vld [vmem:[%s386 + $0x118] sm:$0xff]
        %v423 = vld [vmem:[%s386 + $0x120] sm:$0xff]
        %v424 = vld [vmem:[%s386 + $0x128] sm:$0xff]
        %v425 = vld [vmem:[%s386 + $0x130] sm:$0xff]
        %v426 = vld [vmem:[%s386 + $0x138] sm:$0xff]
        %v427 = vld [vmem:[%s386 + $0x140] sm:$0xff]
        %v428 = vld [vmem:[%s386 + $0x148] sm:$0xff]
        %v429 = vld [vmem:[%s386 + $0x150] sm:$0xff]
        %v430 = vld [vmem:[%s386 + $0x158] sm:$0xff]
        %v431 = vld [vmem:[%s386 + $0x160] sm:$0xff]
        %v432 = vld [vmem:[%s386 + $0x168] sm:$0xff]
        %v433 = vld [vmem:[%s386 + $0x170] sm:$0xff]
        %v434 = vld [vmem:[%s386 + $0x178] sm:$0xff]
        %v435 = vld [vmem:[%s386 + $0x180] sm:$0xff]
        %v436 = vld [vmem:[%s386 + $0x188] sm:$0xff]
        %v437 = vld [vmem:[%s386 + $0x190] sm:$0xff]
        %v438 = vld [vmem:[%s386 + $0x198] sm:$0xff]
        %v439 = vld [vmem:[%s386 + $0x1a0] sm:$0xff]
        %v440 = vld [vmem:[%s386 + $0x1a8] sm:$0xff]
        %v441 = vld [vmem:[%s386 + $0x1b0] sm:$0xff]
        %v442 = vld [vmem:[%s386 + $0x1b8] sm:$0xff]
        %v443 = vld [vmem:[%s386 + $0x1c0] sm:$0xff]
        %v444 = vld [vmem:[%s386 + $0x1c8] sm:$0xff]
        %v445 = vld [vmem:[%s386 + $0x1d0] sm:$0xff]
        %v446 = vld [vmem:[%s386 + $0x1d8] sm:$0xff]
        %v447 = vld [vmem:[%s386 + $0x1e0] sm:$0xff]
        %v448 = vld [vmem:[%s386 + $0x1e8] sm:$0xff]
        %v449 = vld [vmem:[%s386 + $0x1f0] sm:$0xff]
        %v450 = vld [vmem:[%s386 + $0x1f8] sm:$0xff]
        %vm463 = vcmask 1046528
        %v464 = vrot.slane %v378, 1
        %v465 = vrot.slane %v310, 1
        %v466 = vsel %vm463, %v464, %v465
        %v467 = vrot.slane %v379, 1
        %v468 = vrot.slane %v311, 1
        %v469 = vsel %vm463, %v467, %v468
        %v470 = vrot.slane %v380, 1
        %v471 = vrot.slane %v312, 1
        %v472 = vsel %vm463, %v470, %v471
        %v473 = vrot.slane %v381, 1
        %v474 = vrot.slane %v313, 1
        %v475 = vsel %vm463, %v473, %v474
        %v476 = vrot.slane %v382, 1
        %v477 = vsel %vm463, %v465, %v476
        %v478 = vrot.slane %v383, 1
        %v479 = vsel %vm463, %v468, %v478
        %v480 = vrot.slane %v384, 1
        %v481 = vsel %vm463, %v471, %v480
        %v482 = vrot.slane %v385, 1
        %v483 = vsel %vm463, %v474, %v482
        %492 = vmatprep.subr.mxu0 0.0
        %493 = vmatpush1.msra.mxu0 %v402
        %494 = vmatprep.subr.mxu0 0.0
        %495 = vmatpush1.msra.mxu0 %v401
        %496 = vmatprep.subr.mxu0 0.0
        %497 = vmatpush1.msra.mxu0 %v400
        %498 = vmatprep.subr.mxu0 0.0
        %499 = vmatpush1.msra.mxu0 %v399
        %500 = vmatprep.subr.mxu0 0.0
        %501 = vmatpush1.msra.mxu0 %v398
        %502 = vmatprep.subr.mxu0 0.0
        %503 = vmatpush1.msra.mxu0 %v397
        %504 = vmatprep.subr.mxu0 0.0
        %505 = vmatpush1.msra.mxu0 %v396
        %506 = vmatprep.subr.mxu0 0.0
        %507 = vmatpush1.msra.mxu0 %v395
        %508 = vmatprep.subr.mxu0 0.0
        %509 = vmatpush1.msra.mxu0 %v394
        %510 = vmatprep.subr.mxu0 0.0
        %511 = vmatpush1.msra.mxu0 %v393
        %512 = vmatprep.subr.mxu0 0.0
        %513 = vmatpush1.msra.mxu0 %v392
        %514 = vmatprep.subr.mxu0 0.0
        %515 = vmatpush1.msra.mxu0 %v391
        %516 = vmatprep.subr.mxu0 0.0
        %517 = vmatpush1.msra.mxu0 %v390
        %518 = vmatprep.subr.mxu0 0.0
        %519 = vmatpush1.msra.mxu0 %v389
        %520 = vmatprep.subr.mxu0 0.0
        %521 = vmatpush1.msra.mxu0 %v388
        %522 = vmatprep.subr.mxu0 0.0
        %523 = vmatpush1.msra.mxu0 %v387
        %524 = vmatprep.subr.mxu0 0.0
        %525 = vmatpush2.msra.mxu0 %v418
        %526 = vmatprep.subr.mxu0 0.0
        %527 = vmatpush2.msra.mxu0 %v417
        %528 = vmatprep.subr.mxu0 0.0
        %529 = vmatpush2.msra.mxu0 %v416
        %530 = vmatprep.subr.mxu0 0.0
        %531 = vmatpush2.msra.mxu0 %v415
        %532 = vmatprep.subr.mxu0 0.0
        %533 = vmatpush2.msra.mxu0 %v414
        %534 = vmatprep.subr.mxu0 0.0
        %535 = vmatpush2.msra.mxu0 %v413
        %536 = vmatprep.subr.mxu0 0.0
        %537 = vmatpush2.msra.mxu0 %v412
        %538 = vmatprep.subr.mxu0 0.0
        %539 = vmatpush2.msra.mxu0 %v411
        %540 = vmatprep.subr.mxu0 0.0
        %541 = vmatpush2.msra.mxu0 %v410
        %542 = vmatprep.subr.mxu0 0.0
        %543 = vmatpush2.msra.mxu0 %v409
        %544 = vmatprep.subr.mxu0 0.0
        %545 = vmatpush2.msra.mxu0 %v408
        %546 = vmatprep.subr.mxu0 0.0
        %547 = vmatpush2.msra.mxu0 %v407
        %548 = vmatprep.subr.mxu0 0.0
        %549 = vmatpush2.msra.mxu0 %v406
        %550 = vmatprep.subr.mxu0 0.0
        %551 = vmatpush2.msra.mxu0 %v405
        %552 = vmatprep.subr.mxu0 0.0
        %553 = vmatpush2.msra.mxu0 %v404
        %554 = vmatprep.subr.mxu0 0.0
        %555 = vmatpush2.msra.mxu0 %v403
        %556 = vmatprep.mubr.f32.mxu0 %v469
        %557 = vmatmul.mubr.f32.gmra.mxu0 %v466
        %v558 = vpop.f32.mrf.mxu0
        %v559 = vadd.f32 0.0, %v558
        %v560 = vpop.f32.mrf.mxu0
        %561 = vmatprep.mubr.f32.mxu0 %v479
        %562 = vmatmul.mubr.f32.gmra.mxu0 %v477
        %v563 = vpop.f32.mrf.mxu0
        %v564 = vadd.f32 0.0, %v563
        %v565 = vpop.f32.mrf.mxu0
        %566 = vdwg.mxu0
        %567 = vmatprep.subr.mxu0 0.0
        %568 = vmatpush1.msra.mxu0 %v434
        %569 = vmatprep.subr.mxu0 0.0
        %570 = vmatpush1.msra.mxu0 %v433
        %571 = vmatprep.subr.mxu0 0.0
        %572 = vmatpush1.msra.mxu0 %v432
        %573 = vmatprep.subr.mxu0 0.0
        %574 = vmatpush1.msra.mxu0 %v431
        %575 = vmatprep.subr.mxu0 0.0
        %576 = vmatpush1.msra.mxu0 %v430
        %577 = vmatprep.subr.mxu0 0.0
        %578 = vmatpush1.msra.mxu0 %v429
        %579 = vmatprep.subr.mxu0 0.0
        %580 = vmatpush1.msra.mxu0 %v428
        %581 = vmatprep.subr.mxu0 0.0
        %582 = vmatpush1.msra.mxu0 %v427
        %583 = vmatprep.subr.mxu0 0.0
        %584 = vmatpush1.msra.mxu0 %v426
        %585 = vmatprep.subr.mxu0 0.0
        %586 = vmatpush1.msra.mxu0 %v425
        %587 = vmatprep.subr.mxu0 0.0
        %588 = vmatpush1.msra.mxu0 %v424
        %589 = vmatprep.subr.mxu0 0.0
        %590 = vmatpush1.msra.mxu0 %v423
        %591 = vmatprep.subr.mxu0 0.0
        %592 = vmatpush1.msra.mxu0 %v422
        %593 = vmatprep.subr.mxu0 0.0
        %594 = vmatpush1.msra.mxu0 %v421
        %595 = vmatprep.subr.mxu0 0.0
        %596 = vmatpush1.msra.mxu0 %v420
        %597 = vmatprep.subr.mxu0 0.0
        %598 = vmatpush1.msra.mxu0 %v419
        %599 = vmatprep.subr.mxu0 0.0
        %600 = vmatpush2.msra.mxu0 %v450
        %601 = vmatprep.subr.mxu0 0.0
        %602 = vmatpush2.msra.mxu0 %v449
        %603 = vmatprep.subr.mxu0 0.0
        %604 = vmatpush2.msra.mxu0 %v448
        %605 = vmatprep.subr.mxu0 0.0
        %606 = vmatpush2.msra.mxu0 %v447
        %607 = vmatprep.subr.mxu0 0.0
        %608 = vmatpush2.msra.mxu0 %v446
        %609 = vmatprep.subr.mxu0 0.0
        %610 = vmatpush2.msra.mxu0 %v445
        %611 = vmatprep.subr.mxu0 0.0
        %612 = vmatpush2.msra.mxu0 %v444
        %613 = vmatprep.subr.mxu0 0.0
        %614 = vmatpush2.msra.mxu0 %v443
        %615 = vmatprep.subr.mxu0 0.0
        %616 = vmatpush2.msra.mxu0 %v442
        %617 = vmatprep.subr.mxu0 0.0
        %618 = vmatpush2.msra.mxu0 %v441
        %619 = vmatprep.subr.mxu0 0.0
        %620 = vmatpush2.msra.mxu0 %v440
        %621 = vmatprep.subr.mxu0 0.0
        %622 = vmatpush2.msra.mxu0 %v439
        %623 = vmatprep.subr.mxu0 0.0
        %624 = vmatpush2.msra.mxu0 %v438
        %625 = vmatprep.subr.mxu0 0.0
        %626 = vmatpush2.msra.mxu0 %v437
        %627 = vmatprep.subr.mxu0 0.0
        %628 = vmatpush2.msra.mxu0 %v436
        %629 = vmatprep.subr.mxu0 0.0
        %630 = vmatpush2.msra.mxu0 %v435
        %631 = vmatprep.mubr.f32.mxu0 %v475
        %632 = vmatmul.mubr.f32.gmra.mxu0 %v472
        %v633 = vpop.f32.mrf.mxu0
        %v634 = vadd.f32 %v559, %v633
        %v635 = vpop.f32.mrf.mxu0
        %636 = vmatprep.mubr.f32.mxu0 %v483
        %637 = vmatmul.mubr.f32.gmra.mxu0 %v481
        %v638 = vpop.f32.mrf.mxu0
        %v639 = vadd.f32 %v564, %v638
        %v640 = vpop.f32.mrf.mxu0
        %641 = vdwg.mxu0
        %642 = vmatprep.subr.mxu0 0.0
        %643 = vmatpush1.msra.mxu0 %v329
        %644 = vmatprep.subr.mxu0 0.0
        %645 = vmatpush1.msra.mxu0 %v328
        %646 = vmatprep.subr.mxu0 0.0
        %647 = vmatpush1.msra.mxu0 %v327
        %648 = vmatprep.subr.mxu0 0.0
        %649 = vmatpush1.msra.mxu0 %v326
        %650 = vmatprep.subr.mxu0 0.0
        %651 = vmatpush1.msra.mxu0 %v325
        %652 = vmatprep.subr.mxu0 0.0
        %653 = vmatpush1.msra.mxu0 %v324
        %654 = vmatprep.subr.mxu0 0.0
        %655 = vmatpush1.msra.mxu0 %v323
        %656 = vmatprep.subr.mxu0 0.0
        %657 = vmatpush1.msra.mxu0 %v322
        %658 = vmatprep.subr.mxu0 0.0
        %659 = vmatpush1.msra.mxu0 %v321
        %660 = vmatprep.subr.mxu0 0.0
        %661 = vmatpush1.msra.mxu0 %v320
        %662 = vmatprep.subr.mxu0 0.0
        %663 = vmatpush1.msra.mxu0 %v319
        %664 = vmatprep.subr.mxu0 0.0
        %665 = vmatpush1.msra.mxu0 %v318
        %666 = vmatprep.subr.mxu0 0.0
        %667 = vmatpush1.msra.mxu0 %v317
        %668 = vmatprep.subr.mxu0 0.0
        %669 = vmatpush1.msra.mxu0 %v316
        %670 = vmatprep.subr.mxu0 0.0
        %671 = vmatpush1.msra.mxu0 %v315
        %672 = vmatprep.subr.mxu0 0.0
        %673 = vmatpush1.msra.mxu0 %v314
        %674 = vmatprep.subr.mxu0 0.0
        %675 = vmatpush2.msra.mxu0 %v345
        %676 = vmatprep.subr.mxu0 0.0
        %677 = vmatpush2.msra.mxu0 %v344
        %678 = vmatprep.subr.mxu0 0.0
        %679 = vmatpush2.msra.mxu0 %v343
        %680 = vmatprep.subr.mxu0 0.0
        %681 = vmatpush2.msra.mxu0 %v342
        %682 = vmatprep.subr.mxu0 0.0
        %683 = vmatpush2.msra.mxu0 %v341
        %684 = vmatprep.subr.mxu0 0.0
        %685 = vmatpush2.msra.mxu0 %v340
        %686 = vmatprep.subr.mxu0 0.0
        %687 = vmatpush2.msra.mxu0 %v339
        %688 = vmatprep.subr.mxu0 0.0
        %689 = vmatpush2.msra.mxu0 %v338
        %690 = vmatprep.subr.mxu0 0.0
        %691 = vmatpush2.msra.mxu0 %v337
        %692 = vmatprep.subr.mxu0 0.0
        %693 = vmatpush2.msra.mxu0 %v336
        %694 = vmatprep.subr.mxu0 0.0
        %695 = vmatpush2.msra.mxu0 %v335
        %696 = vmatprep.subr.mxu0 0.0
        %697 = vmatpush2.msra.mxu0 %v334
        %698 = vmatprep.subr.mxu0 0.0
        %699 = vmatpush2.msra.mxu0 %v333
        %700 = vmatprep.subr.mxu0 0.0
        %701 = vmatpush2.msra.mxu0 %v332
        %702 = vmatprep.subr.mxu0 0.0
        %703 = vmatpush2.msra.mxu0 %v331
        %704 = vmatprep.subr.mxu0 0.0
        %705 = vmatpush2.msra.mxu0 %v330
        %706 = vmatprep.mubr.f32.mxu0 %v307
        %707 = vmatmul.mubr.f32.gmra.mxu0 %v306
        %v708 = vpop.f32.mrf.mxu0
        %v709 = vadd.f32 %v634, %v708
        %v710 = vpop.f32.mrf.mxu0
        %711 = vmatprep.mubr.f32.mxu0 %v311
        %712 = vmatmul.mubr.f32.gmra.mxu0 %v310
        %v713 = vpop.f32.mrf.mxu0
        %v714 = vadd.f32 %v639, %v713
        %v715 = vpop.f32.mrf.mxu0
        %716 = vdwg.mxu0
        %717 = vmatprep.subr.mxu0 0.0
        %718 = vmatpush1.msra.mxu0 %v361
        %719 = vmatprep.subr.mxu0 0.0
        %720 = vmatpush1.msra.mxu0 %v360
        %721 = vmatprep.subr.mxu0 0.0
        %722 = vmatpush1.msra.mxu0 %v359
        %723 = vmatprep.subr.mxu0 0.0
        %724 = vmatpush1.msra.mxu0 %v358
        %725 = vmatprep.subr.mxu0 0.0
        %726 = vmatpush1.msra.mxu0 %v357
        %727 = vmatprep.subr.mxu0 0.0
        %728 = vmatpush1.msra.mxu0 %v356
        %729 = vmatprep.subr.mxu0 0.0
        %730 = vmatpush1.msra.mxu0 %v355
        %731 = vmatprep.subr.mxu0 0.0
        %732 = vmatpush1.msra.mxu0 %v354
        %733 = vmatprep.subr.mxu0 0.0
        %734 = vmatpush1.msra.mxu0 %v353
        %735 = vmatprep.subr.mxu0 0.0
        %736 = vmatpush1.msra.mxu0 %v352
        %737 = vmatprep.subr.mxu0 0.0
        %738 = vmatpush1.msra.mxu0 %v351
        %739 = vmatprep.subr.mxu0 0.0
        %740 = vmatpush1.msra.mxu0 %v350
        %741 = vmatprep.subr.mxu0 0.0
        %742 = vmatpush1.msra.mxu0 %v349
        %743 = vmatprep.subr.mxu0 0.0
        %744 = vmatpush1.msra.mxu0 %v348
        %745 = vmatprep.subr.mxu0 0.0
        %746 = vmatpush1.msra.mxu0 %v347
        %747 = vmatprep.subr.mxu0 0.0
        %748 = vmatpush1.msra.mxu0 %v346
        %749 = vmatprep.subr.mxu0 0.0
        %750 = vmatpush2.msra.mxu0 %v377
        %751 = vmatprep.subr.mxu0 0.0
        %752 = vmatpush2.msra.mxu0 %v376
        %753 = vmatprep.subr.mxu0 0.0
        %754 = vmatpush2.msra.mxu0 %v375
        %755 = vmatprep.subr.mxu0 0.0
        %756 = vmatpush2.msra.mxu0 %v374
        %757 = vmatprep.subr.mxu0 0.0
        %758 = vmatpush2.msra.mxu0 %v373
        %759 = vmatprep.subr.mxu0 0.0
        %760 = vmatpush2.msra.mxu0 %v372
        %761 = vmatprep.subr.mxu0 0.0
        %762 = vmatpush2.msra.mxu0 %v371
        %763 = vmatprep.subr.mxu0 0.0
        %764 = vmatpush2.msra.mxu0 %v370
        %765 = vmatprep.subr.mxu0 0.0
        %766 = vmatpush2.msra.mxu0 %v369
        %767 = vmatprep.subr.mxu0 0.0
        %768 = vmatpush2.msra.mxu0 %v368
        %769 = vmatprep.subr.mxu0 0.0
        %770 = vmatpush2.msra.mxu0 %v367
        %771 = vmatprep.subr.mxu0 0.0
        %772 = vmatpush2.msra.mxu0 %v366
        %773 = vmatprep.subr.mxu0 0.0
        %774 = vmatpush2.msra.mxu0 %v365
        %775 = vmatprep.subr.mxu0 0.0
        %776 = vmatpush2.msra.mxu0 %v364
        %777 = vmatprep.subr.mxu0 0.0
        %778 = vmatpush2.msra.mxu0 %v363
        %779 = vmatprep.subr.mxu0 0.0
        %780 = vmatpush2.msra.mxu0 %v362
        %781 = vmatprep.mubr.f32.mxu0 %v309
        %782 = vmatmul.mubr.f32.gmra.mxu0 %v308
        %v783 = vpop.f32.mrf.mxu0
        %v784 = vadd.f32 %v709, %v783
        %v785 = vpop.f32.mrf.mxu0
        %786 = vmatprep.mubr.f32.mxu0 %v313
        %787 = vmatmul.mubr.f32.gmra.mxu0 %v312
        %v788 = vpop.f32.mrf.mxu0
        %v789 = vadd.f32 %v714, %v788
        %v790 = vpop.f32.mrf.mxu0
        %791 = vdwg.mxu0
        %v792 = vld [vmem:[#allocation2] sm:$0xfc]
        %v793 = vld [vmem:[#allocation2 + $0x8] sm:$0xfc]
        %v794 = vld [vmem:[#allocation2 + $0x10] sm:$0xfc]
        %v795 = vld [vmem:[#allocation2 + $0x18] sm:$0xfc]
        %v796 = vld [vmem:[#allocation2 + $0x40] sm:$0x3]
        %v797 = vld [vmem:[#allocation2 + $0x48] sm:$0x3]
        %v798 = vld [vmem:[#allocation2 + $0x50] sm:$0x3]
        %v799 = vld [vmem:[#allocation2 + $0x58] sm:$0x3]
        %s800 = scalar_lea.vmem [#allocation3], 1024
        %v801 = vld [vmem:[%s800] sm:$0xff]
        %v802 = vld [vmem:[%s800 + $0x8] sm:$0xff]
        %v803 = vld [vmem:[%s800 + $0x10] sm:$0xff]
        %v804 = vld [vmem:[%s800 + $0x18] sm:$0xff]
        %v805 = vld [vmem:[%s800 + $0x20] sm:$0xff]
        %v806 = vld [vmem:[%s800 + $0x28] sm:$0xff]
        %v807 = vld [vmem:[%s800 + $0x30] sm:$0xff]
        %v808 = vld [vmem:[%s800 + $0x38] sm:$0xff]
        %v809 = vld [vmem:[%s800 + $0x40] sm:$0xff]
        %v810 = vld [vmem:[%s800 + $0x48] sm:$0xff]
        %v811 = vld [vmem:[%s800 + $0x50] sm:$0xff]
        %v812 = vld [vmem:[%s800 + $0x58] sm:$0xff]
        %v813 = vld [vmem:[%s800 + $0x60] sm:$0xff]
        %v814 = vld [vmem:[%s800 + $0x68] sm:$0xff]
        %v815 = vld [vmem:[%s800 + $0x70] sm:$0xff]
        %v816 = vld [vmem:[%s800 + $0x78] sm:$0xff]
        %v817 = vld [vmem:[%s800 + $0x80] sm:$0xff]
        %v818 = vld [vmem:[%s800 + $0x88] sm:$0xff]
        %v819 = vld [vmem:[%s800 + $0x90] sm:$0xff]
        %v820 = vld [vmem:[%s800 + $0x98] sm:$0xff]
        %v821 = vld [vmem:[%s800 + $0xa0] sm:$0xff]
        %v822 = vld [vmem:[%s800 + $0xa8] sm:$0xff]
        %v823 = vld [vmem:[%s800 + $0xb0] sm:$0xff]
        %v824 = vld [vmem:[%s800 + $0xb8] sm:$0xff]
        %v825 = vld [vmem:[%s800 + $0xc0] sm:$0xff]
        %v826 = vld [vmem:[%s800 + $0xc8] sm:$0xff]
        %v827 = vld [vmem:[%s800 + $0xd0] sm:$0xff]
        %v828 = vld [vmem:[%s800 + $0xd8] sm:$0xff]
        %v829 = vld [vmem:[%s800 + $0xe0] sm:$0xff]
        %v830 = vld [vmem:[%s800 + $0xe8] sm:$0xff]
        %v831 = vld [vmem:[%s800 + $0xf0] sm:$0xff]
        %v832 = vld [vmem:[%s800 + $0xf8] sm:$0xff]
        %v833 = vld [vmem:[%s800 + $0x100] sm:$0xff]
        %v834 = vld [vmem:[%s800 + $0x108] sm:$0xff]
        %v835 = vld [vmem:[%s800 + $0x110] sm:$0xff]
        %v836 = vld [vmem:[%s800 + $0x118] sm:$0xff]
        %v837 = vld [vmem:[%s800 + $0x120] sm:$0xff]
        %v838 = vld [vmem:[%s800 + $0x128] sm:$0xff]
        %v839 = vld [vmem:[%s800 + $0x130] sm:$0xff]
        %v840 = vld [vmem:[%s800 + $0x138] sm:$0xff]
        %v841 = vld [vmem:[%s800 + $0x140] sm:$0xff]
        %v842 = vld [vmem:[%s800 + $0x148] sm:$0xff]
        %v843 = vld [vmem:[%s800 + $0x150] sm:$0xff]
        %v844 = vld [vmem:[%s800 + $0x158] sm:$0xff]
        %v845 = vld [vmem:[%s800 + $0x160] sm:$0xff]
        %v846 = vld [vmem:[%s800 + $0x168] sm:$0xff]
        %v847 = vld [vmem:[%s800 + $0x170] sm:$0xff]
        %v848 = vld [vmem:[%s800 + $0x178] sm:$0xff]
        %v849 = vld [vmem:[%s800 + $0x180] sm:$0xff]
        %v850 = vld [vmem:[%s800 + $0x188] sm:$0xff]
        %v851 = vld [vmem:[%s800 + $0x190] sm:$0xff]
        %v852 = vld [vmem:[%s800 + $0x198] sm:$0xff]
        %v853 = vld [vmem:[%s800 + $0x1a0] sm:$0xff]
        %v854 = vld [vmem:[%s800 + $0x1a8] sm:$0xff]
        %v855 = vld [vmem:[%s800 + $0x1b0] sm:$0xff]
        %v856 = vld [vmem:[%s800 + $0x1b8] sm:$0xff]
        %v857 = vld [vmem:[%s800 + $0x1c0] sm:$0xff]
        %v858 = vld [vmem:[%s800 + $0x1c8] sm:$0xff]
        %v859 = vld [vmem:[%s800 + $0x1d0] sm:$0xff]
        %v860 = vld [vmem:[%s800 + $0x1d8] sm:$0xff]
        %v861 = vld [vmem:[%s800 + $0x1e0] sm:$0xff]
        %v862 = vld [vmem:[%s800 + $0x1e8] sm:$0xff]
        %v863 = vld [vmem:[%s800 + $0x1f0] sm:$0xff]
        %v864 = vld [vmem:[%s800 + $0x1f8] sm:$0xff]
        %vm873 = vcmask 1045504
        %v874 = vrot.slane %v792, 2
        %v875 = vrot.slane %v310, 2
        %v876 = vsel %vm873, %v874, %v875
        %v877 = vrot.slane %v793, 2
        %v878 = vrot.slane %v311, 2
        %v879 = vsel %vm873, %v877, %v878
        %v880 = vrot.slane %v794, 2
        %v881 = vrot.slane %v312, 2
        %v882 = vsel %vm873, %v880, %v881
        %v883 = vrot.slane %v795, 2
        %v884 = vrot.slane %v313, 2
        %v885 = vsel %vm873, %v883, %v884
        %v886 = vrot.slane %v796, 2
        %v887 = vsel %vm873, %v875, %v886
        %v888 = vrot.slane %v797, 2
        %v889 = vsel %vm873, %v878, %v888
        %v890 = vrot.slane %v798, 2
        %v891 = vsel %vm873, %v881, %v890
        %v892 = vrot.slane %v799, 2
        %v893 = vsel %vm873, %v884, %v892
        %902 = vmatprep.subr.mxu0 0.0
        %903 = vmatpush1.msra.mxu0 %v816
        %904 = vmatprep.subr.mxu0 0.0
        %905 = vmatpush1.msra.mxu0 %v815
        %906 = vmatprep.subr.mxu0 0.0
        %907 = vmatpush1.msra.mxu0 %v814
        %908 = vmatprep.subr.mxu0 0.0
        %909 = vmatpush1.msra.mxu0 %v813
        %910 = vmatprep.subr.mxu0 0.0
        %911 = vmatpush1.msra.mxu0 %v812
        %912 = vmatprep.subr.mxu0 0.0
        %913 = vmatpush1.msra.mxu0 %v811
        %914 = vmatprep.subr.mxu0 0.0
        %915 = vmatpush1.msra.mxu0 %v810
        %916 = vmatprep.subr.mxu0 0.0
        %917 = vmatpush1.msra.mxu0 %v809
        %918 = vmatprep.subr.mxu0 0.0
        %919 = vmatpush1.msra.mxu0 %v808
        %920 = vmatprep.subr.mxu0 0.0
        %921 = vmatpush1.msra.mxu0 %v807
        %922 = vmatprep.subr.mxu0 0.0
        %923 = vmatpush1.msra.mxu0 %v806
        %924 = vmatprep.subr.mxu0 0.0
        %925 = vmatpush1.msra.mxu0 %v805
        %926 = vmatprep.subr.mxu0 0.0
        %927 = vmatpush1.msra.mxu0 %v804
        %928 = vmatprep.subr.mxu0 0.0
        %929 = vmatpush1.msra.mxu0 %v803
        %930 = vmatprep.subr.mxu0 0.0
        %931 = vmatpush1.msra.mxu0 %v802
        %932 = vmatprep.subr.mxu0 0.0
        %933 = vmatpush1.msra.mxu0 %v801
        %934 = vmatprep.subr.mxu0 0.0
        %935 = vmatpush2.msra.mxu0 %v832
        %936 = vmatprep.subr.mxu0 0.0
        %937 = vmatpush2.msra.mxu0 %v831
        %938 = vmatprep.subr.mxu0 0.0
        %939 = vmatpush2.msra.mxu0 %v830
        %940 = vmatprep.subr.mxu0 0.0
        %941 = vmatpush2.msra.mxu0 %v829
        %942 = vmatprep.subr.mxu0 0.0
        %943 = vmatpush2.msra.mxu0 %v828
        %944 = vmatprep.subr.mxu0 0.0
        %945 = vmatpush2.msra.mxu0 %v827
        %946 = vmatprep.subr.mxu0 0.0
        %947 = vmatpush2.msra.mxu0 %v826
        %948 = vmatprep.subr.mxu0 0.0
        %949 = vmatpush2.msra.mxu0 %v825
        %950 = vmatprep.subr.mxu0 0.0
        %951 = vmatpush2.msra.mxu0 %v824
        %952 = vmatprep.subr.mxu0 0.0
        %953 = vmatpush2.msra.mxu0 %v823
        %954 = vmatprep.subr.mxu0 0.0
        %955 = vmatpush2.msra.mxu0 %v822
        %956 = vmatprep.subr.mxu0 0.0
        %957 = vmatpush2.msra.mxu0 %v821
        %958 = vmatprep.subr.mxu0 0.0
        %959 = vmatpush2.msra.mxu0 %v820
        %960 = vmatprep.subr.mxu0 0.0
        %961 = vmatpush2.msra.mxu0 %v819
        %962 = vmatprep.subr.mxu0 0.0
        %963 = vmatpush2.msra.mxu0 %v818
        %964 = vmatprep.subr.mxu0 0.0
        %965 = vmatpush2.msra.mxu0 %v817
        %966 = vmatprep.mubr.f32.mxu0 %v879
        %967 = vmatmul.mubr.f32.gmra.mxu0 %v876
        %v968 = vpop.f32.mrf.mxu0
        %v969 = vadd.f32 0.0, %v968
        %v970 = vpop.f32.mrf.mxu0
        %971 = vmatprep.mubr.f32.mxu0 %v889
        %972 = vmatmul.mubr.f32.gmra.mxu0 %v887
        %v973 = vpop.f32.mrf.mxu0
        %v974 = vadd.f32 0.0, %v973
        %v975 = vpop.f32.mrf.mxu0
        %976 = vdwg.mxu0
        %977 = vmatprep.subr.mxu0 0.0
        %978 = vmatpush1.msra.mxu0 %v848
        %979 = vmatprep.subr.mxu0 0.0
        %980 = vmatpush1.msra.mxu0 %v847
        %981 = vmatprep.subr.mxu0 0.0
        %982 = vmatpush1.msra.mxu0 %v846
        %983 = vmatprep.subr.mxu0 0.0
        %984 = vmatpush1.msra.mxu0 %v845
        %985 = vmatprep.subr.mxu0 0.0
        %986 = vmatpush1.msra.mxu0 %v844
        %987 = vmatprep.subr.mxu0 0.0
        %988 = vmatpush1.msra.mxu0 %v843
        %989 = vmatprep.subr.mxu0 0.0
        %990 = vmatpush1.msra.mxu0 %v842
        %991 = vmatprep.subr.mxu0 0.0
        %992 = vmatpush1.msra.mxu0 %v841
        %993 = vmatprep.subr.mxu0 0.0
        %994 = vmatpush1.msra.mxu0 %v840
        %995 = vmatprep.subr.mxu0 0.0
        %996 = vmatpush1.msra.mxu0 %v839
        %997 = vmatprep.subr.mxu0 0.0
        %998 = vmatpush1.msra.mxu0 %v838
        %999 = vmatprep.subr.mxu0 0.0
        %1000 = vmatpush1.msra.mxu0 %v837
        %1001 = vmatprep.subr.mxu0 0.0
        %1002 = vmatpush1.msra.mxu0 %v836
        %1003 = vmatprep.subr.mxu0 0.0
        %1004 = vmatpush1.msra.mxu0 %v835
        %1005 = vmatprep.subr.mxu0 0.0
        %1006 = vmatpush1.msra.mxu0 %v834
        %1007 = vmatprep.subr.mxu0 0.0
        %1008 = vmatpush1.msra.mxu0 %v833
        %1009 = vmatprep.subr.mxu0 0.0
        %1010 = vmatpush2.msra.mxu0 %v864
        %1011 = vmatprep.subr.mxu0 0.0
        %1012 = vmatpush2.msra.mxu0 %v863
        %1013 = vmatprep.subr.mxu0 0.0
        %1014 = vmatpush2.msra.mxu0 %v862
        %1015 = vmatprep.subr.mxu0 0.0
        %1016 = vmatpush2.msra.mxu0 %v861
        %1017 = vmatprep.subr.mxu0 0.0
        %1018 = vmatpush2.msra.mxu0 %v860
        %1019 = vmatprep.subr.mxu0 0.0
        %1020 = vmatpush2.msra.mxu0 %v859
        %1021 = vmatprep.subr.mxu0 0.0
        %1022 = vmatpush2.msra.mxu0 %v858
        %1023 = vmatprep.subr.mxu0 0.0
        %1024 = vmatpush2.msra.mxu0 %v857
        %1025 = vmatprep.subr.mxu0 0.0
        %1026 = vmatpush2.msra.mxu0 %v856
        %1027 = vmatprep.subr.mxu0 0.0
        %1028 = vmatpush2.msra.mxu0 %v855
        %1029 = vmatprep.subr.mxu0 0.0
        %1030 = vmatpush2.msra.mxu0 %v854
        %1031 = vmatprep.subr.mxu0 0.0
        %1032 = vmatpush2.msra.mxu0 %v853
        %1033 = vmatprep.subr.mxu0 0.0
        %1034 = vmatpush2.msra.mxu0 %v852
        %1035 = vmatprep.subr.mxu0 0.0
        %1036 = vmatpush2.msra.mxu0 %v851
        %1037 = vmatprep.subr.mxu0 0.0
        %1038 = vmatpush2.msra.mxu0 %v850
        %1039 = vmatprep.subr.mxu0 0.0
        %1040 = vmatpush2.msra.mxu0 %v849
        %1041 = vmatprep.mubr.f32.mxu0 %v885
        %1042 = vmatmul.mubr.f32.gmra.mxu0 %v882
        %v1043 = vpop.f32.mrf.mxu0
        %v1044 = vadd.f32 %v969, %v1043
        %v1045 = vpop.f32.mrf.mxu0
        %1046 = vmatprep.mubr.f32.mxu0 %v893
        %1047 = vmatmul.mubr.f32.gmra.mxu0 %v891
        %v1048 = vpop.f32.mrf.mxu0
        %v1049 = vadd.f32 %v974, %v1048
        %v1050 = vpop.f32.mrf.mxu0
        %1051 = vdwg.mxu0
        %v1052 = vadd.f32 %v784, %v1044
        %v1053 = vadd.f32 %v789, %v1049
        %v1054 = vld [vmem:[#allocation5] sm:$0x1]
        %v1056 = vlaneseq
        %v1057 = vshrl.u32 %v1056, 7
        %v1058 = vsub.s32 0, %v1057
        %v1059 = vrot.slane %v1054, %v1058
        %v1061 = vadd.f32 %v1052, %v1059
        %v1062 = vadd.f32 %v1053, %v1059
        %v1063 = vmax.f32 %v1061, 0.0
        %v1064 = vmax.f32 %v1062, 0.0
        %vm1067 = vcmask 1040384
        %v1068 = vrot.slane %v1063, 7
        %v1069 = vrot.slane %v1064, 7
        %v1070 = vsel %vm1067, %v1068, %v1069
        %1074 = vst [vmem:[#allocation2 + $0x8] sm:$0xfe] %v1068
        %1075 = vst [vmem:[#allocation2 + $0x28] sm:$0xff] %v1070
        %1076 = vst [vmem:[#allocation2 + $0x48] sm:$0x1] %v1069
        %v1077 = vld [vmem:[#allocation2] sm:$0xff]
        %v1078 = vld [vmem:[#allocation2 + $0x8] sm:$0xff]
        %v1079 = vld [vmem:[#allocation2 + $0x10] sm:$0xff]
        %v1080 = vld [vmem:[#allocation2 + $0x18] sm:$0xff]
        %v1081 = vld [vmem:[#allocation2 + $0x20] sm:$0xff]
        %v1082 = vld [vmem:[#allocation2 + $0x28] sm:$0xff]
        %v1083 = vld [vmem:[#allocation2 + $0x30] sm:$0xff]
        %v1084 = vld [vmem:[#allocation2 + $0x38] sm:$0xff]
        %s1085 = scalar_lea.vmem [#allocation3], 1536
        %v1086 = vld [vmem:[%s1085] sm:$0xff]
        %v1087 = vld [vmem:[%s1085 + $0x8] sm:$0xff]
        %v1088 = vld [vmem:[%s1085 + $0x10] sm:$0xff]
        %v1089 = vld [vmem:[%s1085 + $0x18] sm:$0xff]
        %v1090 = vld [vmem:[%s1085 + $0x20] sm:$0xff]
        %v1091 = vld [vmem:[%s1085 + $0x28] sm:$0xff]
        %v1092 = vld [vmem:[%s1085 + $0x30] sm:$0xff]
        %v1093 = vld [vmem:[%s1085 + $0x38] sm:$0xff]
        %v1094 = vld [vmem:[%s1085 + $0x40] sm:$0xff]
        %v1095 = vld [vmem:[%s1085 + $0x48] sm:$0xff]
        %v1096 = vld [vmem:[%s1085 + $0x50] sm:$0xff]
        %v1097 = vld [vmem:[%s1085 + $0x58] sm:$0xff]
        %v1098 = vld [vmem:[%s1085 + $0x60] sm:$0xff]
        %v1099 = vld [vmem:[%s1085 + $0x68] sm:$0xff]
        %v1100 = vld [vmem:[%s1085 + $0x70] sm:$0xff]
        %v1101 = vld [vmem:[%s1085 + $0x78] sm:$0xff]
        %v1102 = vld [vmem:[%s1085 + $0x80] sm:$0xff]
        %v1103 = vld [vmem:[%s1085 + $0x88] sm:$0xff]
        %v1104 = vld [vmem:[%s1085 + $0x90] sm:$0xff]
        %v1105 = vld [vmem:[%s1085 + $0x98] sm:$0xff]
        %v1106 = vld [vmem:[%s1085 + $0xa0] sm:$0xff]
        %v1107 = vld [vmem:[%s1085 + $0xa8] sm:$0xff]
        %v1108 = vld [vmem:[%s1085 + $0xb0] sm:$0xff]
        %v1109 = vld [vmem:[%s1085 + $0xb8] sm:$0xff]
        %v1110 = vld [vmem:[%s1085 + $0xc0] sm:$0xff]
        %v1111 = vld [vmem:[%s1085 + $0xc8] sm:$0xff]
        %v1112 = vld [vmem:[%s1085 + $0xd0] sm:$0xff]
        %v1113 = vld [vmem:[%s1085 + $0xd8] sm:$0xff]
        %v1114 = vld [vmem:[%s1085 + $0xe0] sm:$0xff]
        %v1115 = vld [vmem:[%s1085 + $0xe8] sm:$0xff]
        %v1116 = vld [vmem:[%s1085 + $0xf0] sm:$0xff]
        %v1117 = vld [vmem:[%s1085 + $0xf8] sm:$0xff]
        %v1118 = vld [vmem:[%s1085 + $0x100] sm:$0xff]
        %v1119 = vld [vmem:[%s1085 + $0x108] sm:$0xff]
        %v1120 = vld [vmem:[%s1085 + $0x110] sm:$0xff]
        %v1121 = vld [vmem:[%s1085 + $0x118] sm:$0xff]
        %v1122 = vld [vmem:[%s1085 + $0x120] sm:$0xff]
        %v1123 = vld [vmem:[%s1085 + $0x128] sm:$0xff]
        %v1124 = vld [vmem:[%s1085 + $0x130] sm:$0xff]
        %v1125 = vld [vmem:[%s1085 + $0x138] sm:$0xff]
        %v1126 = vld [vmem:[%s1085 + $0x140] sm:$0xff]
        %v1127 = vld [vmem:[%s1085 + $0x148] sm:$0xff]
        %v1128 = vld [vmem:[%s1085 + $0x150] sm:$0xff]
        %v1129 = vld [vmem:[%s1085 + $0x158] sm:$0xff]
        %v1130 = vld [vmem:[%s1085 + $0x160] sm:$0xff]
        %v1131 = vld [vmem:[%s1085 + $0x168] sm:$0xff]
        %v1132 = vld [vmem:[%s1085 + $0x170] sm:$0xff]
        %v1133 = vld [vmem:[%s1085 + $0x178] sm:$0xff]
        %v1134 = vld [vmem:[%s1085 + $0x180] sm:$0xff]
        %v1135 = vld [vmem:[%s1085 + $0x188] sm:$0xff]
        %v1136 = vld [vmem:[%s1085 + $0x190] sm:$0xff]
        %v1137 = vld [vmem:[%s1085 + $0x198] sm:$0xff]
        %v1138 = vld [vmem:[%s1085 + $0x1a0] sm:$0xff]
        %v1139 = vld [vmem:[%s1085 + $0x1a8] sm:$0xff]
        %v1140 = vld [vmem:[%s1085 + $0x1b0] sm:$0xff]
        %v1141 = vld [vmem:[%s1085 + $0x1b8] sm:$0xff]
        %v1142 = vld [vmem:[%s1085 + $0x1c0] sm:$0xff]
        %v1143 = vld [vmem:[%s1085 + $0x1c8] sm:$0xff]
        %v1144 = vld [vmem:[%s1085 + $0x1d0] sm:$0xff]
        %v1145 = vld [vmem:[%s1085 + $0x1d8] sm:$0xff]
        %v1146 = vld [vmem:[%s1085 + $0x1e0] sm:$0xff]
        %v1147 = vld [vmem:[%s1085 + $0x1e8] sm:$0xff]
        %v1148 = vld [vmem:[%s1085 + $0x1f0] sm:$0xff]
        %v1149 = vld [vmem:[%s1085 + $0x1f8] sm:$0xff]
        %v1150 = vld [vmem:[#allocation2] sm:$0xfe]
        %v1151 = vld [vmem:[#allocation2 + $0x8] sm:$0xfe]
        %v1152 = vld [vmem:[#allocation2 + $0x10] sm:$0xfe]
        %v1153 = vld [vmem:[#allocation2 + $0x18] sm:$0xfe]
        %v1154 = vld [vmem:[#allocation2 + $0x40] sm:$0x1]
        %v1155 = vld [vmem:[#allocation2 + $0x48] sm:$0x1]
        %v1156 = vld [vmem:[#allocation2 + $0x50] sm:$0x1]
        %v1157 = vld [vmem:[#allocation2 + $0x58] sm:$0x1]
        %s1158 = scalar_lea.vmem [#allocation3], 2048
        %v1159 = vld [vmem:[%s1158] sm:$0xff]
        %v1160 = vld [vmem:[%s1158 + $0x8] sm:$0xff]
        %v1161 = vld [vmem:[%s1158 + $0x10] sm:$0xff]
        %v1162 = vld [vmem:[%s1158 + $0x18] sm:$0xff]
        %v1163 = vld [vmem:[%s1158 + $0x20] sm:$0xff]
        %v1164 = vld [vmem:[%s1158 + $0x28] sm:$0xff]
        %v1165 = vld [vmem:[%s1158 + $0x30] sm:$0xff]
        %v1166 = vld [vmem:[%s1158 + $0x38] sm:$0xff]
        %v1167 = vld [vmem:[%s1158 + $0x40] sm:$0xff]
        %v1168 = vld [vmem:[%s1158 + $0x48] sm:$0xff]
        %v1169 = vld [vmem:[%s1158 + $0x50] sm:$0xff]
        %v1170 = vld [vmem:[%s1158 + $0x58] sm:$0xff]
        %v1171 = vld [vmem:[%s1158 + $0x60] sm:$0xff]
        %v1172 = vld [vmem:[%s1158 + $0x68] sm:$0xff]
        %v1173 = vld [vmem:[%s1158 + $0x70] sm:$0xff]
        %v1174 = vld [vmem:[%s1158 + $0x78] sm:$0xff]
        %v1175 = vld [vmem:[%s1158 + $0x80] sm:$0xff]
        %v1176 = vld [vmem:[%s1158 + $0x88] sm:$0xff]
        %v1177 = vld [vmem:[%s1158 + $0x90] sm:$0xff]
        %v1178 = vld [vmem:[%s1158 + $0x98] sm:$0xff]
        %v1179 = vld [vmem:[%s1158 + $0xa0] sm:$0xff]
        %v1180 = vld [vmem:[%s1158 + $0xa8] sm:$0xff]
        %v1181 = vld [vmem:[%s1158 + $0xb0] sm:$0xff]
        %v1182 = vld [vmem:[%s1158 + $0xb8] sm:$0xff]
        %v1183 = vld [vmem:[%s1158 + $0xc0] sm:$0xff]
        %v1184 = vld [vmem:[%s1158 + $0xc8] sm:$0xff]
        %v1185 = vld [vmem:[%s1158 + $0xd0] sm:$0xff]
        %v1186 = vld [vmem:[%s1158 + $0xd8] sm:$0xff]
        %v1187 = vld [vmem:[%s1158 + $0xe0] sm:$0xff]
        %v1188 = vld [vmem:[%s1158 + $0xe8] sm:$0xff]
        %v1189 = vld [vmem:[%s1158 + $0xf0] sm:$0xff]
        %v1190 = vld [vmem:[%s1158 + $0xf8] sm:$0xff]
        %v1191 = vld [vmem:[%s1158 + $0x100] sm:$0xff]
        %v1192 = vld [vmem:[%s1158 + $0x108] sm:$0xff]
        %v1193 = vld [vmem:[%s1158 + $0x110] sm:$0xff]
        %v1194 = vld [vmem:[%s1158 + $0x118] sm:$0xff]
        %v1195 = vld [vmem:[%s1158 + $0x120] sm:$0xff]
        %v1196 = vld [vmem:[%s1158 + $0x128] sm:$0xff]
        %v1197 = vld [vmem:[%s1158 + $0x130] sm:$0xff]
        %v1198 = vld [vmem:[%s1158 + $0x138] sm:$0xff]
        %v1199 = vld [vmem:[%s1158 + $0x140] sm:$0xff]
        %v1200 = vld [vmem:[%s1158 + $0x148] sm:$0xff]
        %v1201 = vld [vmem:[%s1158 + $0x150] sm:$0xff]
        %v1202 = vld [vmem:[%s1158 + $0x158] sm:$0xff]
        %v1203 = vld [vmem:[%s1158 + $0x160] sm:$0xff]
        %v1204 = vld [vmem:[%s1158 + $0x168] sm:$0xff]
        %v1205 = vld [vmem:[%s1158 + $0x170] sm:$0xff]
        %v1206 = vld [vmem:[%s1158 + $0x178] sm:$0xff]
        %v1207 = vld [vmem:[%s1158 + $0x180] sm:$0xff]
        %v1208 = vld [vmem:[%s1158 + $0x188] sm:$0xff]
        %v1209 = vld [vmem:[%s1158 + $0x190] sm:$0xff]
        %v1210 = vld [vmem:[%s1158 + $0x198] sm:$0xff]
        %v1211 = vld [vmem:[%s1158 + $0x1a0] sm:$0xff]
        %v1212 = vld [vmem:[%s1158 + $0x1a8] sm:$0xff]
        %v1213 = vld [vmem:[%s1158 + $0x1b0] sm:$0xff]
        %v1214 = vld [vmem:[%s1158 + $0x1b8] sm:$0xff]
        %v1215 = vld [vmem:[%s1158 + $0x1c0] sm:$0xff]
        %v1216 = vld [vmem:[%s1158 + $0x1c8] sm:$0xff]
        %v1217 = vld [vmem:[%s1158 + $0x1d0] sm:$0xff]
        %v1218 = vld [vmem:[%s1158 + $0x1d8] sm:$0xff]
        %v1219 = vld [vmem:[%s1158 + $0x1e0] sm:$0xff]
        %v1220 = vld [vmem:[%s1158 + $0x1e8] sm:$0xff]
        %v1221 = vld [vmem:[%s1158 + $0x1f0] sm:$0xff]
        %v1222 = vld [vmem:[%s1158 + $0x1f8] sm:$0xff]
        %v1235 = vrot.slane %v1150, 1
        %v1236 = vrot.slane %v1081, 1
        %v1237 = vsel %vm463, %v1235, %v1236
        %v1238 = vrot.slane %v1151, 1
        %v1239 = vrot.slane %v1082, 1
        %v1240 = vsel %vm463, %v1238, %v1239
        %v1241 = vrot.slane %v1152, 1
        %v1242 = vrot.slane %v1083, 1
        %v1243 = vsel %vm463, %v1241, %v1242
        %v1244 = vrot.slane %v1153, 1
        %v1245 = vrot.slane %v1084, 1
        %v1246 = vsel %vm463, %v1244, %v1245
        %v1247 = vrot.slane %v1154, 1
        %v1248 = vsel %vm463, %v1236, %v1247
        %v1249 = vrot.slane %v1155, 1
        %v1250 = vsel %vm463, %v1239, %v1249
        %v1251 = vrot.slane %v1156, 1
        %v1252 = vsel %vm463, %v1242, %v1251
        %v1253 = vrot.slane %v1157, 1
        %v1254 = vsel %vm463, %v1245, %v1253
        %1263 = vmatprep.subr.mxu0 0.0
        %1264 = vmatpush1.msra.mxu0 %v1174
        %1265 = vmatprep.subr.mxu0 0.0
        %1266 = vmatpush1.msra.mxu0 %v1173
        %1267 = vmatprep.subr.mxu0 0.0
        %1268 = vmatpush1.msra.mxu0 %v1172
        %1269 = vmatprep.subr.mxu0 0.0
        %1270 = vmatpush1.msra.mxu0 %v1171
        %1271 = vmatprep.subr.mxu0 0.0
        %1272 = vmatpush1.msra.mxu0 %v1170
        %1273 = vmatprep.subr.mxu0 0.0
        %1274 = vmatpush1.msra.mxu0 %v1169
        %1275 = vmatprep.subr.mxu0 0.0
        %1276 = vmatpush1.msra.mxu0 %v1168
        %1277 = vmatprep.subr.mxu0 0.0
        %1278 = vmatpush1.msra.mxu0 %v1167
        %1279 = vmatprep.subr.mxu0 0.0
        %1280 = vmatpush1.msra.mxu0 %v1166
        %1281 = vmatprep.subr.mxu0 0.0
        %1282 = vmatpush1.msra.mxu0 %v1165
        %1283 = vmatprep.subr.mxu0 0.0
        %1284 = vmatpush1.msra.mxu0 %v1164
        %1285 = vmatprep.subr.mxu0 0.0
        %1286 = vmatpush1.msra.mxu0 %v1163
        %1287 = vmatprep.subr.mxu0 0.0
        %1288 = vmatpush1.msra.mxu0 %v1162
        %1289 = vmatprep.subr.mxu0 0.0
        %1290 = vmatpush1.msra.mxu0 %v1161
        %1291 = vmatprep.subr.mxu0 0.0
        %1292 = vmatpush1.msra.mxu0 %v1160
        %1293 = vmatprep.subr.mxu0 0.0
        %1294 = vmatpush1.msra.mxu0 %v1159
        %1295 = vmatprep.subr.mxu0 0.0
        %1296 = vmatpush2.msra.mxu0 %v1190
        %1297 = vmatprep.subr.mxu0 0.0
        %1298 = vmatpush2.msra.mxu0 %v1189
        %1299 = vmatprep.subr.mxu0 0.0
        %1300 = vmatpush2.msra.mxu0 %v1188
        %1301 = vmatprep.subr.mxu0 0.0
        %1302 = vmatpush2.msra.mxu0 %v1187
        %1303 = vmatprep.subr.mxu0 0.0
        %1304 = vmatpush2.msra.mxu0 %v1186
        %1305 = vmatprep.subr.mxu0 0.0
        %1306 = vmatpush2.msra.mxu0 %v1185
        %1307 = vmatprep.subr.mxu0 0.0
        %1308 = vmatpush2.msra.mxu0 %v1184
        %1309 = vmatprep.subr.mxu0 0.0
        %1310 = vmatpush2.msra.mxu0 %v1183
        %1311 = vmatprep.subr.mxu0 0.0
        %1312 = vmatpush2.msra.mxu0 %v1182
        %1313 = vmatprep.subr.mxu0 0.0
        %1314 = vmatpush2.msra.mxu0 %v1181
        %1315 = vmatprep.subr.mxu0 0.0
        %1316 = vmatpush2.msra.mxu0 %v1180
        %1317 = vmatprep.subr.mxu0 0.0
        %1318 = vmatpush2.msra.mxu0 %v1179
        %1319 = vmatprep.subr.mxu0 0.0
        %1320 = vmatpush2.msra.mxu0 %v1178
        %1321 = vmatprep.subr.mxu0 0.0
        %1322 = vmatpush2.msra.mxu0 %v1177
        %1323 = vmatprep.subr.mxu0 0.0
        %1324 = vmatpush2.msra.mxu0 %v1176
        %1325 = vmatprep.subr.mxu0 0.0
        %1326 = vmatpush2.msra.mxu0 %v1175
        %1327 = vmatprep.mubr.f32.mxu0 %v1240
        %1328 = vmatmul.mubr.f32.gmra.mxu0 %v1237
        %v1329 = vpop.f32.mrf.mxu0
        %v1330 = vadd.f32 0.0, %v1329
        %v1331 = vpop.f32.mrf.mxu0
        %1332 = vmatprep.mubr.f32.mxu0 %v1250
        %1333 = vmatmul.mubr.f32.gmra.mxu0 %v1248
        %v1334 = vpop.f32.mrf.mxu0
        %v1335 = vadd.f32 0.0, %v1334
        %v1336 = vpop.f32.mrf.mxu0
        %1337 = vdwg.mxu0
        %1338 = vmatprep.subr.mxu0 0.0
        %1339 = vmatpush1.msra.mxu0 %v1206
        %1340 = vmatprep.subr.mxu0 0.0
        %1341 = vmatpush1.msra.mxu0 %v1205
        %1342 = vmatprep.subr.mxu0 0.0
        %1343 = vmatpush1.msra.mxu0 %v1204
        %1344 = vmatprep.subr.mxu0 0.0
        %1345 = vmatpush1.msra.mxu0 %v1203
        %1346 = vmatprep.subr.mxu0 0.0
        %1347 = vmatpush1.msra.mxu0 %v1202
        %1348 = vmatprep.subr.mxu0 0.0
        %1349 = vmatpush1.msra.mxu0 %v1201
        %1350 = vmatprep.subr.mxu0 0.0
        %1351 = vmatpush1.msra.mxu0 %v1200
        %1352 = vmatprep.subr.mxu0 0.0
        %1353 = vmatpush1.msra.mxu0 %v1199
        %1354 = vmatprep.subr.mxu0 0.0
        %1355 = vmatpush1.msra.mxu0 %v1198
        %1356 = vmatprep.subr.mxu0 0.0
        %1357 = vmatpush1.msra.mxu0 %v1197
        %1358 = vmatprep.subr.mxu0 0.0
        %1359 = vmatpush1.msra.mxu0 %v1196
        %1360 = vmatprep.subr.mxu0 0.0
        %1361 = vmatpush1.msra.mxu0 %v1195
        %1362 = vmatprep.subr.mxu0 0.0
        %1363 = vmatpush1.msra.mxu0 %v1194
        %1364 = vmatprep.subr.mxu0 0.0
        %1365 = vmatpush1.msra.mxu0 %v1193
        %1366 = vmatprep.subr.mxu0 0.0
        %1367 = vmatpush1.msra.mxu0 %v1192
        %1368 = vmatprep.subr.mxu0 0.0
        %1369 = vmatpush1.msra.mxu0 %v1191
        %1370 = vmatprep.subr.mxu0 0.0
        %1371 = vmatpush2.msra.mxu0 %v1222
        %1372 = vmatprep.subr.mxu0 0.0
        %1373 = vmatpush2.msra.mxu0 %v1221
        %1374 = vmatprep.subr.mxu0 0.0
        %1375 = vmatpush2.msra.mxu0 %v1220
        %1376 = vmatprep.subr.mxu0 0.0
        %1377 = vmatpush2.msra.mxu0 %v1219
        %1378 = vmatprep.subr.mxu0 0.0
        %1379 = vmatpush2.msra.mxu0 %v1218
        %1380 = vmatprep.subr.mxu0 0.0
        %1381 = vmatpush2.msra.mxu0 %v1217
        %1382 = vmatprep.subr.mxu0 0.0
        %1383 = vmatpush2.msra.mxu0 %v1216
        %1384 = vmatprep.subr.mxu0 0.0
        %1385 = vmatpush2.msra.mxu0 %v1215
        %1386 = vmatprep.subr.mxu0 0.0
        %1387 = vmatpush2.msra.mxu0 %v1214
        %1388 = vmatprep.subr.mxu0 0.0
        %1389 = vmatpush2.msra.mxu0 %v1213
        %1390 = vmatprep.subr.mxu0 0.0
        %1391 = vmatpush2.msra.mxu0 %v1212
        %1392 = vmatprep.subr.mxu0 0.0
        %1393 = vmatpush2.msra.mxu0 %v1211
        %1394 = vmatprep.subr.mxu0 0.0
        %1395 = vmatpush2.msra.mxu0 %v1210
        %1396 = vmatprep.subr.mxu0 0.0
        %1397 = vmatpush2.msra.mxu0 %v1209
        %1398 = vmatprep.subr.mxu0 0.0
        %1399 = vmatpush2.msra.mxu0 %v1208
        %1400 = vmatprep.subr.mxu0 0.0
        %1401 = vmatpush2.msra.mxu0 %v1207
        %1402 = vmatprep.mubr.f32.mxu0 %v1246
        %1403 = vmatmul.mubr.f32.gmra.mxu0 %v1243
        %v1404 = vpop.f32.mrf.mxu0
        %v1405 = vadd.f32 %v1330, %v1404
        %v1406 = vpop.f32.mrf.mxu0
        %1407 = vmatprep.mubr.f32.mxu0 %v1254
        %1408 = vmatmul.mubr.f32.gmra.mxu0 %v1252
        %v1409 = vpop.f32.mrf.mxu0
        %v1410 = vadd.f32 %v1335, %v1409
        %v1411 = vpop.f32.mrf.mxu0
        %1412 = vdwg.mxu0
        %1413 = vmatprep.subr.mxu0 0.0
        %1414 = vmatpush1.msra.mxu0 %v1101
        %1415 = vmatprep.subr.mxu0 0.0
        %1416 = vmatpush1.msra.mxu0 %v1100
        %1417 = vmatprep.subr.mxu0 0.0
        %1418 = vmatpush1.msra.mxu0 %v1099
        %1419 = vmatprep.subr.mxu0 0.0
        %1420 = vmatpush1.msra.mxu0 %v1098
        %1421 = vmatprep.subr.mxu0 0.0
        %1422 = vmatpush1.msra.mxu0 %v1097
        %1423 = vmatprep.subr.mxu0 0.0
        %1424 = vmatpush1.msra.mxu0 %v1096
        %1425 = vmatprep.subr.mxu0 0.0
        %1426 = vmatpush1.msra.mxu0 %v1095
        %1427 = vmatprep.subr.mxu0 0.0
        %1428 = vmatpush1.msra.mxu0 %v1094
        %1429 = vmatprep.subr.mxu0 0.0
        %1430 = vmatpush1.msra.mxu0 %v1093
        %1431 = vmatprep.subr.mxu0 0.0
        %1432 = vmatpush1.msra.mxu0 %v1092
        %1433 = vmatprep.subr.mxu0 0.0
        %1434 = vmatpush1.msra.mxu0 %v1091
        %1435 = vmatprep.subr.mxu0 0.0
        %1436 = vmatpush1.msra.mxu0 %v1090
        %1437 = vmatprep.subr.mxu0 0.0
        %1438 = vmatpush1.msra.mxu0 %v1089
        %1439 = vmatprep.subr.mxu0 0.0
        %1440 = vmatpush1.msra.mxu0 %v1088
        %1441 = vmatprep.subr.mxu0 0.0
        %1442 = vmatpush1.msra.mxu0 %v1087
        %1443 = vmatprep.subr.mxu0 0.0
        %1444 = vmatpush1.msra.mxu0 %v1086
        %1445 = vmatprep.subr.mxu0 0.0
        %1446 = vmatpush2.msra.mxu0 %v1117
        %1447 = vmatprep.subr.mxu0 0.0
        %1448 = vmatpush2.msra.mxu0 %v1116
        %1449 = vmatprep.subr.mxu0 0.0
        %1450 = vmatpush2.msra.mxu0 %v1115
        %1451 = vmatprep.subr.mxu0 0.0
        %1452 = vmatpush2.msra.mxu0 %v1114
        %1453 = vmatprep.subr.mxu0 0.0
        %1454 = vmatpush2.msra.mxu0 %v1113
        %1455 = vmatprep.subr.mxu0 0.0
        %1456 = vmatpush2.msra.mxu0 %v1112
        %1457 = vmatprep.subr.mxu0 0.0
        %1458 = vmatpush2.msra.mxu0 %v1111
        %1459 = vmatprep.subr.mxu0 0.0
        %1460 = vmatpush2.msra.mxu0 %v1110
        %1461 = vmatprep.subr.mxu0 0.0
        %1462 = vmatpush2.msra.mxu0 %v1109
        %1463 = vmatprep.subr.mxu0 0.0
        %1464 = vmatpush2.msra.mxu0 %v1108
        %1465 = vmatprep.subr.mxu0 0.0
        %1466 = vmatpush2.msra.mxu0 %v1107
        %1467 = vmatprep.subr.mxu0 0.0
        %1468 = vmatpush2.msra.mxu0 %v1106
        %1469 = vmatprep.subr.mxu0 0.0
        %1470 = vmatpush2.msra.mxu0 %v1105
        %1471 = vmatprep.subr.mxu0 0.0
        %1472 = vmatpush2.msra.mxu0 %v1104
        %1473 = vmatprep.subr.mxu0 0.0
        %1474 = vmatpush2.msra.mxu0 %v1103
        %1475 = vmatprep.subr.mxu0 0.0
        %1476 = vmatpush2.msra.mxu0 %v1102
        %1477 = vmatprep.mubr.f32.mxu0 %v1078
        %1478 = vmatmul.mubr.f32.gmra.mxu0 %v1077
        %v1479 = vpop.f32.mrf.mxu0
        %v1480 = vadd.f32 %v1405, %v1479
        %v1481 = vpop.f32.mrf.mxu0
        %1482 = vmatprep.mubr.f32.mxu0 %v1082
        %1483 = vmatmul.mubr.f32.gmra.mxu0 %v1081
        %v1484 = vpop.f32.mrf.mxu0
        %v1485 = vadd.f32 %v1410, %v1484
        %v1486 = vpop.f32.mrf.mxu0
        %1487 = vdwg.mxu0
        %1488 = vmatprep.subr.mxu0 0.0
        %1489 = vmatpush1.msra.mxu0 %v1133
        %1490 = vmatprep.subr.mxu0 0.0
        %1491 = vmatpush1.msra.mxu0 %v1132
        %1492 = vmatprep.subr.mxu0 0.0
        %1493 = vmatpush1.msra.mxu0 %v1131
        %1494 = vmatprep.subr.mxu0 0.0
        %1495 = vmatpush1.msra.mxu0 %v1130
        %1496 = vmatprep.subr.mxu0 0.0
        %1497 = vmatpush1.msra.mxu0 %v1129
        %1498 = vmatprep.subr.mxu0 0.0
        %1499 = vmatpush1.msra.mxu0 %v1128
        %1500 = vmatprep.subr.mxu0 0.0
        %1501 = vmatpush1.msra.mxu0 %v1127
        %1502 = vmatprep.subr.mxu0 0.0
        %1503 = vmatpush1.msra.mxu0 %v1126
        %1504 = vmatprep.subr.mxu0 0.0
        %1505 = vmatpush1.msra.mxu0 %v1125
        %1506 = vmatprep.subr.mxu0 0.0
        %1507 = vmatpush1.msra.mxu0 %v1124
        %1508 = vmatprep.subr.mxu0 0.0
        %1509 = vmatpush1.msra.mxu0 %v1123
        %1510 = vmatprep.subr.mxu0 0.0
        %1511 = vmatpush1.msra.mxu0 %v1122
        %1512 = vmatprep.subr.mxu0 0.0
        %1513 = vmatpush1.msra.mxu0 %v1121
        %1514 = vmatprep.subr.mxu0 0.0
        %1515 = vmatpush1.msra.mxu0 %v1120
        %1516 = vmatprep.subr.mxu0 0.0
        %1517 = vmatpush1.msra.mxu0 %v1119
        %1518 = vmatprep.subr.mxu0 0.0
        %1519 = vmatpush1.msra.mxu0 %v1118
        %1520 = vmatprep.subr.mxu0 0.0
        %1521 = vmatpush2.msra.mxu0 %v1149
        %1522 = vmatprep.subr.mxu0 0.0
        %1523 = vmatpush2.msra.mxu0 %v1148
        %1524 = vmatprep.subr.mxu0 0.0
        %1525 = vmatpush2.msra.mxu0 %v1147
        %1526 = vmatprep.subr.mxu0 0.0
        %1527 = vmatpush2.msra.mxu0 %v1146
        %1528 = vmatprep.subr.mxu0 0.0
        %1529 = vmatpush2.msra.mxu0 %v1145
        %1530 = vmatprep.subr.mxu0 0.0
        %1531 = vmatpush2.msra.mxu0 %v1144
        %1532 = vmatprep.subr.mxu0 0.0
        %1533 = vmatpush2.msra.mxu0 %v1143
        %1534 = vmatprep.subr.mxu0 0.0
        %1535 = vmatpush2.msra.mxu0 %v1142
        %1536 = vmatprep.subr.mxu0 0.0
        %1537 = vmatpush2.msra.mxu0 %v1141
        %1538 = vmatprep.subr.mxu0 0.0
        %1539 = vmatpush2.msra.mxu0 %v1140
        %1540 = vmatprep.subr.mxu0 0.0
        %1541 = vmatpush2.msra.mxu0 %v1139
        %1542 = vmatprep.subr.mxu0 0.0
        %1543 = vmatpush2.msra.mxu0 %v1138
        %1544 = vmatprep.subr.mxu0 0.0
        %1545 = vmatpush2.msra.mxu0 %v1137
        %1546 = vmatprep.subr.mxu0 0.0
        %1547 = vmatpush2.msra.mxu0 %v1136
        %1548 = vmatprep.subr.mxu0 0.0
        %1549 = vmatpush2.msra.mxu0 %v1135
        %1550 = vmatprep.subr.mxu0 0.0
        %1551 = vmatpush2.msra.mxu0 %v1134
        %1552 = vmatprep.mubr.f32.mxu0 %v1080
        %1553 = vmatmul.mubr.f32.gmra.mxu0 %v1079
        %v1554 = vpop.f32.mrf.mxu0
        %v1555 = vadd.f32 %v1480, %v1554
        %v1556 = vpop.f32.mrf.mxu0
        %1557 = vmatprep.mubr.f32.mxu0 %v1084
        %1558 = vmatmul.mubr.f32.gmra.mxu0 %v1083
        %v1559 = vpop.f32.mrf.mxu0
        %v1560 = vadd.f32 %v1485, %v1559
        %v1561 = vpop.f32.mrf.mxu0
        %1562 = vdwg.mxu0
        %v1563 = vld [vmem:[#allocation2] sm:$0xfc]
        %v1564 = vld [vmem:[#allocation2 + $0x8] sm:$0xfc]
        %v1565 = vld [vmem:[#allocation2 + $0x10] sm:$0xfc]
        %v1566 = vld [vmem:[#allocation2 + $0x18] sm:$0xfc]
        %v1567 = vld [vmem:[#allocation2 + $0x40] sm:$0x3]
        %v1568 = vld [vmem:[#allocation2 + $0x48] sm:$0x3]
        %v1569 = vld [vmem:[#allocation2 + $0x50] sm:$0x3]
        %v1570 = vld [vmem:[#allocation2 + $0x58] sm:$0x3]
        %s1571 = scalar_lea.vmem [#allocation3], 2560
        %v1572 = vld [vmem:[%s1571] sm:$0xff]
        %v1573 = vld [vmem:[%s1571 + $0x8] sm:$0xff]
        %v1574 = vld [vmem:[%s1571 + $0x10] sm:$0xff]
        %v1575 = vld [vmem:[%s1571 + $0x18] sm:$0xff]
        %v1576 = vld [vmem:[%s1571 + $0x20] sm:$0xff]
        %v1577 = vld [vmem:[%s1571 + $0x28] sm:$0xff]
        %v1578 = vld [vmem:[%s1571 + $0x30] sm:$0xff]
        %v1579 = vld [vmem:[%s1571 + $0x38] sm:$0xff]
        %v1580 = vld [vmem:[%s1571 + $0x40] sm:$0xff]
        %v1581 = vld [vmem:[%s1571 + $0x48] sm:$0xff]
        %v1582 = vld [vmem:[%s1571 + $0x50] sm:$0xff]
        %v1583 = vld [vmem:[%s1571 + $0x58] sm:$0xff]
        %v1584 = vld [vmem:[%s1571 + $0x60] sm:$0xff]
        %v1585 = vld [vmem:[%s1571 + $0x68] sm:$0xff]
        %v1586 = vld [vmem:[%s1571 + $0x70] sm:$0xff]
        %v1587 = vld [vmem:[%s1571 + $0x78] sm:$0xff]
        %v1588 = vld [vmem:[%s1571 + $0x80] sm:$0xff]
        %v1589 = vld [vmem:[%s1571 + $0x88] sm:$0xff]
        %v1590 = vld [vmem:[%s1571 + $0x90] sm:$0xff]
        %v1591 = vld [vmem:[%s1571 + $0x98] sm:$0xff]
        %v1592 = vld [vmem:[%s1571 + $0xa0] sm:$0xff]
        %v1593 = vld [vmem:[%s1571 + $0xa8] sm:$0xff]
        %v1594 = vld [vmem:[%s1571 + $0xb0] sm:$0xff]
        %v1595 = vld [vmem:[%s1571 + $0xb8] sm:$0xff]
        %v1596 = vld [vmem:[%s1571 + $0xc0] sm:$0xff]
        %v1597 = vld [vmem:[%s1571 + $0xc8] sm:$0xff]
        %v1598 = vld [vmem:[%s1571 + $0xd0] sm:$0xff]
        %v1599 = vld [vmem:[%s1571 + $0xd8] sm:$0xff]
        %v1600 = vld [vmem:[%s1571 + $0xe0] sm:$0xff]
        %v1601 = vld [vmem:[%s1571 + $0xe8] sm:$0xff]
        %v1602 = vld [vmem:[%s1571 + $0xf0] sm:$0xff]
        %v1603 = vld [vmem:[%s1571 + $0xf8] sm:$0xff]
        %v1604 = vld [vmem:[%s1571 + $0x100] sm:$0xff]
        %v1605 = vld [vmem:[%s1571 + $0x108] sm:$0xff]
        %v1606 = vld [vmem:[%s1571 + $0x110] sm:$0xff]
        %v1607 = vld [vmem:[%s1571 + $0x118] sm:$0xff]
        %v1608 = vld [vmem:[%s1571 + $0x120] sm:$0xff]
        %v1609 = vld [vmem:[%s1571 + $0x128] sm:$0xff]
        %v1610 = vld [vmem:[%s1571 + $0x130] sm:$0xff]
        %v1611 = vld [vmem:[%s1571 + $0x138] sm:$0xff]
        %v1612 = vld [vmem:[%s1571 + $0x140] sm:$0xff]
        %v1613 = vld [vmem:[%s1571 + $0x148] sm:$0xff]
        %v1614 = vld [vmem:[%s1571 + $0x150] sm:$0xff]
        %v1615 = vld [vmem:[%s1571 + $0x158] sm:$0xff]
        %v1616 = vld [vmem:[%s1571 + $0x160] sm:$0xff]
        %v1617 = vld [vmem:[%s1571 + $0x168] sm:$0xff]
        %v1618 = vld [vmem:[%s1571 + $0x170] sm:$0xff]
        %v1619 = vld [vmem:[%s1571 + $0x178] sm:$0xff]
        %v1620 = vld [vmem:[%s1571 + $0x180] sm:$0xff]
        %v1621 = vld [vmem:[%s1571 + $0x188] sm:$0xff]
        %v1622 = vld [vmem:[%s1571 + $0x190] sm:$0xff]
        %v1623 = vld [vmem:[%s1571 + $0x198] sm:$0xff]
        %v1624 = vld [vmem:[%s1571 + $0x1a0] sm:$0xff]
        %v1625 = vld [vmem:[%s1571 + $0x1a8] sm:$0xff]
        %v1626 = vld [vmem:[%s1571 + $0x1b0] sm:$0xff]
        %v1627 = vld [vmem:[%s1571 + $0x1b8] sm:$0xff]
        %v1628 = vld [vmem:[%s1571 + $0x1c0] sm:$0xff]
        %v1629 = vld [vmem:[%s1571 + $0x1c8] sm:$0xff]
        %v1630 = vld [vmem:[%s1571 + $0x1d0] sm:$0xff]
        %v1631 = vld [vmem:[%s1571 + $0x1d8] sm:$0xff]
        %v1632 = vld [vmem:[%s1571 + $0x1e0] sm:$0xff]
        %v1633 = vld [vmem:[%s1571 + $0x1e8] sm:$0xff]
        %v1634 = vld [vmem:[%s1571 + $0x1f0] sm:$0xff]
        %v1635 = vld [vmem:[%s1571 + $0x1f8] sm:$0xff]
        %v1644 = vrot.slane %v1563, 2
        %v1645 = vrot.slane %v1081, 2
        %v1646 = vsel %vm873, %v1644, %v1645
        %v1647 = vrot.slane %v1564, 2
        %v1648 = vrot.slane %v1082, 2
        %v1649 = vsel %vm873, %v1647, %v1648
        %v1650 = vrot.slane %v1565, 2
        %v1651 = vrot.slane %v1083, 2
        %v1652 = vsel %vm873, %v1650, %v1651
        %v1653 = vrot.slane %v1566, 2
        %v1654 = vrot.slane %v1084, 2
        %v1655 = vsel %vm873, %v1653, %v1654
        %v1656 = vrot.slane %v1567, 2
        %v1657 = vsel %vm873, %v1645, %v1656
        %v1658 = vrot.slane %v1568, 2
        %v1659 = vsel %vm873, %v1648, %v1658
        %v1660 = vrot.slane %v1569, 2
        %v1661 = vsel %vm873, %v1651, %v1660
        %v1662 = vrot.slane %v1570, 2
        %v1663 = vsel %vm873, %v1654, %v1662
        %1672 = vmatprep.subr.mxu0 0.0
        %1673 = vmatpush1.msra.mxu0 %v1587
        %1674 = vmatprep.subr.mxu0 0.0
        %1675 = vmatpush1.msra.mxu0 %v1586
        %1676 = vmatprep.subr.mxu0 0.0
        %1677 = vmatpush1.msra.mxu0 %v1585
        %1678 = vmatprep.subr.mxu0 0.0
        %1679 = vmatpush1.msra.mxu0 %v1584
        %1680 = vmatprep.subr.mxu0 0.0
        %1681 = vmatpush1.msra.mxu0 %v1583
        %1682 = vmatprep.subr.mxu0 0.0
        %1683 = vmatpush1.msra.mxu0 %v1582
        %1684 = vmatprep.subr.mxu0 0.0
        %1685 = vmatpush1.msra.mxu0 %v1581
        %1686 = vmatprep.subr.mxu0 0.0
        %1687 = vmatpush1.msra.mxu0 %v1580
        %1688 = vmatprep.subr.mxu0 0.0
        %1689 = vmatpush1.msra.mxu0 %v1579
        %1690 = vmatprep.subr.mxu0 0.0
        %1691 = vmatpush1.msra.mxu0 %v1578
        %1692 = vmatprep.subr.mxu0 0.0
        %1693 = vmatpush1.msra.mxu0 %v1577
        %1694 = vmatprep.subr.mxu0 0.0
        %1695 = vmatpush1.msra.mxu0 %v1576
        %1696 = vmatprep.subr.mxu0 0.0
        %1697 = vmatpush1.msra.mxu0 %v1575
        %1698 = vmatprep.subr.mxu0 0.0
        %1699 = vmatpush1.msra.mxu0 %v1574
        %1700 = vmatprep.subr.mxu0 0.0
        %1701 = vmatpush1.msra.mxu0 %v1573
        %1702 = vmatprep.subr.mxu0 0.0
        %1703 = vmatpush1.msra.mxu0 %v1572
        %1704 = vmatprep.subr.mxu0 0.0
        %1705 = vmatpush2.msra.mxu0 %v1603
        %1706 = vmatprep.subr.mxu0 0.0
        %1707 = vmatpush2.msra.mxu0 %v1602
        %1708 = vmatprep.subr.mxu0 0.0
        %1709 = vmatpush2.msra.mxu0 %v1601
        %1710 = vmatprep.subr.mxu0 0.0
        %1711 = vmatpush2.msra.mxu0 %v1600
        %1712 = vmatprep.subr.mxu0 0.0
        %1713 = vmatpush2.msra.mxu0 %v1599
        %1714 = vmatprep.subr.mxu0 0.0
        %1715 = vmatpush2.msra.mxu0 %v1598
        %1716 = vmatprep.subr.mxu0 0.0
        %1717 = vmatpush2.msra.mxu0 %v1597
        %1718 = vmatprep.subr.mxu0 0.0
        %1719 = vmatpush2.msra.mxu0 %v1596
        %1720 = vmatprep.subr.mxu0 0.0
        %1721 = vmatpush2.msra.mxu0 %v1595
        %1722 = vmatprep.subr.mxu0 0.0
        %1723 = vmatpush2.msra.mxu0 %v1594
        %1724 = vmatprep.subr.mxu0 0.0
        %1725 = vmatpush2.msra.mxu0 %v1593
        %1726 = vmatprep.subr.mxu0 0.0
        %1727 = vmatpush2.msra.mxu0 %v1592
        %1728 = vmatprep.subr.mxu0 0.0
        %1729 = vmatpush2.msra.mxu0 %v1591
        %1730 = vmatprep.subr.mxu0 0.0
        %1731 = vmatpush2.msra.mxu0 %v1590
        %1732 = vmatprep.subr.mxu0 0.0
        %1733 = vmatpush2.msra.mxu0 %v1589
        %1734 = vmatprep.subr.mxu0 0.0
        %1735 = vmatpush2.msra.mxu0 %v1588
        %1736 = vmatprep.mubr.f32.mxu0 %v1649
        %1737 = vmatmul.mubr.f32.gmra.mxu0 %v1646
        %v1738 = vpop.f32.mrf.mxu0
        %v1739 = vadd.f32 0.0, %v1738
        %v1740 = vpop.f32.mrf.mxu0
        %1741 = vmatprep.mubr.f32.mxu0 %v1659
        %1742 = vmatmul.mubr.f32.gmra.mxu0 %v1657
        %v1743 = vpop.f32.mrf.mxu0
        %v1744 = vadd.f32 0.0, %v1743
        %v1745 = vpop.f32.mrf.mxu0
        %1746 = vdwg.mxu0
        %1747 = vmatprep.subr.mxu0 0.0
        %1748 = vmatpush1.msra.mxu0 %v1619
        %1749 = vmatprep.subr.mxu0 0.0
        %1750 = vmatpush1.msra.mxu0 %v1618
        %1751 = vmatprep.subr.mxu0 0.0
        %1752 = vmatpush1.msra.mxu0 %v1617
        %1753 = vmatprep.subr.mxu0 0.0
        %1754 = vmatpush1.msra.mxu0 %v1616
        %1755 = vmatprep.subr.mxu0 0.0
        %1756 = vmatpush1.msra.mxu0 %v1615
        %1757 = vmatprep.subr.mxu0 0.0
        %1758 = vmatpush1.msra.mxu0 %v1614
        %1759 = vmatprep.subr.mxu0 0.0
        %1760 = vmatpush1.msra.mxu0 %v1613
        %1761 = vmatprep.subr.mxu0 0.0
        %1762 = vmatpush1.msra.mxu0 %v1612
        %1763 = vmatprep.subr.mxu0 0.0
        %1764 = vmatpush1.msra.mxu0 %v1611
        %1765 = vmatprep.subr.mxu0 0.0
        %1766 = vmatpush1.msra.mxu0 %v1610
        %1767 = vmatprep.subr.mxu0 0.0
        %1768 = vmatpush1.msra.mxu0 %v1609
        %1769 = vmatprep.subr.mxu0 0.0
        %1770 = vmatpush1.msra.mxu0 %v1608
        %1771 = vmatprep.subr.mxu0 0.0
        %1772 = vmatpush1.msra.mxu0 %v1607
        %1773 = vmatprep.subr.mxu0 0.0
        %1774 = vmatpush1.msra.mxu0 %v1606
        %1775 = vmatprep.subr.mxu0 0.0
        %1776 = vmatpush1.msra.mxu0 %v1605
        %1777 = vmatprep.subr.mxu0 0.0
        %1778 = vmatpush1.msra.mxu0 %v1604
        %1779 = vmatprep.subr.mxu0 0.0
        %1780 = vmatpush2.msra.mxu0 %v1635
        %1781 = vmatprep.subr.mxu0 0.0
        %1782 = vmatpush2.msra.mxu0 %v1634
        %1783 = vmatprep.subr.mxu0 0.0
        %1784 = vmatpush2.msra.mxu0 %v1633
        %1785 = vmatprep.subr.mxu0 0.0
        %1786 = vmatpush2.msra.mxu0 %v1632
        %1787 = vmatprep.subr.mxu0 0.0
        %1788 = vmatpush2.msra.mxu0 %v1631
        %1789 = vmatprep.subr.mxu0 0.0
        %1790 = vmatpush2.msra.mxu0 %v1630
        %1791 = vmatprep.subr.mxu0 0.0
        %1792 = vmatpush2.msra.mxu0 %v1629
        %1793 = vmatprep.subr.mxu0 0.0
        %1794 = vmatpush2.msra.mxu0 %v1628
        %1795 = vmatprep.subr.mxu0 0.0
        %1796 = vmatpush2.msra.mxu0 %v1627
        %1797 = vmatprep.subr.mxu0 0.0
        %1798 = vmatpush2.msra.mxu0 %v1626
        %1799 = vmatprep.subr.mxu0 0.0
        %1800 = vmatpush2.msra.mxu0 %v1625
        %1801 = vmatprep.subr.mxu0 0.0
        %1802 = vmatpush2.msra.mxu0 %v1624
        %1803 = vmatprep.subr.mxu0 0.0
        %1804 = vmatpush2.msra.mxu0 %v1623
        %1805 = vmatprep.subr.mxu0 0.0
        %1806 = vmatpush2.msra.mxu0 %v1622
        %1807 = vmatprep.subr.mxu0 0.0
        %1808 = vmatpush2.msra.mxu0 %v1621
        %1809 = vmatprep.subr.mxu0 0.0
        %1810 = vmatpush2.msra.mxu0 %v1620
        %1811 = vmatprep.mubr.f32.mxu0 %v1655
        %1812 = vmatmul.mubr.f32.gmra.mxu0 %v1652
        %v1813 = vpop.f32.mrf.mxu0
        %v1814 = vadd.f32 %v1739, %v1813
        %v1815 = vpop.f32.mrf.mxu0
        %1816 = vmatprep.mubr.f32.mxu0 %v1663
        %1817 = vmatmul.mubr.f32.gmra.mxu0 %v1661
        %v1818 = vpop.f32.mrf.mxu0
        %v1819 = vadd.f32 %v1744, %v1818
        %v1820 = vpop.f32.mrf.mxu0
        %1821 = vdwg.mxu0
        %v1822 = vadd.f32 %v1555, %v1814
        %v1823 = vadd.f32 %v1560, %v1819
        %s1824 = scalar_lea.vmem [#allocation5], 1
        %v1825 = vld [vmem:[%s1824] sm:$0x1]
        %v1827 = vlaneseq
        %v1828 = vshrl.u32 %v1827, 7
        %v1829 = vsub.s32 0, %v1828
        %v1830 = vrot.slane %v1825, %v1829
        %v1832 = vadd.f32 %v1822, %v1830
        %v1833 = vadd.f32 %v1823, %v1830
        %v1834 = vmax.f32 %v1832, 0.0
        %v1835 = vmax.f32 %v1833, 0.0
        %v1838 = vrot.slane %v1834, 7
        %v1839 = vrot.slane %v1835, 7
        %v1840 = vsel %vm1067, %v1838, %v1839
        %1844 = vst [vmem:[#allocation2 + $0x10] sm:$0xfe] %v1838
        %1845 = vst [vmem:[#allocation2 + $0x30] sm:$0xff] %v1840
        %1846 = vst [vmem:[#allocation2 + $0x50] sm:$0x1] %v1839
        %v1847 = vld [vmem:[#allocation2] sm:$0xff]
        %v1848 = vld [vmem:[#allocation2 + $0x8] sm:$0xff]
        %v1849 = vld [vmem:[#allocation2 + $0x10] sm:$0xff]
        %v1850 = vld [vmem:[#allocation2 + $0x18] sm:$0xff]
        %v1851 = vld [vmem:[#allocation2 + $0x20] sm:$0xff]
        %v1852 = vld [vmem:[#allocation2 + $0x28] sm:$0xff]
        %v1853 = vld [vmem:[#allocation2 + $0x30] sm:$0xff]
        %v1854 = vld [vmem:[#allocation2 + $0x38] sm:$0xff]
        %s1855 = scalar_lea.vmem [#allocation3], 3072
        %v1856 = vld [vmem:[%s1855] sm:$0xff]
        %v1857 = vld [vmem:[%s1855 + $0x8] sm:$0xff]
        %v1858 = vld [vmem:[%s1855 + $0x10] sm:$0xff]
        %v1859 = vld [vmem:[%s1855 + $0x18] sm:$0xff]
        %v1860 = vld [vmem:[%s1855 + $0x20] sm:$0xff]
        %v1861 = vld [vmem:[%s1855 + $0x28] sm:$0xff]
        %v1862 = vld [vmem:[%s1855 + $0x30] sm:$0xff]
        %v1863 = vld [vmem:[%s1855 + $0x38] sm:$0xff]
        %v1864 = vld [vmem:[%s1855 + $0x40] sm:$0xff]
        %v1865 = vld [vmem:[%s1855 + $0x48] sm:$0xff]
        %v1866 = vld [vmem:[%s1855 + $0x50] sm:$0xff]
        %v1867 = vld [vmem:[%s1855 + $0x58] sm:$0xff]
        %v1868 = vld [vmem:[%s1855 + $0x60] sm:$0xff]
        %v1869 = vld [vmem:[%s1855 + $0x68] sm:$0xff]
        %v1870 = vld [vmem:[%s1855 + $0x70] sm:$0xff]
        %v1871 = vld [vmem:[%s1855 + $0x78] sm:$0xff]
        %v1872 = vld [vmem:[%s1855 + $0x80] sm:$0xff]
        %v1873 = vld [vmem:[%s1855 + $0x88] sm:$0xff]
        %v1874 = vld [vmem:[%s1855 + $0x90] sm:$0xff]
        %v1875 = vld [vmem:[%s1855 + $0x98] sm:$0xff]
        %v1876 = vld [vmem:[%s1855 + $0xa0] sm:$0xff]
        %v1877 = vld [vmem:[%s1855 + $0xa8] sm:$0xff]
        %v1878 = vld [vmem:[%s1855 + $0xb0] sm:$0xff]
        %v1879 = vld [vmem:[%s1855 + $0xb8] sm:$0xff]
        %v1880 = vld [vmem:[%s1855 + $0xc0] sm:$0xff]
        %v1881 = vld [vmem:[%s1855 + $0xc8] sm:$0xff]
        %v1882 = vld [vmem:[%s1855 + $0xd0] sm:$0xff]
        %v1883 = vld [vmem:[%s1855 + $0xd8] sm:$0xff]
        %v1884 = vld [vmem:[%s1855 + $0xe0] sm:$0xff]
        %v1885 = vld [vmem:[%s1855 + $0xe8] sm:$0xff]
        %v1886 = vld [vmem:[%s1855 + $0xf0] sm:$0xff]
        %v1887 = vld [vmem:[%s1855 + $0xf8] sm:$0xff]
        %v1888 = vld [vmem:[%s1855 + $0x100] sm:$0xff]
        %v1889 = vld [vmem:[%s1855 + $0x108] sm:$0xff]
        %v1890 = vld [vmem:[%s1855 + $0x110] sm:$0xff]
        %v1891 = vld [vmem:[%s1855 + $0x118] sm:$0xff]
        %v1892 = vld [vmem:[%s1855 + $0x120] sm:$0xff]
        %v1893 = vld [vmem:[%s1855 + $0x128] sm:$0xff]
        %v1894 = vld [vmem:[%s1855 + $0x130] sm:$0xff]
        %v1895 = vld [vmem:[%s1855 + $0x138] sm:$0xff]
        %v1896 = vld [vmem:[%s1855 + $0x140] sm:$0xff]
        %v1897 = vld [vmem:[%s1855 + $0x148] sm:$0xff]
        %v1898 = vld [vmem:[%s1855 + $0x150] sm:$0xff]
        %v1899 = vld [vmem:[%s1855 + $0x158] sm:$0xff]
        %v1900 = vld [vmem:[%s1855 + $0x160] sm:$0xff]
        %v1901 = vld [vmem:[%s1855 + $0x168] sm:$0xff]
        %v1902 = vld [vmem:[%s1855 + $0x170] sm:$0xff]
        %v1903 = vld [vmem:[%s1855 + $0x178] sm:$0xff]
        %v1904 = vld [vmem:[%s1855 + $0x180] sm:$0xff]
        %v1905 = vld [vmem:[%s1855 + $0x188] sm:$0xff]
        %v1906 = vld [vmem:[%s1855 + $0x190] sm:$0xff]
        %v1907 = vld [vmem:[%s1855 + $0x198] sm:$0xff]
        %v1908 = vld [vmem:[%s1855 + $0x1a0] sm:$0xff]
        %v1909 = vld [vmem:[%s1855 + $0x1a8] sm:$0xff]
        %v1910 = vld [vmem:[%s1855 + $0x1b0] sm:$0xff]
        %v1911 = vld [vmem:[%s1855 + $0x1b8] sm:$0xff]
        %v1912 = vld [vmem:[%s1855 + $0x1c0] sm:$0xff]
        %v1913 = vld [vmem:[%s1855 + $0x1c8] sm:$0xff]
        %v1914 = vld [vmem:[%s1855 + $0x1d0] sm:$0xff]
        %v1915 = vld [vmem:[%s1855 + $0x1d8] sm:$0xff]
        %v1916 = vld [vmem:[%s1855 + $0x1e0] sm:$0xff]
        %v1917 = vld [vmem:[%s1855 + $0x1e8] sm:$0xff]
        %v1918 = vld [vmem:[%s1855 + $0x1f0] sm:$0xff]
        %v1919 = vld [vmem:[%s1855 + $0x1f8] sm:$0xff]
        %v1920 = vld [vmem:[#allocation2] sm:$0xfe]
        %v1921 = vld [vmem:[#allocation2 + $0x8] sm:$0xfe]
        %v1922 = vld [vmem:[#allocation2 + $0x10] sm:$0xfe]
        %v1923 = vld [vmem:[#allocation2 + $0x18] sm:$0xfe]
        %v1924 = vld [vmem:[#allocation2 + $0x40] sm:$0x1]
        %v1925 = vld [vmem:[#allocation2 + $0x48] sm:$0x1]
        %v1926 = vld [vmem:[#allocation2 + $0x50] sm:$0x1]
        %v1927 = vld [vmem:[#allocation2 + $0x58] sm:$0x1]
        %s1928 = scalar_lea.vmem [#allocation3], 3584
        %v1929 = vld [vmem:[%s1928] sm:$0xff]
        %v1930 = vld [vmem:[%s1928 + $0x8] sm:$0xff]
        %v1931 = vld [vmem:[%s1928 + $0x10] sm:$0xff]
        %v1932 = vld [vmem:[%s1928 + $0x18] sm:$0xff]
        %v1933 = vld [vmem:[%s1928 + $0x20] sm:$0xff]
        %v1934 = vld [vmem:[%s1928 + $0x28] sm:$0xff]
        %v1935 = vld [vmem:[%s1928 + $0x30] sm:$0xff]
        %v1936 = vld [vmem:[%s1928 + $0x38] sm:$0xff]
        %v1937 = vld [vmem:[%s1928 + $0x40] sm:$0xff]
        %v1938 = vld [vmem:[%s1928 + $0x48] sm:$0xff]
        %v1939 = vld [vmem:[%s1928 + $0x50] sm:$0xff]
        %v1940 = vld [vmem:[%s1928 + $0x58] sm:$0xff]
        %v1941 = vld [vmem:[%s1928 + $0x60] sm:$0xff]
        %v1942 = vld [vmem:[%s1928 + $0x68] sm:$0xff]
        %v1943 = vld [vmem:[%s1928 + $0x70] sm:$0xff]
        %v1944 = vld [vmem:[%s1928 + $0x78] sm:$0xff]
        %v1945 = vld [vmem:[%s1928 + $0x80] sm:$0xff]
        %v1946 = vld [vmem:[%s1928 + $0x88] sm:$0xff]
        %v1947 = vld [vmem:[%s1928 + $0x90] sm:$0xff]
        %v1948 = vld [vmem:[%s1928 + $0x98] sm:$0xff]
        %v1949 = vld [vmem:[%s1928 + $0xa0] sm:$0xff]
        %v1950 = vld [vmem:[%s1928 + $0xa8] sm:$0xff]
        %v1951 = vld [vmem:[%s1928 + $0xb0] sm:$0xff]
        %v1952 = vld [vmem:[%s1928 + $0xb8] sm:$0xff]
        %v1953 = vld [vmem:[%s1928 + $0xc0] sm:$0xff]
        %v1954 = vld [vmem:[%s1928 + $0xc8] sm:$0xff]
        %v1955 = vld [vmem:[%s1928 + $0xd0] sm:$0xff]
        %v1956 = vld [vmem:[%s1928 + $0xd8] sm:$0xff]
        %v1957 = vld [vmem:[%s1928 + $0xe0] sm:$0xff]
        %v1958 = vld [vmem:[%s1928 + $0xe8] sm:$0xff]
        %v1959 = vld [vmem:[%s1928 + $0xf0] sm:$0xff]
        %v1960 = vld [vmem:[%s1928 + $0xf8] sm:$0xff]
        %v1961 = vld [vmem:[%s1928 + $0x100] sm:$0xff]
        %v1962 = vld [vmem:[%s1928 + $0x108] sm:$0xff]
        %v1963 = vld [vmem:[%s1928 + $0x110] sm:$0xff]
        %v1964 = vld [vmem:[%s1928 + $0x118] sm:$0xff]
        %v1965 = vld [vmem:[%s1928 + $0x120] sm:$0xff]
        %v1966 = vld [vmem:[%s1928 + $0x128] sm:$0xff]
        %v1967 = vld [vmem:[%s1928 + $0x130] sm:$0xff]
        %v1968 = vld [vmem:[%s1928 + $0x138] sm:$0xff]
        %v1969 = vld [vmem:[%s1928 + $0x140] sm:$0xff]
        %v1970 = vld [vmem:[%s1928 + $0x148] sm:$0xff]
        %v1971 = vld [vmem:[%s1928 + $0x150] sm:$0xff]
        %v1972 = vld [vmem:[%s1928 + $0x158] sm:$0xff]
        %v1973 = vld [vmem:[%s1928 + $0x160] sm:$0xff]
        %v1974 = vld [vmem:[%s1928 + $0x168] sm:$0xff]
        %v1975 = vld [vmem:[%s1928 + $0x170] sm:$0xff]
        %v1976 = vld [vmem:[%s1928 + $0x178] sm:$0xff]
        %v1977 = vld [vmem:[%s1928 + $0x180] sm:$0xff]
        %v1978 = vld [vmem:[%s1928 + $0x188] sm:$0xff]
        %v1979 = vld [vmem:[%s1928 + $0x190] sm:$0xff]
        %v1980 = vld [vmem:[%s1928 + $0x198] sm:$0xff]
        %v1981 = vld [vmem:[%s1928 + $0x1a0] sm:$0xff]
        %v1982 = vld [vmem:[%s1928 + $0x1a8] sm:$0xff]
        %v1983 = vld [vmem:[%s1928 + $0x1b0] sm:$0xff]
        %v1984 = vld [vmem:[%s1928 + $0x1b8] sm:$0xff]
        %v1985 = vld [vmem:[%s1928 + $0x1c0] sm:$0xff]
        %v1986 = vld [vmem:[%s1928 + $0x1c8] sm:$0xff]
        %v1987 = vld [vmem:[%s1928 + $0x1d0] sm:$0xff]
        %v1988 = vld [vmem:[%s1928 + $0x1d8] sm:$0xff]
        %v1989 = vld [vmem:[%s1928 + $0x1e0] sm:$0xff]
        %v1990 = vld [vmem:[%s1928 + $0x1e8] sm:$0xff]
        %v1991 = vld [vmem:[%s1928 + $0x1f0] sm:$0xff]
        %v1992 = vld [vmem:[%s1928 + $0x1f8] sm:$0xff]
        %v2005 = vrot.slane %v1920, 1
        %v2006 = vrot.slane %v1851, 1
        %v2007 = vsel %vm463, %v2005, %v2006
        %v2008 = vrot.slane %v1921, 1
        %v2009 = vrot.slane %v1852, 1
        %v2010 = vsel %vm463, %v2008, %v2009
        %v2011 = vrot.slane %v1922, 1
        %v2012 = vrot.slane %v1853, 1
        %v2013 = vsel %vm463, %v2011, %v2012
        %v2014 = vrot.slane %v1923, 1
        %v2015 = vrot.slane %v1854, 1
        %v2016 = vsel %vm463, %v2014, %v2015
        %v2017 = vrot.slane %v1924, 1
        %v2018 = vsel %vm463, %v2006, %v2017
        %v2019 = vrot.slane %v1925, 1
        %v2020 = vsel %vm463, %v2009, %v2019
        %v2021 = vrot.slane %v1926, 1
        %v2022 = vsel %vm463, %v2012, %v2021
        %v2023 = vrot.slane %v1927, 1
        %v2024 = vsel %vm463, %v2015, %v2023
        %2033 = vmatprep.subr.mxu0 0.0
        %2034 = vmatpush1.msra.mxu0 %v1944
        %2035 = vmatprep.subr.mxu0 0.0
        %2036 = vmatpush1.msra.mxu0 %v1943
        %2037 = vmatprep.subr.mxu0 0.0
        %2038 = vmatpush1.msra.mxu0 %v1942
        %2039 = vmatprep.subr.mxu0 0.0
        %2040 = vmatpush1.msra.mxu0 %v1941
        %2041 = vmatprep.subr.mxu0 0.0
        %2042 = vmatpush1.msra.mxu0 %v1940
        %2043 = vmatprep.subr.mxu0 0.0
        %2044 = vmatpush1.msra.mxu0 %v1939
        %2045 = vmatprep.subr.mxu0 0.0
        %2046 = vmatpush1.msra.mxu0 %v1938
        %2047 = vmatprep.subr.mxu0 0.0
        %2048 = vmatpush1.msra.mxu0 %v1937
        %2049 = vmatprep.subr.mxu0 0.0
        %2050 = vmatpush1.msra.mxu0 %v1936
        %2051 = vmatprep.subr.mxu0 0.0
        %2052 = vmatpush1.msra.mxu0 %v1935
        %2053 = vmatprep.subr.mxu0 0.0
        %2054 = vmatpush1.msra.mxu0 %v1934
        %2055 = vmatprep.subr.mxu0 0.0
        %2056 = vmatpush1.msra.mxu0 %v1933
        %2057 = vmatprep.subr.mxu0 0.0
        %2058 = vmatpush1.msra.mxu0 %v1932
        %2059 = vmatprep.subr.mxu0 0.0
        %2060 = vmatpush1.msra.mxu0 %v1931
        %2061 = vmatprep.subr.mxu0 0.0
        %2062 = vmatpush1.msra.mxu0 %v1930
        %2063 = vmatprep.subr.mxu0 0.0
        %2064 = vmatpush1.msra.mxu0 %v1929
        %2065 = vmatprep.subr.mxu0 0.0
        %2066 = vmatpush2.msra.mxu0 %v1960
        %2067 = vmatprep.subr.mxu0 0.0
        %2068 = vmatpush2.msra.mxu0 %v1959
        %2069 = vmatprep.subr.mxu0 0.0
        %2070 = vmatpush2.msra.mxu0 %v1958
        %2071 = vmatprep.subr.mxu0 0.0
        %2072 = vmatpush2.msra.mxu0 %v1957
        %2073 = vmatprep.subr.mxu0 0.0
        %2074 = vmatpush2.msra.mxu0 %v1956
        %2075 = vmatprep.subr.mxu0 0.0
        %2076 = vmatpush2.msra.mxu0 %v1955
        %2077 = vmatprep.subr.mxu0 0.0
        %2078 = vmatpush2.msra.mxu0 %v1954
        %2079 = vmatprep.subr.mxu0 0.0
        %2080 = vmatpush2.msra.mxu0 %v1953
        %2081 = vmatprep.subr.mxu0 0.0
        %2082 = vmatpush2.msra.mxu0 %v1952
        %2083 = vmatprep.subr.mxu0 0.0
        %2084 = vmatpush2.msra.mxu0 %v1951
        %2085 = vmatprep.subr.mxu0 0.0
        %2086 = vmatpush2.msra.mxu0 %v1950
        %2087 = vmatprep.subr.mxu0 0.0
        %2088 = vmatpush2.msra.mxu0 %v1949
        %2089 = vmatprep.subr.mxu0 0.0
        %2090 = vmatpush2.msra.mxu0 %v1948
        %2091 = vmatprep.subr.mxu0 0.0
        %2092 = vmatpush2.msra.mxu0 %v1947
        %2093 = vmatprep.subr.mxu0 0.0
        %2094 = vmatpush2.msra.mxu0 %v1946
        %2095 = vmatprep.subr.mxu0 0.0
        %2096 = vmatpush2.msra.mxu0 %v1945
        %2097 = vmatprep.mubr.f32.mxu0 %v2010
        %2098 = vmatmul.mubr.f32.gmra.mxu0 %v2007
        %v2099 = vpop.f32.mrf.mxu0
        %v2100 = vadd.f32 0.0, %v2099
        %v2101 = vpop.f32.mrf.mxu0
        %2102 = vmatprep.mubr.f32.mxu0 %v2020
        %2103 = vmatmul.mubr.f32.gmra.mxu0 %v2018
        %v2104 = vpop.f32.mrf.mxu0
        %v2105 = vadd.f32 0.0, %v2104
        %v2106 = vpop.f32.mrf.mxu0
        %2107 = vdwg.mxu0
        %2108 = vmatprep.subr.mxu0 0.0
        %2109 = vmatpush1.msra.mxu0 %v1976
        %2110 = vmatprep.subr.mxu0 0.0
        %2111 = vmatpush1.msra.mxu0 %v1975
        %2112 = vmatprep.subr.mxu0 0.0
        %2113 = vmatpush1.msra.mxu0 %v1974
        %2114 = vmatprep.subr.mxu0 0.0
        %2115 = vmatpush1.msra.mxu0 %v1973
        %2116 = vmatprep.subr.mxu0 0.0
        %2117 = vmatpush1.msra.mxu0 %v1972
        %2118 = vmatprep.subr.mxu0 0.0
        %2119 = vmatpush1.msra.mxu0 %v1971
        %2120 = vmatprep.subr.mxu0 0.0
        %2121 = vmatpush1.msra.mxu0 %v1970
        %2122 = vmatprep.subr.mxu0 0.0
        %2123 = vmatpush1.msra.mxu0 %v1969
        %2124 = vmatprep.subr.mxu0 0.0
        %2125 = vmatpush1.msra.mxu0 %v1968
        %2126 = vmatprep.subr.mxu0 0.0
        %2127 = vmatpush1.msra.mxu0 %v1967
        %2128 = vmatprep.subr.mxu0 0.0
        %2129 = vmatpush1.msra.mxu0 %v1966
        %2130 = vmatprep.subr.mxu0 0.0
        %2131 = vmatpush1.msra.mxu0 %v1965
        %2132 = vmatprep.subr.mxu0 0.0
        %2133 = vmatpush1.msra.mxu0 %v1964
        %2134 = vmatprep.subr.mxu0 0.0
        %2135 = vmatpush1.msra.mxu0 %v1963
        %2136 = vmatprep.subr.mxu0 0.0
        %2137 = vmatpush1.msra.mxu0 %v1962
        %2138 = vmatprep.subr.mxu0 0.0
        %2139 = vmatpush1.msra.mxu0 %v1961
        %2140 = vmatprep.subr.mxu0 0.0
        %2141 = vmatpush2.msra.mxu0 %v1992
        %2142 = vmatprep.subr.mxu0 0.0
        %2143 = vmatpush2.msra.mxu0 %v1991
        %2144 = vmatprep.subr.mxu0 0.0
        %2145 = vmatpush2.msra.mxu0 %v1990
        %2146 = vmatprep.subr.mxu0 0.0
        %2147 = vmatpush2.msra.mxu0 %v1989
        %2148 = vmatprep.subr.mxu0 0.0
        %2149 = vmatpush2.msra.mxu0 %v1988
        %2150 = vmatprep.subr.mxu0 0.0
        %2151 = vmatpush2.msra.mxu0 %v1987
        %2152 = vmatprep.subr.mxu0 0.0
        %2153 = vmatpush2.msra.mxu0 %v1986
        %2154 = vmatprep.subr.mxu0 0.0
        %2155 = vmatpush2.msra.mxu0 %v1985
        %2156 = vmatprep.subr.mxu0 0.0
        %2157 = vmatpush2.msra.mxu0 %v1984
        %2158 = vmatprep.subr.mxu0 0.0
        %2159 = vmatpush2.msra.mxu0 %v1983
        %2160 = vmatprep.subr.mxu0 0.0
        %2161 = vmatpush2.msra.mxu0 %v1982
        %2162 = vmatprep.subr.mxu0 0.0
        %2163 = vmatpush2.msra.mxu0 %v1981
        %2164 = vmatprep.subr.mxu0 0.0
        %2165 = vmatpush2.msra.mxu0 %v1980
        %2166 = vmatprep.subr.mxu0 0.0
        %2167 = vmatpush2.msra.mxu0 %v1979
        %2168 = vmatprep.subr.mxu0 0.0
        %2169 = vmatpush2.msra.mxu0 %v1978
        %2170 = vmatprep.subr.mxu0 0.0
        %2171 = vmatpush2.msra.mxu0 %v1977
        %2172 = vmatprep.mubr.f32.mxu0 %v2016
        %2173 = vmatmul.mubr.f32.gmra.mxu0 %v2013
        %v2174 = vpop.f32.mrf.mxu0
        %v2175 = vadd.f32 %v2100, %v2174
        %v2176 = vpop.f32.mrf.mxu0
        %2177 = vmatprep.mubr.f32.mxu0 %v2024
        %2178 = vmatmul.mubr.f32.gmra.mxu0 %v2022
        %v2179 = vpop.f32.mrf.mxu0
        %v2180 = vadd.f32 %v2105, %v2179
        %v2181 = vpop.f32.mrf.mxu0
        %2182 = vdwg.mxu0
        %2183 = vmatprep.subr.mxu0 0.0
        %2184 = vmatpush1.msra.mxu0 %v1871
        %2185 = vmatprep.subr.mxu0 0.0
        %2186 = vmatpush1.msra.mxu0 %v1870
        %2187 = vmatprep.subr.mxu0 0.0
        %2188 = vmatpush1.msra.mxu0 %v1869
        %2189 = vmatprep.subr.mxu0 0.0
        %2190 = vmatpush1.msra.mxu0 %v1868
        %2191 = vmatprep.subr.mxu0 0.0
        %2192 = vmatpush1.msra.mxu0 %v1867
        %2193 = vmatprep.subr.mxu0 0.0
        %2194 = vmatpush1.msra.mxu0 %v1866
        %2195 = vmatprep.subr.mxu0 0.0
        %2196 = vmatpush1.msra.mxu0 %v1865
        %2197 = vmatprep.subr.mxu0 0.0
        %2198 = vmatpush1.msra.mxu0 %v1864
        %2199 = vmatprep.subr.mxu0 0.0
        %2200 = vmatpush1.msra.mxu0 %v1863
        %2201 = vmatprep.subr.mxu0 0.0
        %2202 = vmatpush1.msra.mxu0 %v1862
        %2203 = vmatprep.subr.mxu0 0.0
        %2204 = vmatpush1.msra.mxu0 %v1861
        %2205 = vmatprep.subr.mxu0 0.0
        %2206 = vmatpush1.msra.mxu0 %v1860
        %2207 = vmatprep.subr.mxu0 0.0
        %2208 = vmatpush1.msra.mxu0 %v1859
        %2209 = vmatprep.subr.mxu0 0.0
        %2210 = vmatpush1.msra.mxu0 %v1858
        %2211 = vmatprep.subr.mxu0 0.0
        %2212 = vmatpush1.msra.mxu0 %v1857
        %2213 = vmatprep.subr.mxu0 0.0
        %2214 = vmatpush1.msra.mxu0 %v1856
        %2215 = vmatprep.subr.mxu0 0.0
        %2216 = vmatpush2.msra.mxu0 %v1887
        %2217 = vmatprep.subr.mxu0 0.0
        %2218 = vmatpush2.msra.mxu0 %v1886
        %2219 = vmatprep.subr.mxu0 0.0
        %2220 = vmatpush2.msra.mxu0 %v1885
        %2221 = vmatprep.subr.mxu0 0.0
        %2222 = vmatpush2.msra.mxu0 %v1884
        %2223 = vmatprep.subr.mxu0 0.0
        %2224 = vmatpush2.msra.mxu0 %v1883
        %2225 = vmatprep.subr.mxu0 0.0
        %2226 = vmatpush2.msra.mxu0 %v1882
        %2227 = vmatprep.subr.mxu0 0.0
        %2228 = vmatpush2.msra.mxu0 %v1881
        %2229 = vmatprep.subr.mxu0 0.0
        %2230 = vmatpush2.msra.mxu0 %v1880
        %2231 = vmatprep.subr.mxu0 0.0
        %2232 = vmatpush2.msra.mxu0 %v1879
        %2233 = vmatprep.subr.mxu0 0.0
        %2234 = vmatpush2.msra.mxu0 %v1878
        %2235 = vmatprep.subr.mxu0 0.0
        %2236 = vmatpush2.msra.mxu0 %v1877
        %2237 = vmatprep.subr.mxu0 0.0
        %2238 = vmatpush2.msra.mxu0 %v1876
        %2239 = vmatprep.subr.mxu0 0.0
        %2240 = vmatpush2.msra.mxu0 %v1875
        %2241 = vmatprep.subr.mxu0 0.0
        %2242 = vmatpush2.msra.mxu0 %v1874
        %2243 = vmatprep.subr.mxu0 0.0
        %2244 = vmatpush2.msra.mxu0 %v1873
        %2245 = vmatprep.subr.mxu0 0.0
        %2246 = vmatpush2.msra.mxu0 %v1872
        %2247 = vmatprep.mubr.f32.mxu0 %v1848
        %2248 = vmatmul.mubr.f32.gmra.mxu0 %v1847
        %v2249 = vpop.f32.mrf.mxu0
        %v2250 = vadd.f32 %v2175, %v2249
        %v2251 = vpop.f32.mrf.mxu0
        %2252 = vmatprep.mubr.f32.mxu0 %v1852
        %2253 = vmatmul.mubr.f32.gmra.mxu0 %v1851
        %v2254 = vpop.f32.mrf.mxu0
        %v2255 = vadd.f32 %v2180, %v2254
        %v2256 = vpop.f32.mrf.mxu0
        %2257 = vdwg.mxu0
        %2258 = vmatprep.subr.mxu0 0.0
        %2259 = vmatpush1.msra.mxu0 %v1903
        %2260 = vmatprep.subr.mxu0 0.0
        %2261 = vmatpush1.msra.mxu0 %v1902
        %2262 = vmatprep.subr.mxu0 0.0
        %2263 = vmatpush1.msra.mxu0 %v1901
        %2264 = vmatprep.subr.mxu0 0.0
        %2265 = vmatpush1.msra.mxu0 %v1900
        %2266 = vmatprep.subr.mxu0 0.0
        %2267 = vmatpush1.msra.mxu0 %v1899
        %2268 = vmatprep.subr.mxu0 0.0
        %2269 = vmatpush1.msra.mxu0 %v1898
        %2270 = vmatprep.subr.mxu0 0.0
        %2271 = vmatpush1.msra.mxu0 %v1897
        %2272 = vmatprep.subr.mxu0 0.0
        %2273 = vmatpush1.msra.mxu0 %v1896
        %2274 = vmatprep.subr.mxu0 0.0
        %2275 = vmatpush1.msra.mxu0 %v1895
        %2276 = vmatprep.subr.mxu0 0.0
        %2277 = vmatpush1.msra.mxu0 %v1894
        %2278 = vmatprep.subr.mxu0 0.0
        %2279 = vmatpush1.msra.mxu0 %v1893
        %2280 = vmatprep.subr.mxu0 0.0
        %2281 = vmatpush1.msra.mxu0 %v1892
        %2282 = vmatprep.subr.mxu0 0.0
        %2283 = vmatpush1.msra.mxu0 %v1891
        %2284 = vmatprep.subr.mxu0 0.0
        %2285 = vmatpush1.msra.mxu0 %v1890
        %2286 = vmatprep.subr.mxu0 0.0
        %2287 = vmatpush1.msra.mxu0 %v1889
        %2288 = vmatprep.subr.mxu0 0.0
        %2289 = vmatpush1.msra.mxu0 %v1888
        %2290 = vmatprep.subr.mxu0 0.0
        %2291 = vmatpush2.msra.mxu0 %v1919
        %2292 = vmatprep.subr.mxu0 0.0
        %2293 = vmatpush2.msra.mxu0 %v1918
        %2294 = vmatprep.subr.mxu0 0.0
        %2295 = vmatpush2.msra.mxu0 %v1917
        %2296 = vmatprep.subr.mxu0 0.0
        %2297 = vmatpush2.msra.mxu0 %v1916
        %2298 = vmatprep.subr.mxu0 0.0
        %2299 = vmatpush2.msra.mxu0 %v1915
        %2300 = vmatprep.subr.mxu0 0.0
        %2301 = vmatpush2.msra.mxu0 %v1914
        %2302 = vmatprep.subr.mxu0 0.0
        %2303 = vmatpush2.msra.mxu0 %v1913
        %2304 = vmatprep.subr.mxu0 0.0
        %2305 = vmatpush2.msra.mxu0 %v1912
        %2306 = vmatprep.subr.mxu0 0.0
        %2307 = vmatpush2.msra.mxu0 %v1911
        %2308 = vmatprep.subr.mxu0 0.0
        %2309 = vmatpush2.msra.mxu0 %v1910
        %2310 = vmatprep.subr.mxu0 0.0
        %2311 = vmatpush2.msra.mxu0 %v1909
        %2312 = vmatprep.subr.mxu0 0.0
        %2313 = vmatpush2.msra.mxu0 %v1908
        %2314 = vmatprep.subr.mxu0 0.0
        %2315 = vmatpush2.msra.mxu0 %v1907
        %2316 = vmatprep.subr.mxu0 0.0
        %2317 = vmatpush2.msra.mxu0 %v1906
        %2318 = vmatprep.subr.mxu0 0.0
        %2319 = vmatpush2.msra.mxu0 %v1905
        %2320 = vmatprep.subr.mxu0 0.0
        %2321 = vmatpush2.msra.mxu0 %v1904
        %2322 = vmatprep.mubr.f32.mxu0 %v1850
        %2323 = vmatmul.mubr.f32.gmra.mxu0 %v1849
        %v2324 = vpop.f32.mrf.mxu0
        %v2325 = vadd.f32 %v2250, %v2324
        %v2326 = vpop.f32.mrf.mxu0
        %2327 = vmatprep.mubr.f32.mxu0 %v1854
        %2328 = vmatmul.mubr.f32.gmra.mxu0 %v1853
        %v2329 = vpop.f32.mrf.mxu0
        %v2330 = vadd.f32 %v2255, %v2329
        %v2331 = vpop.f32.mrf.mxu0
        %2332 = vdwg.mxu0
        %v2333 = vld [vmem:[#allocation2] sm:$0xfc]
        %v2334 = vld [vmem:[#allocation2 + $0x8] sm:$0xfc]
        %v2335 = vld [vmem:[#allocation2 + $0x10] sm:$0xfc]
        %v2336 = vld [vmem:[#allocation2 + $0x18] sm:$0xfc]
        %v2337 = vld [vmem:[#allocation2 + $0x40] sm:$0x3]
        %v2338 = vld [vmem:[#allocation2 + $0x48] sm:$0x3]
        %v2339 = vld [vmem:[#allocation2 + $0x50] sm:$0x3]
        %v2340 = vld [vmem:[#allocation2 + $0x58] sm:$0x3]
        %s2341 = scalar_lea.vmem [#allocation3], 4096
        %v2342 = vld [vmem:[%s2341] sm:$0xff]
        %v2343 = vld [vmem:[%s2341 + $0x8] sm:$0xff]
        %v2344 = vld [vmem:[%s2341 + $0x10] sm:$0xff]
        %v2345 = vld [vmem:[%s2341 + $0x18] sm:$0xff]
        %v2346 = vld [vmem:[%s2341 + $0x20] sm:$0xff]
        %v2347 = vld [vmem:[%s2341 + $0x28] sm:$0xff]
        %v2348 = vld [vmem:[%s2341 + $0x30] sm:$0xff]
        %v2349 = vld [vmem:[%s2341 + $0x38] sm:$0xff]
        %v2350 = vld [vmem:[%s2341 + $0x40] sm:$0xff]
        %v2351 = vld [vmem:[%s2341 + $0x48] sm:$0xff]
        %v2352 = vld [vmem:[%s2341 + $0x50] sm:$0xff]
        %v2353 = vld [vmem:[%s2341 + $0x58] sm:$0xff]
        %v2354 = vld [vmem:[%s2341 + $0x60] sm:$0xff]
        %v2355 = vld [vmem:[%s2341 + $0x68] sm:$0xff]
        %v2356 = vld [vmem:[%s2341 + $0x70] sm:$0xff]
        %v2357 = vld [vmem:[%s2341 + $0x78] sm:$0xff]
        %v2358 = vld [vmem:[%s2341 + $0x80] sm:$0xff]
        %v2359 = vld [vmem:[%s2341 + $0x88] sm:$0xff]
        %v2360 = vld [vmem:[%s2341 + $0x90] sm:$0xff]
        %v2361 = vld [vmem:[%s2341 + $0x98] sm:$0xff]
        %v2362 = vld [vmem:[%s2341 + $0xa0] sm:$0xff]
        %v2363 = vld [vmem:[%s2341 + $0xa8] sm:$0xff]
        %v2364 = vld [vmem:[%s2341 + $0xb0] sm:$0xff]
        %v2365 = vld [vmem:[%s2341 + $0xb8] sm:$0xff]
        %v2366 = vld [vmem:[%s2341 + $0xc0] sm:$0xff]
        %v2367 = vld [vmem:[%s2341 + $0xc8] sm:$0xff]
        %v2368 = vld [vmem:[%s2341 + $0xd0] sm:$0xff]
        %v2369 = vld [vmem:[%s2341 + $0xd8] sm:$0xff]
        %v2370 = vld [vmem:[%s2341 + $0xe0] sm:$0xff]
        %v2371 = vld [vmem:[%s2341 + $0xe8] sm:$0xff]
        %v2372 = vld [vmem:[%s2341 + $0xf0] sm:$0xff]
        %v2373 = vld [vmem:[%s2341 + $0xf8] sm:$0xff]
        %v2374 = vld [vmem:[%s2341 + $0x100] sm:$0xff]
        %v2375 = vld [vmem:[%s2341 + $0x108] sm:$0xff]
        %v2376 = vld [vmem:[%s2341 + $0x110] sm:$0xff]
        %v2377 = vld [vmem:[%s2341 + $0x118] sm:$0xff]
        %v2378 = vld [vmem:[%s2341 + $0x120] sm:$0xff]
        %v2379 = vld [vmem:[%s2341 + $0x128] sm:$0xff]
        %v2380 = vld [vmem:[%s2341 + $0x130] sm:$0xff]
        %v2381 = vld [vmem:[%s2341 + $0x138] sm:$0xff]
        %v2382 = vld [vmem:[%s2341 + $0x140] sm:$0xff]
        %v2383 = vld [vmem:[%s2341 + $0x148] sm:$0xff]
        %v2384 = vld [vmem:[%s2341 + $0x150] sm:$0xff]
        %v2385 = vld [vmem:[%s2341 + $0x158] sm:$0xff]
        %v2386 = vld [vmem:[%s2341 + $0x160] sm:$0xff]
        %v2387 = vld [vmem:[%s2341 + $0x168] sm:$0xff]
        %v2388 = vld [vmem:[%s2341 + $0x170] sm:$0xff]
        %v2389 = vld [vmem:[%s2341 + $0x178] sm:$0xff]
        %v2390 = vld [vmem:[%s2341 + $0x180] sm:$0xff]
        %v2391 = vld [vmem:[%s2341 + $0x188] sm:$0xff]
        %v2392 = vld [vmem:[%s2341 + $0x190] sm:$0xff]
        %v2393 = vld [vmem:[%s2341 + $0x198] sm:$0xff]
        %v2394 = vld [vmem:[%s2341 + $0x1a0] sm:$0xff]
        %v2395 = vld [vmem:[%s2341 + $0x1a8] sm:$0xff]
        %v2396 = vld [vmem:[%s2341 + $0x1b0] sm:$0xff]
        %v2397 = vld [vmem:[%s2341 + $0x1b8] sm:$0xff]
        %v2398 = vld [vmem:[%s2341 + $0x1c0] sm:$0xff]
        %v2399 = vld [vmem:[%s2341 + $0x1c8] sm:$0xff]
        %v2400 = vld [vmem:[%s2341 + $0x1d0] sm:$0xff]
        %v2401 = vld [vmem:[%s2341 + $0x1d8] sm:$0xff]
        %v2402 = vld [vmem:[%s2341 + $0x1e0] sm:$0xff]
        %v2403 = vld [vmem:[%s2341 + $0x1e8] sm:$0xff]
        %v2404 = vld [vmem:[%s2341 + $0x1f0] sm:$0xff]
        %v2405 = vld [vmem:[%s2341 + $0x1f8] sm:$0xff]
        %v2414 = vrot.slane %v2333, 2
        %v2415 = vrot.slane %v1851, 2
        %v2416 = vsel %vm873, %v2414, %v2415
        %v2417 = vrot.slane %v2334, 2
        %v2418 = vrot.slane %v1852, 2
        %v2419 = vsel %vm873, %v2417, %v2418
        %v2420 = vrot.slane %v2335, 2
        %v2421 = vrot.slane %v1853, 2
        %v2422 = vsel %vm873, %v2420, %v2421
        %v2423 = vrot.slane %v2336, 2
        %v2424 = vrot.slane %v1854, 2
        %v2425 = vsel %vm873, %v2423, %v2424
        %v2426 = vrot.slane %v2337, 2
        %v2427 = vsel %vm873, %v2415, %v2426
        %v2428 = vrot.slane %v2338, 2
        %v2429 = vsel %vm873, %v2418, %v2428
        %v2430 = vrot.slane %v2339, 2
        %v2431 = vsel %vm873, %v2421, %v2430
        %v2432 = vrot.slane %v2340, 2
        %v2433 = vsel %vm873, %v2424, %v2432
        %2442 = vmatprep.subr.mxu0 0.0
        %2443 = vmatpush1.msra.mxu0 %v2357
        %2444 = vmatprep.subr.mxu0 0.0
        %2445 = vmatpush1.msra.mxu0 %v2356
        %2446 = vmatprep.subr.mxu0 0.0
        %2447 = vmatpush1.msra.mxu0 %v2355
        %2448 = vmatprep.subr.mxu0 0.0
        %2449 = vmatpush1.msra.mxu0 %v2354
        %2450 = vmatprep.subr.mxu0 0.0
        %2451 = vmatpush1.msra.mxu0 %v2353
        %2452 = vmatprep.subr.mxu0 0.0
        %2453 = vmatpush1.msra.mxu0 %v2352
        %2454 = vmatprep.subr.mxu0 0.0
        %2455 = vmatpush1.msra.mxu0 %v2351
        %2456 = vmatprep.subr.mxu0 0.0
        %2457 = vmatpush1.msra.mxu0 %v2350
        %2458 = vmatprep.subr.mxu0 0.0
        %2459 = vmatpush1.msra.mxu0 %v2349
        %2460 = vmatprep.subr.mxu0 0.0
        %2461 = vmatpush1.msra.mxu0 %v2348
        %2462 = vmatprep.subr.mxu0 0.0
        %2463 = vmatpush1.msra.mxu0 %v2347
        %2464 = vmatprep.subr.mxu0 0.0
        %2465 = vmatpush1.msra.mxu0 %v2346
        %2466 = vmatprep.subr.mxu0 0.0
        %2467 = vmatpush1.msra.mxu0 %v2345
        %2468 = vmatprep.subr.mxu0 0.0
        %2469 = vmatpush1.msra.mxu0 %v2344
        %2470 = vmatprep.subr.mxu0 0.0
        %2471 = vmatpush1.msra.mxu0 %v2343
        %2472 = vmatprep.subr.mxu0 0.0
        %2473 = vmatpush1.msra.mxu0 %v2342
        %2474 = vmatprep.subr.mxu0 0.0
        %2475 = vmatpush2.msra.mxu0 %v2373
        %2476 = vmatprep.subr.mxu0 0.0
        %2477 = vmatpush2.msra.mxu0 %v2372
        %2478 = vmatprep.subr.mxu0 0.0
        %2479 = vmatpush2.msra.mxu0 %v2371
        %2480 = vmatprep.subr.mxu0 0.0
        %2481 = vmatpush2.msra.mxu0 %v2370
        %2482 = vmatprep.subr.mxu0 0.0
        %2483 = vmatpush2.msra.mxu0 %v2369
        %2484 = vmatprep.subr.mxu0 0.0
        %2485 = vmatpush2.msra.mxu0 %v2368
        %2486 = vmatprep.subr.mxu0 0.0
        %2487 = vmatpush2.msra.mxu0 %v2367
        %2488 = vmatprep.subr.mxu0 0.0
        %2489 = vmatpush2.msra.mxu0 %v2366
        %2490 = vmatprep.subr.mxu0 0.0
        %2491 = vmatpush2.msra.mxu0 %v2365
        %2492 = vmatprep.subr.mxu0 0.0
        %2493 = vmatpush2.msra.mxu0 %v2364
        %2494 = vmatprep.subr.mxu0 0.0
        %2495 = vmatpush2.msra.mxu0 %v2363
        %2496 = vmatprep.subr.mxu0 0.0
        %2497 = vmatpush2.msra.mxu0 %v2362
        %2498 = vmatprep.subr.mxu0 0.0
        %2499 = vmatpush2.msra.mxu0 %v2361
        %2500 = vmatprep.subr.mxu0 0.0
        %2501 = vmatpush2.msra.mxu0 %v2360
        %2502 = vmatprep.subr.mxu0 0.0
        %2503 = vmatpush2.msra.mxu0 %v2359
        %2504 = vmatprep.subr.mxu0 0.0
        %2505 = vmatpush2.msra.mxu0 %v2358
        %2506 = vmatprep.mubr.f32.mxu0 %v2419
        %2507 = vmatmul.mubr.f32.gmra.mxu0 %v2416
        %v2508 = vpop.f32.mrf.mxu0
        %v2509 = vadd.f32 0.0, %v2508
        %v2510 = vpop.f32.mrf.mxu0
        %2511 = vmatprep.mubr.f32.mxu0 %v2429
        %2512 = vmatmul.mubr.f32.gmra.mxu0 %v2427
        %v2513 = vpop.f32.mrf.mxu0
        %v2514 = vadd.f32 0.0, %v2513
        %v2515 = vpop.f32.mrf.mxu0
        %2516 = vdwg.mxu0
        %2517 = vmatprep.subr.mxu0 0.0
        %2518 = vmatpush1.msra.mxu0 %v2389
        %2519 = vmatprep.subr.mxu0 0.0
        %2520 = vmatpush1.msra.mxu0 %v2388
        %2521 = vmatprep.subr.mxu0 0.0
        %2522 = vmatpush1.msra.mxu0 %v2387
        %2523 = vmatprep.subr.mxu0 0.0
        %2524 = vmatpush1.msra.mxu0 %v2386
        %2525 = vmatprep.subr.mxu0 0.0
        %2526 = vmatpush1.msra.mxu0 %v2385
        %2527 = vmatprep.subr.mxu0 0.0
        %2528 = vmatpush1.msra.mxu0 %v2384
        %2529 = vmatprep.subr.mxu0 0.0
        %2530 = vmatpush1.msra.mxu0 %v2383
        %2531 = vmatprep.subr.mxu0 0.0
        %2532 = vmatpush1.msra.mxu0 %v2382
        %2533 = vmatprep.subr.mxu0 0.0
        %2534 = vmatpush1.msra.mxu0 %v2381
        %2535 = vmatprep.subr.mxu0 0.0
        %2536 = vmatpush1.msra.mxu0 %v2380
        %2537 = vmatprep.subr.mxu0 0.0
        %2538 = vmatpush1.msra.mxu0 %v2379
        %2539 = vmatprep.subr.mxu0 0.0
        %2540 = vmatpush1.msra.mxu0 %v2378
        %2541 = vmatprep.subr.mxu0 0.0
        %2542 = vmatpush1.msra.mxu0 %v2377
        %2543 = vmatprep.subr.mxu0 0.0
        %2544 = vmatpush1.msra.mxu0 %v2376
        %2545 = vmatprep.subr.mxu0 0.0
        %2546 = vmatpush1.msra.mxu0 %v2375
        %2547 = vmatprep.subr.mxu0 0.0
        %2548 = vmatpush1.msra.mxu0 %v2374
        %2549 = vmatprep.subr.mxu0 0.0
        %2550 = vmatpush2.msra.mxu0 %v2405
        %2551 = vmatprep.subr.mxu0 0.0
        %2552 = vmatpush2.msra.mxu0 %v2404
        %2553 = vmatprep.subr.mxu0 0.0
        %2554 = vmatpush2.msra.mxu0 %v2403
        %2555 = vmatprep.subr.mxu0 0.0
        %2556 = vmatpush2.msra.mxu0 %v2402
        %2557 = vmatprep.subr.mxu0 0.0
        %2558 = vmatpush2.msra.mxu0 %v2401
        %2559 = vmatprep.subr.mxu0 0.0
        %2560 = vmatpush2.msra.mxu0 %v2400
        %2561 = vmatprep.subr.mxu0 0.0
        %2562 = vmatpush2.msra.mxu0 %v2399
        %2563 = vmatprep.subr.mxu0 0.0
        %2564 = vmatpush2.msra.mxu0 %v2398
        %2565 = vmatprep.subr.mxu0 0.0
        %2566 = vmatpush2.msra.mxu0 %v2397
        %2567 = vmatprep.subr.mxu0 0.0
        %2568 = vmatpush2.msra.mxu0 %v2396
        %2569 = vmatprep.subr.mxu0 0.0
        %2570 = vmatpush2.msra.mxu0 %v2395
        %2571 = vmatprep.subr.mxu0 0.0
        %2572 = vmatpush2.msra.mxu0 %v2394
        %2573 = vmatprep.subr.mxu0 0.0
        %2574 = vmatpush2.msra.mxu0 %v2393
        %2575 = vmatprep.subr.mxu0 0.0
        %2576 = vmatpush2.msra.mxu0 %v2392
        %2577 = vmatprep.subr.mxu0 0.0
        %2578 = vmatpush2.msra.mxu0 %v2391
        %2579 = vmatprep.subr.mxu0 0.0
        %2580 = vmatpush2.msra.mxu0 %v2390
        %2581 = vmatprep.mubr.f32.mxu0 %v2425
        %2582 = vmatmul.mubr.f32.gmra.mxu0 %v2422
        %v2583 = vpop.f32.mrf.mxu0
        %v2584 = vadd.f32 %v2509, %v2583
        %v2585 = vpop.f32.mrf.mxu0
        %2586 = vmatprep.mubr.f32.mxu0 %v2433
        %2587 = vmatmul.mubr.f32.gmra.mxu0 %v2431
        %v2588 = vpop.f32.mrf.mxu0
        %v2589 = vadd.f32 %v2514, %v2588
        %v2590 = vpop.f32.mrf.mxu0
        %2591 = vdwg.mxu0
        %v2592 = vadd.f32 %v2325, %v2584
        %v2593 = vadd.f32 %v2330, %v2589
        %s2594 = scalar_lea.vmem [#allocation5], 2
        %v2595 = vld [vmem:[%s2594] sm:$0x1]
        %v2597 = vlaneseq
        %v2598 = vshrl.u32 %v2597, 7
        %v2599 = vsub.s32 0, %v2598
        %v2600 = vrot.slane %v2595, %v2599
        %v2602 = vadd.f32 %v2592, %v2600
        %v2603 = vadd.f32 %v2593, %v2600
        %v2604 = vmax.f32 %v2602, 0.0
        %v2605 = vmax.f32 %v2603, 0.0
        %v2608 = vrot.slane %v2604, 7
        %v2609 = vrot.slane %v2605, 7
        %v2610 = vsel %vm1067, %v2608, %v2609
        %2614 = vst [vmem:[#allocation2 + $0x18] sm:$0xfe] %v2608
        %2615 = vst [vmem:[#allocation2 + $0x38] sm:$0xff] %v2610
        %2616 = vst [vmem:[#allocation2 + $0x58] sm:$0x1] %v2609
        %v2617 = vld [vmem:[#allocation2] sm:$0xfe]
        %v2618 = vld [vmem:[#allocation2 + $0x8] sm:$0xfe]
        %v2619 = vld [vmem:[#allocation2 + $0x10] sm:$0xfe]
        %v2620 = vld [vmem:[#allocation2 + $0x18] sm:$0xfe]
        %v2621 = vld [vmem:[#allocation2 + $0x20] sm:$0xff]
        %v2622 = vld [vmem:[#allocation2 + $0x28] sm:$0xff]
        %v2623 = vld [vmem:[#allocation2 + $0x30] sm:$0xff]
        %v2624 = vld [vmem:[#allocation2 + $0x38] sm:$0xff]
        %v2625 = vld [vmem:[#allocation2 + $0x40] sm:$0x1]
        %v2626 = vld [vmem:[#allocation2 + $0x48] sm:$0x1]
        %v2627 = vld [vmem:[#allocation2 + $0x50] sm:$0x1]
        %v2628 = vld [vmem:[#allocation2 + $0x58] sm:$0x1]
        %v2629 = vld [vmem:[#allocation7] sm:$0xff]
        %v2630 = vld [vmem:[#allocation7 + $0x8] sm:$0xff]
        %v2631 = vld [vmem:[#allocation7 + $0x10] sm:$0xff]
        %v2632 = vld [vmem:[#allocation7 + $0x18] sm:$0xff]
        %v2633 = vld [vmem:[#allocation7 + $0x20] sm:$0xff]
        %v2634 = vld [vmem:[#allocation7 + $0x28] sm:$0xff]
        %v2635 = vld [vmem:[#allocation7 + $0x30] sm:$0xff]
        %v2636 = vld [vmem:[#allocation7 + $0x38] sm:$0xff]
        %v2637 = vld [vmem:[#allocation7 + $0x40] sm:$0xff]
        %v2638 = vld [vmem:[#allocation7 + $0x48] sm:$0xff]
        %v2639 = vld [vmem:[#allocation7 + $0x50] sm:$0xff]
        %v2640 = vld [vmem:[#allocation7 + $0x58] sm:$0xff]
        %v2641 = vld [vmem:[#allocation7 + $0x60] sm:$0xff]
        %v2642 = vld [vmem:[#allocation7 + $0x68] sm:$0xff]
        %v2643 = vld [vmem:[#allocation7 + $0x70] sm:$0xff]
        %v2644 = vld [vmem:[#allocation7 + $0x78] sm:$0xff]
        %v2645 = vld [vmem:[#allocation7 + $0x80] sm:$0xff]
        %v2646 = vld [vmem:[#allocation7 + $0x88] sm:$0xff]
        %v2647 = vld [vmem:[#allocation7 + $0x90] sm:$0xff]
        %v2648 = vld [vmem:[#allocation7 + $0x98] sm:$0xff]
        %v2649 = vld [vmem:[#allocation7 + $0xa0] sm:$0xff]
        %v2650 = vld [vmem:[#allocation7 + $0xa8] sm:$0xff]
        %v2651 = vld [vmem:[#allocation7 + $0xb0] sm:$0xff]
        %v2652 = vld [vmem:[#allocation7 + $0xb8] sm:$0xff]
        %v2653 = vld [vmem:[#allocation7 + $0xc0] sm:$0xff]
        %v2654 = vld [vmem:[#allocation7 + $0xc8] sm:$0xff]
        %v2655 = vld [vmem:[#allocation7 + $0xd0] sm:$0xff]
        %v2656 = vld [vmem:[#allocation7 + $0xd8] sm:$0xff]
        %v2657 = vld [vmem:[#allocation7 + $0xe0] sm:$0xff]
        %v2658 = vld [vmem:[#allocation7 + $0xe8] sm:$0xff]
        %v2659 = vld [vmem:[#allocation7 + $0xf0] sm:$0xff]
        %v2660 = vld [vmem:[#allocation7 + $0xf8] sm:$0xff]
        %v2661 = vld [vmem:[#allocation7 + $0x100] sm:$0xff]
        %v2662 = vld [vmem:[#allocation7 + $0x108] sm:$0xff]
        %v2663 = vld [vmem:[#allocation7 + $0x110] sm:$0xff]
        %v2664 = vld [vmem:[#allocation7 + $0x118] sm:$0xff]
        %v2665 = vld [vmem:[#allocation7 + $0x120] sm:$0xff]
        %v2666 = vld [vmem:[#allocation7 + $0x128] sm:$0xff]
        %v2667 = vld [vmem:[#allocation7 + $0x130] sm:$0xff]
        %v2668 = vld [vmem:[#allocation7 + $0x138] sm:$0xff]
        %v2669 = vld [vmem:[#allocation7 + $0x140] sm:$0xff]
        %v2670 = vld [vmem:[#allocation7 + $0x148] sm:$0xff]
        %v2671 = vld [vmem:[#allocation7 + $0x150] sm:$0xff]
        %v2672 = vld [vmem:[#allocation7 + $0x158] sm:$0xff]
        %v2673 = vld [vmem:[#allocation7 + $0x160] sm:$0xff]
        %v2674 = vld [vmem:[#allocation7 + $0x168] sm:$0xff]
        %v2675 = vld [vmem:[#allocation7 + $0x170] sm:$0xff]
        %v2676 = vld [vmem:[#allocation7 + $0x178] sm:$0xff]
        %v2677 = vld [vmem:[#allocation7 + $0x180] sm:$0xff]
        %v2678 = vld [vmem:[#allocation7 + $0x188] sm:$0xff]
        %v2679 = vld [vmem:[#allocation7 + $0x190] sm:$0xff]
        %v2680 = vld [vmem:[#allocation7 + $0x198] sm:$0xff]
        %v2681 = vld [vmem:[#allocation7 + $0x1a0] sm:$0xff]
        %v2682 = vld [vmem:[#allocation7 + $0x1a8] sm:$0xff]
        %v2683 = vld [vmem:[#allocation7 + $0x1b0] sm:$0xff]
        %v2684 = vld [vmem:[#allocation7 + $0x1b8] sm:$0xff]
        %v2685 = vld [vmem:[#allocation7 + $0x1c0] sm:$0xff]
        %v2686 = vld [vmem:[#allocation7 + $0x1c8] sm:$0xff]
        %v2687 = vld [vmem:[#allocation7 + $0x1d0] sm:$0xff]
        %v2688 = vld [vmem:[#allocation7 + $0x1d8] sm:$0xff]
        %v2689 = vld [vmem:[#allocation7 + $0x1e0] sm:$0xff]
        %v2690 = vld [vmem:[#allocation7 + $0x1e8] sm:$0xff]
        %v2691 = vld [vmem:[#allocation7 + $0x1f0] sm:$0xff]
        %v2692 = vld [vmem:[#allocation7 + $0x1f8] sm:$0xff]
        %v2693 = vld [vmem:[#allocation8] sm:$0x1]
        %v2695 = vlaneseq
        %v2696 = vshrl.u32 %v2695, 7
        %v2697 = vsub.s32 0, %v2696
        %v2698 = vrot.slane %v2693, %v2697
        %v2712 = vrot.slane %v2617, 1
        %v2713 = vrot.slane %v2621, 1
        %v2714 = vsel %vm463, %v2712, %v2713
        %v2715 = vrot.slane %v2618, 1
        %v2716 = vrot.slane %v2622, 1
        %v2717 = vsel %vm463, %v2715, %v2716
        %v2718 = vrot.slane %v2619, 1
        %v2719 = vrot.slane %v2623, 1
        %v2720 = vsel %vm463, %v2718, %v2719
        %v2721 = vrot.slane %v2620, 1
        %v2722 = vrot.slane %v2624, 1
        %v2723 = vsel %vm463, %v2721, %v2722
        %v2724 = vrot.slane %v2625, 1
        %v2725 = vsel %vm463, %v2713, %v2724
        %v2726 = vrot.slane %v2626, 1
        %v2727 = vsel %vm463, %v2716, %v2726
        %v2728 = vrot.slane %v2627, 1
        %v2729 = vsel %vm463, %v2719, %v2728
        %v2730 = vrot.slane %v2628, 1
        %v2731 = vsel %vm463, %v2722, %v2730
        %2740 = vmatprep.subr.mxu0 0.0
        %2741 = vmatpush1.msra.mxu0 %v2644
        %2742 = vmatprep.subr.mxu0 0.0
        %2743 = vmatpush1.msra.mxu0 %v2643
        %2744 = vmatprep.subr.mxu0 0.0
        %2745 = vmatpush1.msra.mxu0 %v2642
        %2746 = vmatprep.subr.mxu0 0.0
        %2747 = vmatpush1.msra.mxu0 %v2641
        %2748 = vmatprep.subr.mxu0 0.0
        %2749 = vmatpush1.msra.mxu0 %v2640
        %2750 = vmatprep.subr.mxu0 0.0
        %2751 = vmatpush1.msra.mxu0 %v2639
        %2752 = vmatprep.subr.mxu0 0.0
        %2753 = vmatpush1.msra.mxu0 %v2638
        %2754 = vmatprep.subr.mxu0 0.0
        %2755 = vmatpush1.msra.mxu0 %v2637
        %2756 = vmatprep.subr.mxu0 0.0
        %2757 = vmatpush1.msra.mxu0 %v2636
        %2758 = vmatprep.subr.mxu0 0.0
        %2759 = vmatpush1.msra.mxu0 %v2635
        %2760 = vmatprep.subr.mxu0 0.0
        %2761 = vmatpush1.msra.mxu0 %v2634
        %2762 = vmatprep.subr.mxu0 0.0
        %2763 = vmatpush1.msra.mxu0 %v2633
        %2764 = vmatprep.subr.mxu0 0.0
        %2765 = vmatpush1.msra.mxu0 %v2632
        %2766 = vmatprep.subr.mxu0 0.0
        %2767 = vmatpush1.msra.mxu0 %v2631
        %2768 = vmatprep.subr.mxu0 0.0
        %2769 = vmatpush1.msra.mxu0 %v2630
        %2770 = vmatprep.subr.mxu0 0.0
        %2771 = vmatpush1.msra.mxu0 %v2629
        %2772 = vmatprep.subr.mxu0 0.0
        %2773 = vmatpush2.msra.mxu0 %v2660
        %2774 = vmatprep.subr.mxu0 0.0
        %2775 = vmatpush2.msra.mxu0 %v2659
        %2776 = vmatprep.subr.mxu0 0.0
        %2777 = vmatpush2.msra.mxu0 %v2658
        %2778 = vmatprep.subr.mxu0 0.0
        %2779 = vmatpush2.msra.mxu0 %v2657
        %2780 = vmatprep.subr.mxu0 0.0
        %2781 = vmatpush2.msra.mxu0 %v2656
        %2782 = vmatprep.subr.mxu0 0.0
        %2783 = vmatpush2.msra.mxu0 %v2655
        %2784 = vmatprep.subr.mxu0 0.0
        %2785 = vmatpush2.msra.mxu0 %v2654
        %2786 = vmatprep.subr.mxu0 0.0
        %2787 = vmatpush2.msra.mxu0 %v2653
        %2788 = vmatprep.subr.mxu0 0.0
        %2789 = vmatpush2.msra.mxu0 %v2652
        %2790 = vmatprep.subr.mxu0 0.0
        %2791 = vmatpush2.msra.mxu0 %v2651
        %2792 = vmatprep.subr.mxu0 0.0
        %2793 = vmatpush2.msra.mxu0 %v2650
        %2794 = vmatprep.subr.mxu0 0.0
        %2795 = vmatpush2.msra.mxu0 %v2649
        %2796 = vmatprep.subr.mxu0 0.0
        %2797 = vmatpush2.msra.mxu0 %v2648
        %2798 = vmatprep.subr.mxu0 0.0
        %2799 = vmatpush2.msra.mxu0 %v2647
        %2800 = vmatprep.subr.mxu0 0.0
        %2801 = vmatpush2.msra.mxu0 %v2646
        %2802 = vmatprep.subr.mxu0 0.0
        %2803 = vmatpush2.msra.mxu0 %v2645
        %2804 = vmatprep.mubr.f32.mxu0 %v2717
        %2805 = vmatmul.mubr.f32.gmra.mxu0 %v2714
        %v2806 = vpop.f32.mrf.mxu0
        %v2807 = vadd.f32 %v2698, %v2806
        %v2808 = vpop.f32.mrf.mxu0
        %2809 = vmatprep.mubr.f32.mxu0 %v2727
        %2810 = vmatmul.mubr.f32.gmra.mxu0 %v2725
        %v2811 = vpop.f32.mrf.mxu0
        %v2812 = vadd.f32 %v2698, %v2811
        %v2813 = vpop.f32.mrf.mxu0
        %2814 = vdwg.mxu0
        %2815 = vmatprep.subr.mxu0 0.0
        %2816 = vmatpush1.msra.mxu0 %v2676
        %2817 = vmatprep.subr.mxu0 0.0
        %2818 = vmatpush1.msra.mxu0 %v2675
        %2819 = vmatprep.subr.mxu0 0.0
        %2820 = vmatpush1.msra.mxu0 %v2674
        %2821 = vmatprep.subr.mxu0 0.0
        %2822 = vmatpush1.msra.mxu0 %v2673
        %2823 = vmatprep.subr.mxu0 0.0
        %2824 = vmatpush1.msra.mxu0 %v2672
        %2825 = vmatprep.subr.mxu0 0.0
        %2826 = vmatpush1.msra.mxu0 %v2671
        %2827 = vmatprep.subr.mxu0 0.0
        %2828 = vmatpush1.msra.mxu0 %v2670
        %2829 = vmatprep.subr.mxu0 0.0
        %2830 = vmatpush1.msra.mxu0 %v2669
        %2831 = vmatprep.subr.mxu0 0.0
        %2832 = vmatpush1.msra.mxu0 %v2668
        %2833 = vmatprep.subr.mxu0 0.0
        %2834 = vmatpush1.msra.mxu0 %v2667
        %2835 = vmatprep.subr.mxu0 0.0
        %2836 = vmatpush1.msra.mxu0 %v2666
        %2837 = vmatprep.subr.mxu0 0.0
        %2838 = vmatpush1.msra.mxu0 %v2665
        %2839 = vmatprep.subr.mxu0 0.0
        %2840 = vmatpush1.msra.mxu0 %v2664
        %2841 = vmatprep.subr.mxu0 0.0
        %2842 = vmatpush1.msra.mxu0 %v2663
        %2843 = vmatprep.subr.mxu0 0.0
        %2844 = vmatpush1.msra.mxu0 %v2662
        %2845 = vmatprep.subr.mxu0 0.0
        %2846 = vmatpush1.msra.mxu0 %v2661
        %2847 = vmatprep.subr.mxu0 0.0
        %2848 = vmatpush2.msra.mxu0 %v2692
        %2849 = vmatprep.subr.mxu0 0.0
        %2850 = vmatpush2.msra.mxu0 %v2691
        %2851 = vmatprep.subr.mxu0 0.0
        %2852 = vmatpush2.msra.mxu0 %v2690
        %2853 = vmatprep.subr.mxu0 0.0
        %2854 = vmatpush2.msra.mxu0 %v2689
        %2855 = vmatprep.subr.mxu0 0.0
        %2856 = vmatpush2.msra.mxu0 %v2688
        %2857 = vmatprep.subr.mxu0 0.0
        %2858 = vmatpush2.msra.mxu0 %v2687
        %2859 = vmatprep.subr.mxu0 0.0
        %2860 = vmatpush2.msra.mxu0 %v2686
        %2861 = vmatprep.subr.mxu0 0.0
        %2862 = vmatpush2.msra.mxu0 %v2685
        %2863 = vmatprep.subr.mxu0 0.0
        %2864 = vmatpush2.msra.mxu0 %v2684
        %2865 = vmatprep.subr.mxu0 0.0
        %2866 = vmatpush2.msra.mxu0 %v2683
        %2867 = vmatprep.subr.mxu0 0.0
        %2868 = vmatpush2.msra.mxu0 %v2682
        %2869 = vmatprep.subr.mxu0 0.0
        %2870 = vmatpush2.msra.mxu0 %v2681
        %2871 = vmatprep.subr.mxu0 0.0
        %2872 = vmatpush2.msra.mxu0 %v2680
        %2873 = vmatprep.subr.mxu0 0.0
        %2874 = vmatpush2.msra.mxu0 %v2679
        %2875 = vmatprep.subr.mxu0 0.0
        %2876 = vmatpush2.msra.mxu0 %v2678
        %2877 = vmatprep.subr.mxu0 0.0
        %2878 = vmatpush2.msra.mxu0 %v2677
        %2879 = vmatprep.mubr.f32.mxu0 %v2723
        %2880 = vmatmul.mubr.f32.gmra.mxu0 %v2720
        %v2881 = vpop.f32.mrf.mxu0
        %v2882 = vadd.f32 %v2807, %v2881
        %v2883 = vpop.f32.mrf.mxu0
        %2884 = vmatprep.mubr.f32.mxu0 %v2731
        %2885 = vmatmul.mubr.f32.gmra.mxu0 %v2729
        %v2886 = vpop.f32.mrf.mxu0
        %v2887 = vadd.f32 %v2812, %v2886
        %v2888 = vpop.f32.mrf.mxu0
        %2889 = vdwg.mxu0
        %2890 = vst [vmem:[%s281] sm:$0xff] %v2882
        %2891 = vst [vmem:[%s281 + $0x8] sm:$0xff] %v2887
        %p2892 = scmp.lt.s32.totalorder %s19, 1
        %s2893 = scalar_select %p2892, %s19, 1
        %s2894 = smul.addr %s2893, 2
        %s2895 = smul.addr %s2894, 8
        %s2896 = scalar_lea.vmem %s5, %s2895
        // Predicated region
        $region57: #{rdb_forward.1} parent=39 // pred_check
          %p2897 = pneg %p147
        $region58: #{rdb_forward.1} parent=39 // pred_check_branch
          %2899 = sbr.rel (%p2897) target = $region60
        $region59: #{rdb_forward.1} parent=39 // pred_region
          _
        $region60: #{rdb_forward.1} parent=39 // pred_fallthru
          _
      $region40: #{rdb_forward.1} parent=5 // pred_fallthru
        _
      %p2900 = scmp.le.s32.totalorder 2, %s14
      // Predicated region
      $region61: #{rdb_forward.1} parent=5 // pred_check
        %p2901 = pneg %p2900
      $region62: #{rdb_forward.1} parent=5 // pred_check_branch
        %2903 = sbr.rel (%p2901) target = $region64
      $region63: #{rdb_forward.1} parent=5 // pred_region
        %s2904 = ssub.s32 %s14, 2
        // Predicated region
        $region65: #{rdb_forward.1} parent=63 // pred_check
          %p2905 = pneg %p153
        $region66: #{rdb_forward.1} parent=63 // pred_check_branch
          %2907 = sbr.rel (%p2905) target = $region68
        $region67: #{rdb_forward.1} parent=63 // pred_region
          %p2908 = scmp.lt.s32.totalorder %s20, 1
          %s2909 = scalar_select %p2908, %s20, 1
          %s2910 = smul.addr %s2909, 2
          %s2911 = smul.addr %s2910, 8
          %s2912 = scalar_lea.vmem %s5, %s2911
        $region68: #{rdb_forward.1} parent=63 // pred_fallthru
          _
      $region64: #{rdb_forward.1} parent=5 // pred_fallthru
        _
    $region6: #{rdb_forward.1} parent=1 // loop_footer
      %s18 = sadd.s32 1, %s14
    $region7: #{rdb_forward.1} parent=1 // loop_footer_branch
      %13 = sbr.rel target = $region3
    $region8: #{rdb_forward.1} parent=1 // loop_exit
      _
    %2913 = vsyncpa [#allocation4], 1
    %s2914 = scalar_lea.sflag [#allocation4], 1
    %2915 = vsyncpa %s2914, 1
    %2916 = vsyncpa [#allocation6], 1
    %2917 = vsyncpa [#allocation9], 1

</llo_original>
